<compile_context>
chip_gen: v7x
topology: tpu7x:2x2x1
jax: 0.10.0
libtpu: 0.0.40
codegen_flags: <defaults>
</compile_context>

<pallas_src>
import jax
import jax.numpy as jnp
from jax import lax
from jax.experimental import pallas as pl
from jax.experimental.pallas import tpu as pltpu


# ----------------------------- small math helpers -----------------------------

def _sigmoid(x):
    return 1.0 / (1.0 + jnp.exp(-x))


def _silu(x):
    return x * _sigmoid(x)


def _softplus(x):
    # log(1 + exp(x)) with a PyTorch-style overflow guard (threshold 20).
    safe = jnp.minimum(x, 20.0)
    return jnp.where(x > 20.0, x, jnp.log(1.0 + jnp.exp(safe)))


def _rows_matmul(w, x):
    """(M, K) @ (K, L) -> (M, L).

    For tiny K (all the projections here) the MXU would be nearly empty, so do
    it on the VPU as a sum of rank-1 broadcast products.  Falls back to the MXU
    for larger contractions.
    """
    k_dim = w.shape[1]
    if k_dim <= 16:
        acc = w[:, 0:1] * x[0:1, :]
        for k in range(1, k_dim):
            acc = acc + w[:, k:k + 1] * x[k:k + 1, :]
        return acc
    return jnp.dot(w, x, preferred_element_type=jnp.float32)


def _shift_right(x, s, fill=0.0):
    """Fill-shift along the lane (last) axis: out[:, t] = x[:, t-s], fill for t<s."""
    rows, cols = x.shape
    pad = jnp.full((rows, s), fill, x.dtype)
    return jnp.concatenate([pad, x[:, :cols - s]], axis=1)


# --------------------------------- the kernel ---------------------------------

def _mamba_gate_kernel(u_ref, v_ref, w_in_ref, w_conv_ref, b_conv_ref,
                       w_xp_ref, w_dt_ref, b_dt_ref, a_ref, d_skip_ref,
                       w_out_ref, w_gate_ref, b_gate_ref, o_ref):
    """One grid step = one (sample, stream) pair: out = mamba(u) * conv1x1(v).

    Layout: u_ref, v_ref, o_ref are (C, L) -- channels on sublanes, sequence on
    the lane axis.  The selective-scan state tensors are feature-major
    (d_inner*d_state, L) = (128, 256) values; the scan over L is an associative
    (Hillis-Steele) scan done with zero-filled lane shifts, fully vectorized.
    """
    f32 = jnp.float32
    C, L = u_ref.shape
    d_inner, dt_rank = w_dt_ref.shape
    d_state = (w_xp_ref.shape[0] - dt_rank) // 2
    d_conv = w_conv_ref.shape[1]

    u = u_ref[...].astype(f32)                                     # (C, L)

    # ---- in_proj: (2*d_inner, C) x (C, L) -> (2*d_inner, L) ----------------
    xz = _rows_matmul(w_in_ref[...].astype(f32), u)
    x_in = xz[:d_inner, :]                                         # (d_inner, L)
    z_gate = xz[d_inner:, :]                                       # (d_inner, L)

    # ---- causal depthwise conv1d (kernel d_conv) + bias + SiLU -------------
    w_conv = w_conv_ref[...].astype(f32)                           # (d_inner, d_conv)
    xc = w_conv[:, d_conv - 1:d_conv] * x_in                       # shift-0 tap
    for k in range(d_conv - 1):
        shift = d_conv - 1 - k
        xc = xc + w_conv[:, k:k + 1] * _shift_right(x_in, shift)
    xc = xc + b_conv_ref[...].astype(f32)
    xact = _silu(xc)                                               # (d_inner, L)

    # ---- x_proj -> (B, C, dt); rows pre-ordered [B; C; dt] by the wrapper ---
    x_dbl = _rows_matmul(w_xp_ref[...].astype(f32), xact)          # (2*d_state+dt_rank, L)
    b_mat = x_dbl[:d_state, :]                                     # (d_state, L)
    c_mat = x_dbl[d_state:2 * d_state, :]                          # (d_state, L)
    dt_low = x_dbl[2 * d_state:, :]                                # (dt_rank, L)

    # ---- dt_proj + softplus -------------------------------------------------
    delta = _softplus(_rows_matmul(w_dt_ref[...].astype(f32), dt_low)
                      + b_dt_ref[...].astype(f32))                 # (d_inner, L)
    du = delta * xact                                              # (d_inner, L)

    # ---- scan operands, feature-major (DN, L), built slab-by-slab -----------
    a_col = a_ref[...].astype(f32)                                 # (DN, 1) = -exp(A_log)
    da = jnp.concatenate(
        [jnp.exp(delta[d:d + 1, :] * a_col[d * d_state:(d + 1) * d_state, :])
         for d in range(d_inner)], axis=0)                         # (DN, L)
    dbu = jnp.concatenate(
        [du[d:d + 1, :] * b_mat for d in range(d_inner)], axis=0)  # (DN, L)

    # ---- associative (Hillis-Steele) scan over the sequence (lane) axis -----
    # Recurrence h_t = da_t * h_{t-1} + dbu_t, h_{-1} = 0.
    # Pair combine: (a2,b2) o (a1,b1) = (a2*a1, a2*b1 + b2).
    a_sc, h = da, dbu
    s = 1
    while s < L:
        b_sh = _shift_right(h, s, fill=0.0)
        h = a_sc * b_sh + h
        s2 = 2 * s
        if s2 < L:                       # last step's a-update is never used
            a_sc = a_sc * _shift_right(a_sc, s, fill=1.0)
        s = s2

    # ---- y[d, l] = sum_n h[d*d_state+n, l] * C[n, l];  + D skip;  * silu(z) --
    y = jnp.concatenate(
        [jnp.sum(h[d * d_state:(d + 1) * d_state, :] * c_mat, axis=0, keepdims=True)
         for d in range(d_inner)], axis=0)                         # (d_inner, L)
    y = y + xact * d_skip_ref[...].astype(f32)
    y = y * _silu(z_gate)

    # ---- out_proj -----------------------------------------------------------
    out_m = _rows_matmul(w_out_ref[...].astype(f32), y)            # (C, L)

    # ---- 1x1 conv gate from the other stream, fused multiply ----------------
    v = v_ref[...].astype(f32)
    gate = _rows_matmul(w_gate_ref[...].astype(f32), v) + b_gate_ref[...].astype(f32)
    o_ref[...] = (out_m * gate).astype(o_ref.dtype)


# --------------------------------- the wrapper --------------------------------

def dual_stream_mamba_gate(x, y, params):
    """x, y: (N, C, H, W) -> (mamba(x)*conv(y), mamba(y)*conv(x)), both NCHW."""
    N, C, H, W = x.shape
    L = H * W
    d_inner, dt_rank = params["w_dt"].shape
    d_state = (params["w_xp"].shape[0] - dt_rank) // 2
    DN = d_inner * d_state
    f32 = jnp.float32

    # NCHW -> (N, C, L): identical element order to PyTorch's
    # permute(0,2,3,1).view(B,-1,C), just stored feature-major (lane-dense L).
    xs = x.reshape(N, C, L)
    ys = y.reshape(N, C, L)
    # Stack (mamba-stream, gate-stream) pairs; step i computes mamba(us[i]) * conv(vs[i]).
    us = jnp.concatenate([xs, ys], axis=0)                         # (2N, C, L)
    vs = jnp.concatenate([ys, xs], axis=0)                         # (2N, C, L)

    # A = -exp(A_log), flattened row-major (d*d_state + n) as a column vector.
    a_col = (-jnp.exp(params["A_log"].astype(f32))).reshape(DN, 1)
    # Reorder x_proj rows to [B; C; dt] so in-kernel splits are sublane-aligned.
    w_xp_k = jnp.concatenate(
        [params["w_xp"][dt_rank:], params["w_xp"][:dt_rank]], axis=0).astype(f32)

    weight_args = (
        params["w_in"].astype(f32),                                # (2*d_inner, C)
        params["w_conv"].astype(f32),                              # (d_inner, d_conv)
        params["b_conv"].astype(f32).reshape(d_inner, 1),
        w_xp_k,                                                    # (2*d_state+dt_rank, d_inner)
        params["w_dt"].astype(f32),                                # (d_inner, dt_rank)
        params["b_dt"].astype(f32).reshape(d_inner, 1),
        a_col,                                                     # (DN, 1)
        params["D"].astype(f32).reshape(d_inner, 1),
        params["w_out"].astype(f32),                               # (C, d_inner)
        params["w_gate"].astype(f32),                              # (C, C)
        params["b_gate"].astype(f32).reshape(C, 1),
    )

    seq_spec = pl.BlockSpec((pl.Squeezed(), C, L), lambda n: (n, 0, 0))

    def const_spec(a):
        # Grid-invariant (tiny) weight block; full-array block, constant index.
        return pl.BlockSpec(a.shape, lambda n: (0, 0))

    out = pl.pallas_call(
        _mamba_gate_kernel,
        out_shape=jax.ShapeDtypeStruct((2 * N, C, L), x.dtype),
        grid=(2 * N,),
        in_specs=[seq_spec, seq_spec] + [const_spec(a) for a in weight_args],
        out_specs=pl.BlockSpec((pl.Squeezed(), C, L), lambda n: (n, 0, 0)),
        compiler_params=pltpu.CompilerParams(
            dimension_semantics=("parallel",),          # 2N >= 2 -> both v7x TCs
            vmem_limit_bytes=32 * 1024 * 1024,          # generous vs <1 MiB used
        ),
    )(us, vs, *weight_args)

    out1 = out[:N].reshape(N, C, H, W)
    out2 = out[N:].reshape(N, C, H, W)
    return out1, out2


# ------------------------- pure-JAX reference (no Pallas) ---------------------

def _mamba_ref(u, p):
    """Mamba forward, reference slow path of mamba_ssm.  u: (B, L, C)."""
    bsz, L, _ = u.shape
    d_inner, dt_rank = p["w_dt"].shape
    d_state = (p["w_xp"].shape[0] - dt_rank) // 2
    d_conv = p["w_conv"].shape[1]

    xz = jnp.einsum("blc,ec->ble", u, p["w_in"])
    x, z = xz[..., :d_inner], xz[..., d_inner:]

    xpad = jnp.pad(x, ((0, 0), (d_conv - 1, 0), (0, 0)))
    xc = jnp.broadcast_to(p["b_conv"][None, None, :], x.shape)
    for k in range(d_conv):
        xc = xc + p["w_conv"][None, None, :, k] * xpad[:, k:k + L, :]
    xact = _silu(xc)

    x_dbl = jnp.einsum("bld,ed->ble", xact, p["w_xp"])
    dt = x_dbl[..., :dt_rank]
    b_mat = x_dbl[..., dt_rank:dt_rank + d_state]
    c_mat = x_dbl[..., dt_rank + d_state:]
    delta = _softplus(jnp.einsum("blr,dr->bld", dt, p["w_dt"])
                      + p["b_dt"][None, None, :])

    a_mat = -jnp.exp(p["A_log"])                                    # (d_inner, d_state)
    d_a = jnp.exp(delta[..., None] * a_mat[None, None, :, :])       # (B, L, d, n)
    d_bu = (delta * xact)[..., None] * b_mat[:, :, None, :]         # (B, L, d, n)

    def step(h, inp):
        da_t, dbu_t, c_t = inp
        h = da_t * h + dbu_t
        return h, jnp.sum(h * c_t[:, None, :], axis=-1)

    h0 = jnp.zeros((bsz, d_inner, d_state), jnp.float32)
    _, ys = lax.scan(step, h0, (jnp.moveaxis(d_a, 1, 0),
                                jnp.moveaxis(d_bu, 1, 0),
                                jnp.moveaxis(c_mat, 1, 0)))
    yy = jnp.moveaxis(ys, 0, 1)                                     # (B, L, d_inner)
    yy = yy + xact * p["D"][None, None, :]
    yy = yy * _silu(z)
    return jnp.einsum("bld,cd->blc", yy, p["w_out"])


def dual_stream_mamba_gate_ref(x, y, p):
    n, c, h, w = x.shape

    def mamba_img(a):
        seq = a.reshape(n, c, h * w).transpose(0, 2, 1)
        out = _mamba_ref(seq, p)
        return out.transpose(0, 2, 1).reshape(n, c, h, w)

    def conv1x1(a):
        return (jnp.einsum("oc,nchw->nohw", p["w_gate"], a)
                + p["b_gate"][None, :, None, None])

    return mamba_img(x) * conv1x1(y), mamba_img(y) * conv1x1(x)


# ------------------------------------ main -------------------------------------

if __name__ == "__main__":
    key = jax.random.PRNGKey(0)
    ks = jax.random.split(key, 11)

    N, C, H, W = 2, 4, 16, 16
    d_state, d_conv, expand = 16, 4, 2
    d_inner = expand * C
    dt_rank = max(1, (C + 15) // 16)          # ceil(C / 16)

    x = jax.random.normal(ks[0], (N, C, H, W), dtype=jnp.float32)
    y = jax.random.normal(ks[1], (N, C, H, W), dtype=jnp.float32)

    params = {
        "w_in":   0.3 * jax.random.normal(ks[2], (2 * d_inner, C), jnp.float32),
        "w_conv": 0.3 * jax.random.normal(ks[3], (d_inner, d_conv), jnp.float32),
        "b_conv": 0.1 * jax.random.normal(ks[4], (d_inner,), jnp.float32),
        "w_xp":   0.3 * jax.random.normal(ks[5], (dt_rank + 2 * d_state, d_inner), jnp.float32),
        "w_dt":   0.3 * jax.random.normal(ks[6], (d_inner, dt_rank), jnp.float32),
        "b_dt":   0.1 * jax.random.normal(ks[7], (d_inner,), jnp.float32),
        "A_log":  jnp.log(jnp.tile(jnp.arange(1, d_state + 1, dtype=jnp.float32),
                                   (d_inner, 1))),
        "D":      jnp.ones((d_inner,), jnp.float32),
        "w_out":  0.3 * jax.random.normal(ks[8], (C, d_inner), jnp.float32),
        "w_gate": 0.3 * jax.random.normal(ks[9], (C, C), jnp.float32),
        "b_gate": 0.1 * jax.random.normal(ks[10], (C,), jnp.float32),
    }

    out1, out2 = dual_stream_mamba_gate(x, y, params)
    out1, out2 = jax.block_until_ready((out1, out2))

    with jax.default_matmul_precision("highest"):
        ref1, ref2 = dual_stream_mamba_gate_ref(x, y, params)

    assert out1.shape == (N, C, H, W) and out2.shape == (N, C, H, W)
    assert jnp.allclose(out1, ref1, atol=2e-3, rtol=2e-3), "stream-1 mismatch vs reference"
    assert jnp.allclose(out2, ref2, atol=2e-3, rtol=2e-3), "stream-2 mismatch vs reference"

    print("KERNEL_OK")
</pallas_src>

<mosaic_0001>
module attributes {stable_mosaic.version = 11 : i64} {
  func.func @_mamba_gate_kernel(%arg0: i32, %arg1: memref<1x4x256xf32, #tpu.memory_space<vmem>>, %arg2: memref<1x4x256xf32, #tpu.memory_space<vmem>>, %arg3: memref<16x4xf32, #tpu.memory_space<vmem>>, %arg4: memref<8x4xf32, #tpu.memory_space<vmem>>, %arg5: memref<8x1xf32, #tpu.memory_space<vmem>>, %arg6: memref<33x8xf32, #tpu.memory_space<vmem>>, %arg7: memref<8x1xf32, #tpu.memory_space<vmem>>, %arg8: memref<8x1xf32, #tpu.memory_space<vmem>>, %arg9: memref<128x1xf32, #tpu.memory_space<vmem>>, %arg10: memref<8x1xf32, #tpu.memory_space<vmem>>, %arg11: memref<4x8xf32, #tpu.memory_space<vmem>>, %arg12: memref<4x4xf32, #tpu.memory_space<vmem>>, %arg13: memref<4x1xf32, #tpu.memory_space<vmem>>, %arg14: memref<1x4x256xf32, #tpu.memory_space<vmem>>) attributes {dimension_semantics = [#tpu.dimension_semantics<parallel>], iteration_bounds = array<i64: 4>, scalar_prefetch = 0 : i64, scratch_operands = 0 : i64, tpu.core_type = #tpu.core_type<tc>, window_params = [{transform_indices = @transform_0, window_bounds = array<i64: 1, 4, 256>}, {transform_indices = @transform_1, window_bounds = array<i64: 1, 4, 256>}, {pipeline_mode = #tpu.pipeline_mode<synchronous>, transform_indices = @transform_2, window_bounds = array<i64: 16, 4>}, {pipeline_mode = #tpu.pipeline_mode<synchronous>, transform_indices = @transform_3, window_bounds = array<i64: 8, 4>}, {pipeline_mode = #tpu.pipeline_mode<synchronous>, transform_indices = @transform_4, window_bounds = array<i64: 8, 1>}, {pipeline_mode = #tpu.pipeline_mode<synchronous>, transform_indices = @transform_5, window_bounds = array<i64: 33, 8>}, {pipeline_mode = #tpu.pipeline_mode<synchronous>, transform_indices = @transform_6, window_bounds = array<i64: 8, 1>}, {pipeline_mode = #tpu.pipeline_mode<synchronous>, transform_indices = @transform_7, window_bounds = array<i64: 8, 1>}, {pipeline_mode = #tpu.pipeline_mode<synchronous>, transform_indices = @transform_8, window_bounds = array<i64: 128, 1>}, {pipeline_mode = #tpu.pipeline_mode<synchronous>, transform_indices = @transform_9, window_bounds = array<i64: 8, 1>}, {pipeline_mode = #tpu.pipeline_mode<synchronous>, transform_indices = @transform_10, window_bounds = array<i64: 4, 8>}, {pipeline_mode = #tpu.pipeline_mode<synchronous>, transform_indices = @transform_11, window_bounds = array<i64: 4, 4>}, {pipeline_mode = #tpu.pipeline_mode<synchronous>, transform_indices = @transform_12, window_bounds = array<i64: 4, 1>}, {transform_indices = @transform_13, window_bounds = array<i64: 1, 4, 256>}]} {
    %c0 = arith.constant 0 : index
    %c0_0 = arith.constant 0 : index
    %c0_1 = arith.constant 0 : index
    %0 = vector.load %arg1[%c0, %c0_0, %c0_1] : memref<1x4x256xf32, #tpu.memory_space<vmem>>, vector<1x4x256xf32>
    %1 = vector.shape_cast %0 : vector<1x4x256xf32> to vector<4x256xf32>
    %c0_2 = arith.constant 0 : index
    %c0_3 = arith.constant 0 : index
    %2 = vector.load %arg3[%c0_2, %c0_3] : memref<16x4xf32, #tpu.memory_space<vmem>>, vector<16x4xf32>
    %3 = vector.extract_strided_slice %2 {offsets = [0, 0], sizes = [16, 1], strides = [1, 1]} : vector<16x4xf32> to vector<16x1xf32>
    %4 = vector.extract_strided_slice %1 {offsets = [0, 0], sizes = [1, 256], strides = [1, 1]} : vector<4x256xf32> to vector<1x256xf32>
    %5 = vector.broadcast %3 : vector<16x1xf32> to vector<16x256xf32>
    %6 = vector.broadcast %4 : vector<1x256xf32> to vector<16x256xf32>
    %7 = arith.mulf %5, %6 : vector<16x256xf32>
    %8 = vector.extract_strided_slice %2 {offsets = [0, 1], sizes = [16, 1], strides = [1, 1]} : vector<16x4xf32> to vector<16x1xf32>
    %9 = vector.extract_strided_slice %1 {offsets = [1, 0], sizes = [1, 256], strides = [1, 1]} : vector<4x256xf32> to vector<1x256xf32>
    %10 = vector.broadcast %8 : vector<16x1xf32> to vector<16x256xf32>
    %11 = vector.broadcast %9 : vector<1x256xf32> to vector<16x256xf32>
    %12 = arith.mulf %10, %11 : vector<16x256xf32>
    %13 = arith.addf %7, %12 : vector<16x256xf32>
    %14 = vector.extract_strided_slice %2 {offsets = [0, 2], sizes = [16, 1], strides = [1, 1]} : vector<16x4xf32> to vector<16x1xf32>
    %15 = vector.extract_strided_slice %1 {offsets = [2, 0], sizes = [1, 256], strides = [1, 1]} : vector<4x256xf32> to vector<1x256xf32>
    %16 = vector.broadcast %14 : vector<16x1xf32> to vector<16x256xf32>
    %17 = vector.broadcast %15 : vector<1x256xf32> to vector<16x256xf32>
    %18 = arith.mulf %16, %17 : vector<16x256xf32>
    %19 = arith.addf %13, %18 : vector<16x256xf32>
    %20 = vector.extract_strided_slice %2 {offsets = [0, 3], sizes = [16, 1], strides = [1, 1]} : vector<16x4xf32> to vector<16x1xf32>
    %21 = vector.extract_strided_slice %1 {offsets = [3, 0], sizes = [1, 256], strides = [1, 1]} : vector<4x256xf32> to vector<1x256xf32>
    %22 = vector.broadcast %20 : vector<16x1xf32> to vector<16x256xf32>
    %23 = vector.broadcast %21 : vector<1x256xf32> to vector<16x256xf32>
    %24 = arith.mulf %22, %23 : vector<16x256xf32>
    %25 = arith.addf %19, %24 : vector<16x256xf32>
    %26 = vector.extract_strided_slice %25 {offsets = [0, 0], sizes = [8, 256], strides = [1, 1]} : vector<16x256xf32> to vector<8x256xf32>
    %27 = vector.extract_strided_slice %25 {offsets = [8, 0], sizes = [8, 256], strides = [1, 1]} : vector<16x256xf32> to vector<8x256xf32>
    %c0_4 = arith.constant 0 : index
    %c0_5 = arith.constant 0 : index
    %28 = vector.load %arg4[%c0_4, %c0_5] : memref<8x4xf32, #tpu.memory_space<vmem>>, vector<8x4xf32>
    %29 = vector.extract_strided_slice %28 {offsets = [0, 3], sizes = [8, 1], strides = [1, 1]} : vector<8x4xf32> to vector<8x1xf32>
    %30 = vector.broadcast %29 : vector<8x1xf32> to vector<8x256xf32>
    %31 = arith.mulf %30, %26 : vector<8x256xf32>
    %32 = vector.extract_strided_slice %28 {offsets = [0, 0], sizes = [8, 1], strides = [1, 1]} : vector<8x4xf32> to vector<8x1xf32>
    %cst = arith.constant 0.000000e+00 : f32
    %33 = vector.broadcast %cst : f32 to vector<8x3xf32>
    %34 = vector.extract_strided_slice %26 {offsets = [0, 0], sizes = [8, 253], strides = [1, 1]} : vector<8x256xf32> to vector<8x253xf32>
    %35 = tpu.concatenate %33, %34 in 1 : vector<8x3xf32>, vector<8x253xf32> -> vector<8x256xf32>
    %36 = vector.broadcast %32 : vector<8x1xf32> to vector<8x256xf32>
    %37 = arith.mulf %36, %35 : vector<8x256xf32>
    %38 = arith.addf %31, %37 : vector<8x256xf32>
    %39 = vector.extract_strided_slice %28 {offsets = [0, 1], sizes = [8, 1], strides = [1, 1]} : vector<8x4xf32> to vector<8x1xf32>
    %cst_6 = arith.constant 0.000000e+00 : f32
    %40 = vector.broadcast %cst_6 : f32 to vector<8x2xf32>
    %41 = vector.extract_strided_slice %26 {offsets = [0, 0], sizes = [8, 254], strides = [1, 1]} : vector<8x256xf32> to vector<8x254xf32>
    %42 = tpu.concatenate %40, %41 in 1 : vector<8x2xf32>, vector<8x254xf32> -> vector<8x256xf32>
    %43 = vector.broadcast %39 : vector<8x1xf32> to vector<8x256xf32>
    %44 = arith.mulf %43, %42 : vector<8x256xf32>
    %45 = arith.addf %38, %44 : vector<8x256xf32>
    %46 = vector.extract_strided_slice %28 {offsets = [0, 2], sizes = [8, 1], strides = [1, 1]} : vector<8x4xf32> to vector<8x1xf32>
    %cst_7 = arith.constant 0.000000e+00 : f32
    %47 = vector.broadcast %cst_7 : f32 to vector<8x1xf32>
    %48 = vector.extract_strided_slice %26 {offsets = [0, 0], sizes = [8, 255], strides = [1, 1]} : vector<8x256xf32> to vector<8x255xf32>
    %49 = tpu.concatenate %47, %48 in 1 : vector<8x1xf32>, vector<8x255xf32> -> vector<8x256xf32>
    %50 = vector.broadcast %46 : vector<8x1xf32> to vector<8x256xf32>
    %51 = arith.mulf %50, %49 : vector<8x256xf32>
    %52 = arith.addf %45, %51 : vector<8x256xf32>
    %c0_8 = arith.constant 0 : index
    %c0_9 = arith.constant 0 : index
    %53 = vector.load %arg5[%c0_8, %c0_9] : memref<8x1xf32, #tpu.memory_space<vmem>>, vector<8x1xf32>
    %54 = vector.broadcast %53 : vector<8x1xf32> to vector<8x256xf32>
    %55 = arith.addf %52, %54 : vector<8x256xf32>
    %cst_10 = arith.constant 0.000000e+00 : f32
    %56 = vector.broadcast %cst_10 : f32 to vector<8x256xf32>
    %57 = arith.subf %56, %55 : vector<8x256xf32>
    %58 = math.exp %57 : vector<8x256xf32>
    %cst_11 = arith.constant 1.000000e+00 : f32
    %59 = vector.broadcast %cst_11 : f32 to vector<8x256xf32>
    %60 = arith.addf %59, %58 : vector<8x256xf32>
    %cst_12 = arith.constant 1.000000e+00 : f32
    %61 = vector.broadcast %cst_12 : f32 to vector<8x256xf32>
    %62 = arith.divf %61, %60 : vector<8x256xf32>
    %63 = arith.mulf %55, %62 : vector<8x256xf32>
    %c0_13 = arith.constant 0 : index
    %c0_14 = arith.constant 0 : index
    %64 = vector.load %arg6[%c0_13, %c0_14] : memref<33x8xf32, #tpu.memory_space<vmem>>, vector<33x8xf32>
    %65 = vector.extract_strided_slice %64 {offsets = [0, 0], sizes = [33, 1], strides = [1, 1]} : vector<33x8xf32> to vector<33x1xf32>
    %66 = vector.extract_strided_slice %63 {offsets = [0, 0], sizes = [1, 256], strides = [1, 1]} : vector<8x256xf32> to vector<1x256xf32>
    %67 = vector.broadcast %65 : vector<33x1xf32> to vector<33x256xf32>
    %68 = vector.broadcast %66 : vector<1x256xf32> to vector<33x256xf32>
    %69 = arith.mulf %67, %68 : vector<33x256xf32>
    %70 = vector.extract_strided_slice %64 {offsets = [0, 1], sizes = [33, 1], strides = [1, 1]} : vector<33x8xf32> to vector<33x1xf32>
    %71 = vector.extract_strided_slice %63 {offsets = [1, 0], sizes = [1, 256], strides = [1, 1]} : vector<8x256xf32> to vector<1x256xf32>
    %72 = vector.broadcast %70 : vector<33x1xf32> to vector<33x256xf32>
    %73 = vector.broadcast %71 : vector<1x256xf32> to vector<33x256xf32>
    %74 = arith.mulf %72, %73 : vector<33x256xf32>
    %75 = arith.addf %69, %74 : vector<33x256xf32>
    %76 = vector.extract_strided_slice %64 {offsets = [0, 2], sizes = [33, 1], strides = [1, 1]} : vector<33x8xf32> to vector<33x1xf32>
    %77 = vector.extract_strided_slice %63 {offsets = [2, 0], sizes = [1, 256], strides = [1, 1]} : vector<8x256xf32> to vector<1x256xf32>
    %78 = vector.broadcast %76 : vector<33x1xf32> to vector<33x256xf32>
    %79 = vector.broadcast %77 : vector<1x256xf32> to vector<33x256xf32>
    %80 = arith.mulf %78, %79 : vector<33x256xf32>
    %81 = arith.addf %75, %80 : vector<33x256xf32>
    %82 = vector.extract_strided_slice %64 {offsets = [0, 3], sizes = [33, 1], strides = [1, 1]} : vector<33x8xf32> to vector<33x1xf32>
    %83 = vector.extract_strided_slice %63 {offsets = [3, 0], sizes = [1, 256], strides = [1, 1]} : vector<8x256xf32> to vector<1x256xf32>
    %84 = vector.broadcast %82 : vector<33x1xf32> to vector<33x256xf32>
    %85 = vector.broadcast %83 : vector<1x256xf32> to vector<33x256xf32>
    %86 = arith.mulf %84, %85 : vector<33x256xf32>
    %87 = arith.addf %81, %86 : vector<33x256xf32>
    %88 = vector.extract_strided_slice %64 {offsets = [0, 4], sizes = [33, 1], strides = [1, 1]} : vector<33x8xf32> to vector<33x1xf32>
    %89 = vector.extract_strided_slice %63 {offsets = [4, 0], sizes = [1, 256], strides = [1, 1]} : vector<8x256xf32> to vector<1x256xf32>
    %90 = vector.broadcast %88 : vector<33x1xf32> to vector<33x256xf32>
    %91 = vector.broadcast %89 : vector<1x256xf32> to vector<33x256xf32>
    %92 = arith.mulf %90, %91 : vector<33x256xf32>
    %93 = arith.addf %87, %92 : vector<33x256xf32>
    %94 = vector.extract_strided_slice %64 {offsets = [0, 5], sizes = [33, 1], strides = [1, 1]} : vector<33x8xf32> to vector<33x1xf32>
    %95 = vector.extract_strided_slice %63 {offsets = [5, 0], sizes = [1, 256], strides = [1, 1]} : vector<8x256xf32> to vector<1x256xf32>
    %96 = vector.broadcast %94 : vector<33x1xf32> to vector<33x256xf32>
    %97 = vector.broadcast %95 : vector<1x256xf32> to vector<33x256xf32>
    %98 = arith.mulf %96, %97 : vector<33x256xf32>
    %99 = arith.addf %93, %98 : vector<33x256xf32>
    %100 = vector.extract_strided_slice %64 {offsets = [0, 6], sizes = [33, 1], strides = [1, 1]} : vector<33x8xf32> to vector<33x1xf32>
    %101 = vector.extract_strided_slice %63 {offsets = [6, 0], sizes = [1, 256], strides = [1, 1]} : vector<8x256xf32> to vector<1x256xf32>
    %102 = vector.broadcast %100 : vector<33x1xf32> to vector<33x256xf32>
    %103 = vector.broadcast %101 : vector<1x256xf32> to vector<33x256xf32>
    %104 = arith.mulf %102, %103 : vector<33x256xf32>
    %105 = arith.addf %99, %104 : vector<33x256xf32>
    %106 = vector.extract_strided_slice %64 {offsets = [0, 7], sizes = [33, 1], strides = [1, 1]} : vector<33x8xf32> to vector<33x1xf32>
    %107 = vector.extract_strided_slice %63 {offsets = [7, 0], sizes = [1, 256], strides = [1, 1]} : vector<8x256xf32> to vector<1x256xf32>
    %108 = vector.broadcast %106 : vector<33x1xf32> to vector<33x256xf32>
    %109 = vector.broadcast %107 : vector<1x256xf32> to vector<33x256xf32>
    %110 = arith.mulf %108, %109 : vector<33x256xf32>
    %111 = arith.addf %105, %110 : vector<33x256xf32>
    %112 = vector.extract_strided_slice %111 {offsets = [0, 0], sizes = [16, 256], strides = [1, 1]} : vector<33x256xf32> to vector<16x256xf32>
    %113 = vector.extract_strided_slice %111 {offsets = [16, 0], sizes = [16, 256], strides = [1, 1]} : vector<33x256xf32> to vector<16x256xf32>
    %114 = vector.extract_strided_slice %111 {offsets = [32, 0], sizes = [1, 256], strides = [1, 1]} : vector<33x256xf32> to vector<1x256xf32>
    %c0_15 = arith.constant 0 : index
    %c0_16 = arith.constant 0 : index
    %115 = vector.load %arg7[%c0_15, %c0_16] : memref<8x1xf32, #tpu.memory_space<vmem>>, vector<8x1xf32>
    %116 = vector.broadcast %115 : vector<8x1xf32> to vector<8x256xf32>
    %117 = vector.broadcast %114 : vector<1x256xf32> to vector<8x256xf32>
    %118 = arith.mulf %116, %117 : vector<8x256xf32>
    %c0_17 = arith.constant 0 : index
    %c0_18 = arith.constant 0 : index
    %119 = vector.load %arg8[%c0_17, %c0_18] : memref<8x1xf32, #tpu.memory_space<vmem>>, vector<8x1xf32>
    %120 = vector.broadcast %119 : vector<8x1xf32> to vector<8x256xf32>
    %121 = arith.addf %118, %120 : vector<8x256xf32>
    %cst_19 = arith.constant 2.000000e+01 : f32
    %122 = vector.broadcast %cst_19 : f32 to vector<8x256xf32>
    %123 = arith.minimumf %121, %122 : vector<8x256xf32>
    %cst_20 = arith.constant 2.000000e+01 : f32
    %124 = vector.broadcast %cst_20 : f32 to vector<8x256xf32>
    %125 = arith.cmpf ogt, %121, %124 : vector<8x256xf32>
    %126 = math.exp %123 : vector<8x256xf32>
    %cst_21 = arith.constant 1.000000e+00 : f32
    %127 = vector.broadcast %cst_21 : f32 to vector<8x256xf32>
    %128 = arith.addf %127, %126 : vector<8x256xf32>
    %129 = math.log %128 : vector<8x256xf32>
    %130 = arith.select %125, %121, %129 : vector<8x256xi1>, vector<8x256xf32>
    %131 = arith.mulf %130, %63 : vector<8x256xf32>
    %c0_22 = arith.constant 0 : index
    %c0_23 = arith.constant 0 : index
    %132 = vector.load %arg9[%c0_22, %c0_23] : memref<128x1xf32, #tpu.memory_space<vmem>>, vector<128x1xf32>
    %133 = vector.extract_strided_slice %130 {offsets = [0, 0], sizes = [1, 256], strides = [1, 1]} : vector<8x256xf32> to vector<1x256xf32>
    %134 = vector.extract_strided_slice %132 {offsets = [0, 0], sizes = [16, 1], strides = [1, 1]} : vector<128x1xf32> to vector<16x1xf32>
    %135 = vector.broadcast %133 : vector<1x256xf32> to vector<16x256xf32>
    %136 = vector.broadcast %134 : vector<16x1xf32> to vector<16x256xf32>
    %137 = arith.mulf %135, %136 : vector<16x256xf32>
    %138 = math.exp %137 : vector<16x256xf32>
    %139 = vector.extract_strided_slice %130 {offsets = [1, 0], sizes = [1, 256], strides = [1, 1]} : vector<8x256xf32> to vector<1x256xf32>
    %140 = vector.extract_strided_slice %132 {offsets = [16, 0], sizes = [16, 1], strides = [1, 1]} : vector<128x1xf32> to vector<16x1xf32>
    %141 = vector.broadcast %139 : vector<1x256xf32> to vector<16x256xf32>
    %142 = vector.broadcast %140 : vector<16x1xf32> to vector<16x256xf32>
    %143 = arith.mulf %141, %142 : vector<16x256xf32>
    %144 = math.exp %143 : vector<16x256xf32>
    %145 = vector.extract_strided_slice %130 {offsets = [2, 0], sizes = [1, 256], strides = [1, 1]} : vector<8x256xf32> to vector<1x256xf32>
    %146 = vector.extract_strided_slice %132 {offsets = [32, 0], sizes = [16, 1], strides = [1, 1]} : vector<128x1xf32> to vector<16x1xf32>
    %147 = vector.broadcast %145 : vector<1x256xf32> to vector<16x256xf32>
    %148 = vector.broadcast %146 : vector<16x1xf32> to vector<16x256xf32>
    %149 = arith.mulf %147, %148 : vector<16x256xf32>
    %150 = math.exp %149 : vector<16x256xf32>
    %151 = vector.extract_strided_slice %130 {offsets = [3, 0], sizes = [1, 256], strides = [1, 1]} : vector<8x256xf32> to vector<1x256xf32>
    %152 = vector.extract_strided_slice %132 {offsets = [48, 0], sizes = [16, 1], strides = [1, 1]} : vector<128x1xf32> to vector<16x1xf32>
    %153 = vector.broadcast %151 : vector<1x256xf32> to vector<16x256xf32>
    %154 = vector.broadcast %152 : vector<16x1xf32> to vector<16x256xf32>
    %155 = arith.mulf %153, %154 : vector<16x256xf32>
    %156 = math.exp %155 : vector<16x256xf32>
    %157 = vector.extract_strided_slice %130 {offsets = [4, 0], sizes = [1, 256], strides = [1, 1]} : vector<8x256xf32> to vector<1x256xf32>
    %158 = vector.extract_strided_slice %132 {offsets = [64, 0], sizes = [16, 1], strides = [1, 1]} : vector<128x1xf32> to vector<16x1xf32>
    %159 = vector.broadcast %157 : vector<1x256xf32> to vector<16x256xf32>
    %160 = vector.broadcast %158 : vector<16x1xf32> to vector<16x256xf32>
    %161 = arith.mulf %159, %160 : vector<16x256xf32>
    %162 = math.exp %161 : vector<16x256xf32>
    %163 = vector.extract_strided_slice %130 {offsets = [5, 0], sizes = [1, 256], strides = [1, 1]} : vector<8x256xf32> to vector<1x256xf32>
    %164 = vector.extract_strided_slice %132 {offsets = [80, 0], sizes = [16, 1], strides = [1, 1]} : vector<128x1xf32> to vector<16x1xf32>
    %165 = vector.broadcast %163 : vector<1x256xf32> to vector<16x256xf32>
    %166 = vector.broadcast %164 : vector<16x1xf32> to vector<16x256xf32>
    %167 = arith.mulf %165, %166 : vector<16x256xf32>
    %168 = math.exp %167 : vector<16x256xf32>
    %169 = vector.extract_strided_slice %130 {offsets = [6, 0], sizes = [1, 256], strides = [1, 1]} : vector<8x256xf32> to vector<1x256xf32>
    %170 = vector.extract_strided_slice %132 {offsets = [96, 0], sizes = [16, 1], strides = [1, 1]} : vector<128x1xf32> to vector<16x1xf32>
    %171 = vector.broadcast %169 : vector<1x256xf32> to vector<16x256xf32>
    %172 = vector.broadcast %170 : vector<16x1xf32> to vector<16x256xf32>
    %173 = arith.mulf %171, %172 : vector<16x256xf32>
    %174 = math.exp %173 : vector<16x256xf32>
    %175 = vector.extract_strided_slice %130 {offsets = [7, 0], sizes = [1, 256], strides = [1, 1]} : vector<8x256xf32> to vector<1x256xf32>
    %176 = vector.extract_strided_slice %132 {offsets = [112, 0], sizes = [16, 1], strides = [1, 1]} : vector<128x1xf32> to vector<16x1xf32>
    %177 = vector.broadcast %175 : vector<1x256xf32> to vector<16x256xf32>
    %178 = vector.broadcast %176 : vector<16x1xf32> to vector<16x256xf32>
    %179 = arith.mulf %177, %178 : vector<16x256xf32>
    %180 = math.exp %179 : vector<16x256xf32>
    %181 = tpu.concatenate %138, %144, %150, %156, %162, %168, %174, %180 in 0 : vector<16x256xf32>, vector<16x256xf32>, vector<16x256xf32>, vector<16x256xf32>, vector<16x256xf32>, vector<16x256xf32>, vector<16x256xf32>, vector<16x256xf32> -> vector<128x256xf32>
    %182 = vector.extract_strided_slice %131 {offsets = [0, 0], sizes = [1, 256], strides = [1, 1]} : vector<8x256xf32> to vector<1x256xf32>
    %183 = vector.broadcast %182 : vector<1x256xf32> to vector<16x256xf32>
    %184 = arith.mulf %183, %112 : vector<16x256xf32>
    %185 = vector.extract_strided_slice %131 {offsets = [1, 0], sizes = [1, 256], strides = [1, 1]} : vector<8x256xf32> to vector<1x256xf32>
    %186 = vector.broadcast %185 : vector<1x256xf32> to vector<16x256xf32>
    %187 = arith.mulf %186, %112 : vector<16x256xf32>
    %188 = vector.extract_strided_slice %131 {offsets = [2, 0], sizes = [1, 256], strides = [1, 1]} : vector<8x256xf32> to vector<1x256xf32>
    %189 = vector.broadcast %188 : vector<1x256xf32> to vector<16x256xf32>
    %190 = arith.mulf %189, %112 : vector<16x256xf32>
    %191 = vector.extract_strided_slice %131 {offsets = [3, 0], sizes = [1, 256], strides = [1, 1]} : vector<8x256xf32> to vector<1x256xf32>
    %192 = vector.broadcast %191 : vector<1x256xf32> to vector<16x256xf32>
    %193 = arith.mulf %192, %112 : vector<16x256xf32>
    %194 = vector.extract_strided_slice %131 {offsets = [4, 0], sizes = [1, 256], strides = [1, 1]} : vector<8x256xf32> to vector<1x256xf32>
    %195 = vector.broadcast %194 : vector<1x256xf32> to vector<16x256xf32>
    %196 = arith.mulf %195, %112 : vector<16x256xf32>
    %197 = vector.extract_strided_slice %131 {offsets = [5, 0], sizes = [1, 256], strides = [1, 1]} : vector<8x256xf32> to vector<1x256xf32>
    %198 = vector.broadcast %197 : vector<1x256xf32> to vector<16x256xf32>
    %199 = arith.mulf %198, %112 : vector<16x256xf32>
    %200 = vector.extract_strided_slice %131 {offsets = [6, 0], sizes = [1, 256], strides = [1, 1]} : vector<8x256xf32> to vector<1x256xf32>
    %201 = vector.broadcast %200 : vector<1x256xf32> to vector<16x256xf32>
    %202 = arith.mulf %201, %112 : vector<16x256xf32>
    %203 = vector.extract_strided_slice %131 {offsets = [7, 0], sizes = [1, 256], strides = [1, 1]} : vector<8x256xf32> to vector<1x256xf32>
    %204 = vector.broadcast %203 : vector<1x256xf32> to vector<16x256xf32>
    %205 = arith.mulf %204, %112 : vector<16x256xf32>
    %206 = tpu.concatenate %184, %187, %190, %193, %196, %199, %202, %205 in 0 : vector<16x256xf32>, vector<16x256xf32>, vector<16x256xf32>, vector<16x256xf32>, vector<16x256xf32>, vector<16x256xf32>, vector<16x256xf32>, vector<16x256xf32> -> vector<128x256xf32>
    %cst_24 = arith.constant 0.000000e+00 : f32
    %207 = vector.broadcast %cst_24 : f32 to vector<128x1xf32>
    %208 = vector.extract_strided_slice %206 {offsets = [0, 0], sizes = [128, 255], strides = [1, 1]} : vector<128x256xf32> to vector<128x255xf32>
    %209 = tpu.concatenate %207, %208 in 1 : vector<128x1xf32>, vector<128x255xf32> -> vector<128x256xf32>
    %210 = arith.mulf %181, %209 : vector<128x256xf32>
    %211 = arith.addf %210, %206 : vector<128x256xf32>
    %cst_25 = arith.constant 1.000000e+00 : f32
    %212 = vector.broadcast %cst_25 : f32 to vector<128x1xf32>
    %213 = vector.extract_strided_slice %181 {offsets = [0, 0], sizes = [128, 255], strides = [1, 1]} : vector<128x256xf32> to vector<128x255xf32>
    %214 = tpu.concatenate %212, %213 in 1 : vector<128x1xf32>, vector<128x255xf32> -> vector<128x256xf32>
    %215 = arith.mulf %181, %214 : vector<128x256xf32>
    %cst_26 = arith.constant 0.000000e+00 : f32
    %216 = vector.broadcast %cst_26 : f32 to vector<128x2xf32>
    %217 = vector.extract_strided_slice %211 {offsets = [0, 0], sizes = [128, 254], strides = [1, 1]} : vector<128x256xf32> to vector<128x254xf32>
    %218 = tpu.concatenate %216, %217 in 1 : vector<128x2xf32>, vector<128x254xf32> -> vector<128x256xf32>
    %219 = arith.mulf %215, %218 : vector<128x256xf32>
    %220 = arith.addf %219, %211 : vector<128x256xf32>
    %cst_27 = arith.constant 1.000000e+00 : f32
    %221 = vector.broadcast %cst_27 : f32 to vector<128x2xf32>
    %222 = vector.extract_strided_slice %215 {offsets = [0, 0], sizes = [128, 254], strides = [1, 1]} : vector<128x256xf32> to vector<128x254xf32>
    %223 = tpu.concatenate %221, %222 in 1 : vector<128x2xf32>, vector<128x254xf32> -> vector<128x256xf32>
    %224 = arith.mulf %215, %223 : vector<128x256xf32>
    %cst_28 = arith.constant 0.000000e+00 : f32
    %225 = vector.broadcast %cst_28 : f32 to vector<128x4xf32>
    %226 = vector.extract_strided_slice %220 {offsets = [0, 0], sizes = [128, 252], strides = [1, 1]} : vector<128x256xf32> to vector<128x252xf32>
    %227 = tpu.concatenate %225, %226 in 1 : vector<128x4xf32>, vector<128x252xf32> -> vector<128x256xf32>
    %228 = arith.mulf %224, %227 : vector<128x256xf32>
    %229 = arith.addf %228, %220 : vector<128x256xf32>
    %cst_29 = arith.constant 1.000000e+00 : f32
    %230 = vector.broadcast %cst_29 : f32 to vector<128x4xf32>
    %231 = vector.extract_strided_slice %224 {offsets = [0, 0], sizes = [128, 252], strides = [1, 1]} : vector<128x256xf32> to vector<128x252xf32>
    %232 = tpu.concatenate %230, %231 in 1 : vector<128x4xf32>, vector<128x252xf32> -> vector<128x256xf32>
    %233 = arith.mulf %224, %232 : vector<128x256xf32>
    %cst_30 = arith.constant 0.000000e+00 : f32
    %234 = vector.broadcast %cst_30 : f32 to vector<128x8xf32>
    %235 = vector.extract_strided_slice %229 {offsets = [0, 0], sizes = [128, 248], strides = [1, 1]} : vector<128x256xf32> to vector<128x248xf32>
    %236 = tpu.concatenate %234, %235 in 1 : vector<128x8xf32>, vector<128x248xf32> -> vector<128x256xf32>
    %237 = arith.mulf %233, %236 : vector<128x256xf32>
    %238 = arith.addf %237, %229 : vector<128x256xf32>
    %cst_31 = arith.constant 1.000000e+00 : f32
    %239 = vector.broadcast %cst_31 : f32 to vector<128x8xf32>
    %240 = vector.extract_strided_slice %233 {offsets = [0, 0], sizes = [128, 248], strides = [1, 1]} : vector<128x256xf32> to vector<128x248xf32>
    %241 = tpu.concatenate %239, %240 in 1 : vector<128x8xf32>, vector<128x248xf32> -> vector<128x256xf32>
    %242 = arith.mulf %233, %241 : vector<128x256xf32>
    %cst_32 = arith.constant 0.000000e+00 : f32
    %243 = vector.broadcast %cst_32 : f32 to vector<128x16xf32>
    %244 = vector.extract_strided_slice %238 {offsets = [0, 0], sizes = [128, 240], strides = [1, 1]} : vector<128x256xf32> to vector<128x240xf32>
    %245 = tpu.concatenate %243, %244 in 1 : vector<128x16xf32>, vector<128x240xf32> -> vector<128x256xf32>
    %246 = arith.mulf %242, %245 : vector<128x256xf32>
    %247 = arith.addf %246, %238 : vector<128x256xf32>
    %cst_33 = arith.constant 1.000000e+00 : f32
    %248 = vector.broadcast %cst_33 : f32 to vector<128x16xf32>
    %249 = vector.extract_strided_slice %242 {offsets = [0, 0], sizes = [128, 240], strides = [1, 1]} : vector<128x256xf32> to vector<128x240xf32>
    %250 = tpu.concatenate %248, %249 in 1 : vector<128x16xf32>, vector<128x240xf32> -> vector<128x256xf32>
    %251 = arith.mulf %242, %250 : vector<128x256xf32>
    %cst_34 = arith.constant 0.000000e+00 : f32
    %252 = vector.broadcast %cst_34 : f32 to vector<128x32xf32>
    %253 = vector.extract_strided_slice %247 {offsets = [0, 0], sizes = [128, 224], strides = [1, 1]} : vector<128x256xf32> to vector<128x224xf32>
    %254 = tpu.concatenate %252, %253 in 1 : vector<128x32xf32>, vector<128x224xf32> -> vector<128x256xf32>
    %255 = arith.mulf %251, %254 : vector<128x256xf32>
    %256 = arith.addf %255, %247 : vector<128x256xf32>
    %cst_35 = arith.constant 1.000000e+00 : f32
    %257 = vector.broadcast %cst_35 : f32 to vector<128x32xf32>
    %258 = vector.extract_strided_slice %251 {offsets = [0, 0], sizes = [128, 224], strides = [1, 1]} : vector<128x256xf32> to vector<128x224xf32>
    %259 = tpu.concatenate %257, %258 in 1 : vector<128x32xf32>, vector<128x224xf32> -> vector<128x256xf32>
    %260 = arith.mulf %251, %259 : vector<128x256xf32>
    %cst_36 = arith.constant 0.000000e+00 : f32
    %261 = vector.broadcast %cst_36 : f32 to vector<128x64xf32>
    %262 = vector.extract_strided_slice %256 {offsets = [0, 0], sizes = [128, 192], strides = [1, 1]} : vector<128x256xf32> to vector<128x192xf32>
    %263 = tpu.concatenate %261, %262 in 1 : vector<128x64xf32>, vector<128x192xf32> -> vector<128x256xf32>
    %264 = arith.mulf %260, %263 : vector<128x256xf32>
    %265 = arith.addf %264, %256 : vector<128x256xf32>
    %cst_37 = arith.constant 1.000000e+00 : f32
    %266 = vector.broadcast %cst_37 : f32 to vector<128x64xf32>
    %267 = vector.extract_strided_slice %260 {offsets = [0, 0], sizes = [128, 192], strides = [1, 1]} : vector<128x256xf32> to vector<128x192xf32>
    %268 = tpu.concatenate %266, %267 in 1 : vector<128x64xf32>, vector<128x192xf32> -> vector<128x256xf32>
    %269 = arith.mulf %260, %268 : vector<128x256xf32>
    %cst_38 = arith.constant 0.000000e+00 : f32
    %270 = vector.broadcast %cst_38 : f32 to vector<128x128xf32>
    %271 = vector.extract_strided_slice %265 {offsets = [0, 0], sizes = [128, 128], strides = [1, 1]} : vector<128x256xf32> to vector<128x128xf32>
    %272 = tpu.concatenate %270, %271 in 1 : vector<128x128xf32>, vector<128x128xf32> -> vector<128x256xf32>
    %273 = arith.mulf %269, %272 : vector<128x256xf32>
    %274 = arith.addf %273, %265 : vector<128x256xf32>
    %275 = vector.extract_strided_slice %274 {offsets = [0, 0], sizes = [16, 256], strides = [1, 1]} : vector<128x256xf32> to vector<16x256xf32>
    %276 = arith.mulf %275, %113 : vector<16x256xf32>
    %cst_39 = arith.constant dense<0.000000e+00> : vector<256xf32>
    %277 = vector.multi_reduction <add>, %276, %cst_39 [0] : vector<16x256xf32> to vector<256xf32>
    %278 = vector.shape_cast %277 : vector<256xf32> to vector<1x256xf32>
    %279 = vector.extract_strided_slice %274 {offsets = [16, 0], sizes = [16, 256], strides = [1, 1]} : vector<128x256xf32> to vector<16x256xf32>
    %280 = arith.mulf %279, %113 : vector<16x256xf32>
    %cst_40 = arith.constant dense<0.000000e+00> : vector<256xf32>
    %281 = vector.multi_reduction <add>, %280, %cst_40 [0] : vector<16x256xf32> to vector<256xf32>
    %282 = vector.shape_cast %281 : vector<256xf32> to vector<1x256xf32>
    %283 = vector.extract_strided_slice %274 {offsets = [32, 0], sizes = [16, 256], strides = [1, 1]} : vector<128x256xf32> to vector<16x256xf32>
    %284 = arith.mulf %283, %113 : vector<16x256xf32>
    %cst_41 = arith.constant dense<0.000000e+00> : vector<256xf32>
    %285 = vector.multi_reduction <add>, %284, %cst_41 [0] : vector<16x256xf32> to vector<256xf32>
    %286 = vector.shape_cast %285 : vector<256xf32> to vector<1x256xf32>
    %287 = vector.extract_strided_slice %274 {offsets = [48, 0], sizes = [16, 256], strides = [1, 1]} : vector<128x256xf32> to vector<16x256xf32>
    %288 = arith.mulf %287, %113 : vector<16x256xf32>
    %cst_42 = arith.constant dense<0.000000e+00> : vector<256xf32>
    %289 = vector.multi_reduction <add>, %288, %cst_42 [0] : vector<16x256xf32> to vector<256xf32>
    %290 = vector.shape_cast %289 : vector<256xf32> to vector<1x256xf32>
    %291 = vector.extract_strided_slice %274 {offsets = [64, 0], sizes = [16, 256], strides = [1, 1]} : vector<128x256xf32> to vector<16x256xf32>
    %292 = arith.mulf %291, %113 : vector<16x256xf32>
    %cst_43 = arith.constant dense<0.000000e+00> : vector<256xf32>
    %293 = vector.multi_reduction <add>, %292, %cst_43 [0] : vector<16x256xf32> to vector<256xf32>
    %294 = vector.shape_cast %293 : vector<256xf32> to vector<1x256xf32>
    %295 = vector.extract_strided_slice %274 {offsets = [80, 0], sizes = [16, 256], strides = [1, 1]} : vector<128x256xf32> to vector<16x256xf32>
    %296 = arith.mulf %295, %113 : vector<16x256xf32>
    %cst_44 = arith.constant dense<0.000000e+00> : vector<256xf32>
    %297 = vector.multi_reduction <add>, %296, %cst_44 [0] : vector<16x256xf32> to vector<256xf32>
    %298 = vector.shape_cast %297 : vector<256xf32> to vector<1x256xf32>
    %299 = vector.extract_strided_slice %274 {offsets = [96, 0], sizes = [16, 256], strides = [1, 1]} : vector<128x256xf32> to vector<16x256xf32>
    %300 = arith.mulf %299, %113 : vector<16x256xf32>
    %cst_45 = arith.constant dense<0.000000e+00> : vector<256xf32>
    %301 = vector.multi_reduction <add>, %300, %cst_45 [0] : vector<16x256xf32> to vector<256xf32>
    %302 = vector.shape_cast %301 : vector<256xf32> to vector<1x256xf32>
    %303 = vector.extract_strided_slice %274 {offsets = [112, 0], sizes = [16, 256], strides = [1, 1]} : vector<128x256xf32> to vector<16x256xf32>
    %304 = arith.mulf %303, %113 : vector<16x256xf32>
    %cst_46 = arith.constant dense<0.000000e+00> : vector<256xf32>
    %305 = vector.multi_reduction <add>, %304, %cst_46 [0] : vector<16x256xf32> to vector<256xf32>
    %306 = vector.shape_cast %305 : vector<256xf32> to vector<1x256xf32>
    %307 = tpu.concatenate %278, %282, %286, %290, %294, %298, %302, %306 in 0 : vector<1x256xf32>, vector<1x256xf32>, vector<1x256xf32>, vector<1x256xf32>, vector<1x256xf32>, vector<1x256xf32>, vector<1x256xf32>, vector<1x256xf32> -> vector<8x256xf32>
    %c0_47 = arith.constant 0 : index
    %c0_48 = arith.constant 0 : index
    %308 = vector.load %arg10[%c0_47, %c0_48] : memref<8x1xf32, #tpu.memory_space<vmem>>, vector<8x1xf32>
    %309 = vector.broadcast %308 : vector<8x1xf32> to vector<8x256xf32>
    %310 = arith.mulf %63, %309 : vector<8x256xf32>
    %311 = arith.addf %307, %310 : vector<8x256xf32>
    %cst_49 = arith.constant 0.000000e+00 : f32
    %312 = vector.broadcast %cst_49 : f32 to vector<8x256xf32>
    %313 = arith.subf %312, %27 : vector<8x256xf32>
    %314 = math.exp %313 : vector<8x256xf32>
    %cst_50 = arith.constant 1.000000e+00 : f32
    %315 = vector.broadcast %cst_50 : f32 to vector<8x256xf32>
    %316 = arith.addf %315, %314 : vector<8x256xf32>
    %cst_51 = arith.constant 1.000000e+00 : f32
    %317 = vector.broadcast %cst_51 : f32 to vector<8x256xf32>
    %318 = arith.divf %317, %316 : vector<8x256xf32>
    %319 = arith.mulf %27, %318 : vector<8x256xf32>
    %320 = arith.mulf %311, %319 : vector<8x256xf32>
    %c0_52 = arith.constant 0 : index
    %c0_53 = arith.constant 0 : index
    %321 = vector.load %arg11[%c0_52, %c0_53] : memref<4x8xf32, #tpu.memory_space<vmem>>, vector<4x8xf32>
    %322 = vector.extract_strided_slice %321 {offsets = [0, 0], sizes = [4, 1], strides = [1, 1]} : vector<4x8xf32> to vector<4x1xf32>
    %323 = vector.extract_strided_slice %320 {offsets = [0, 0], sizes = [1, 256], strides = [1, 1]} : vector<8x256xf32> to vector<1x256xf32>
    %324 = vector.broadcast %322 : vector<4x1xf32> to vector<4x256xf32>
    %325 = vector.broadcast %323 : vector<1x256xf32> to vector<4x256xf32>
    %326 = arith.mulf %324, %325 : vector<4x256xf32>
    %327 = vector.extract_strided_slice %321 {offsets = [0, 1], sizes = [4, 1], strides = [1, 1]} : vector<4x8xf32> to vector<4x1xf32>
    %328 = vector.extract_strided_slice %320 {offsets = [1, 0], sizes = [1, 256], strides = [1, 1]} : vector<8x256xf32> to vector<1x256xf32>
    %329 = vector.broadcast %327 : vector<4x1xf32> to vector<4x256xf32>
    %330 = vector.broadcast %328 : vector<1x256xf32> to vector<4x256xf32>
    %331 = arith.mulf %329, %330 : vector<4x256xf32>
    %332 = arith.addf %326, %331 : vector<4x256xf32>
    %333 = vector.extract_strided_slice %321 {offsets = [0, 2], sizes = [4, 1], strides = [1, 1]} : vector<4x8xf32> to vector<4x1xf32>
    %334 = vector.extract_strided_slice %320 {offsets = [2, 0], sizes = [1, 256], strides = [1, 1]} : vector<8x256xf32> to vector<1x256xf32>
    %335 = vector.broadcast %333 : vector<4x1xf32> to vector<4x256xf32>
    %336 = vector.broadcast %334 : vector<1x256xf32> to vector<4x256xf32>
    %337 = arith.mulf %335, %336 : vector<4x256xf32>
    %338 = arith.addf %332, %337 : vector<4x256xf32>
    %339 = vector.extract_strided_slice %321 {offsets = [0, 3], sizes = [4, 1], strides = [1, 1]} : vector<4x8xf32> to vector<4x1xf32>
    %340 = vector.extract_strided_slice %320 {offsets = [3, 0], sizes = [1, 256], strides = [1, 1]} : vector<8x256xf32> to vector<1x256xf32>
    %341 = vector.broadcast %339 : vector<4x1xf32> to vector<4x256xf32>
    %342 = vector.broadcast %340 : vector<1x256xf32> to vector<4x256xf32>
    %343 = arith.mulf %341, %342 : vector<4x256xf32>
    %344 = arith.addf %338, %343 : vector<4x256xf32>
    %345 = vector.extract_strided_slice %321 {offsets = [0, 4], sizes = [4, 1], strides = [1, 1]} : vector<4x8xf32> to vector<4x1xf32>
    %346 = vector.extract_strided_slice %320 {offsets = [4, 0], sizes = [1, 256], strides = [1, 1]} : vector<8x256xf32> to vector<1x256xf32>
    %347 = vector.broadcast %345 : vector<4x1xf32> to vector<4x256xf32>
    %348 = vector.broadcast %346 : vector<1x256xf32> to vector<4x256xf32>
    %349 = arith.mulf %347, %348 : vector<4x256xf32>
    %350 = arith.addf %344, %349 : vector<4x256xf32>
    %351 = vector.extract_strided_slice %321 {offsets = [0, 5], sizes = [4, 1], strides = [1, 1]} : vector<4x8xf32> to vector<4x1xf32>
    %352 = vector.extract_strided_slice %320 {offsets = [5, 0], sizes = [1, 256], strides = [1, 1]} : vector<8x256xf32> to vector<1x256xf32>
    %353 = vector.broadcast %351 : vector<4x1xf32> to vector<4x256xf32>
    %354 = vector.broadcast %352 : vector<1x256xf32> to vector<4x256xf32>
    %355 = arith.mulf %353, %354 : vector<4x256xf32>
    %356 = arith.addf %350, %355 : vector<4x256xf32>
    %357 = vector.extract_strided_slice %321 {offsets = [0, 6], sizes = [4, 1], strides = [1, 1]} : vector<4x8xf32> to vector<4x1xf32>
    %358 = vector.extract_strided_slice %320 {offsets = [6, 0], sizes = [1, 256], strides = [1, 1]} : vector<8x256xf32> to vector<1x256xf32>
    %359 = vector.broadcast %357 : vector<4x1xf32> to vector<4x256xf32>
    %360 = vector.broadcast %358 : vector<1x256xf32> to vector<4x256xf32>
    %361 = arith.mulf %359, %360 : vector<4x256xf32>
    %362 = arith.addf %356, %361 : vector<4x256xf32>
    %363 = vector.extract_strided_slice %321 {offsets = [0, 7], sizes = [4, 1], strides = [1, 1]} : vector<4x8xf32> to vector<4x1xf32>
    %364 = vector.extract_strided_slice %320 {offsets = [7, 0], sizes = [1, 256], strides = [1, 1]} : vector<8x256xf32> to vector<1x256xf32>
    %365 = vector.broadcast %363 : vector<4x1xf32> to vector<4x256xf32>
    %366 = vector.broadcast %364 : vector<1x256xf32> to vector<4x256xf32>
    %367 = arith.mulf %365, %366 : vector<4x256xf32>
    %368 = arith.addf %362, %367 : vector<4x256xf32>
    %c0_54 = arith.constant 0 : index
    %c0_55 = arith.constant 0 : index
    %c0_56 = arith.constant 0 : index
    %369 = vector.load %arg2[%c0_54, %c0_55, %c0_56] : memref<1x4x256xf32, #tpu.memory_space<vmem>>, vector<1x4x256xf32>
    %370 = vector.shape_cast %369 : vector<1x4x256xf32> to vector<4x256xf32>
    %c0_57 = arith.constant 0 : index
    %c0_58 = arith.constant 0 : index
    %371 = vector.load %arg12[%c0_57, %c0_58] : memref<4x4xf32, #tpu.memory_space<vmem>>, vector<4x4xf32>
    %372 = vector.extract_strided_slice %371 {offsets = [0, 0], sizes = [4, 1], strides = [1, 1]} : vector<4x4xf32> to vector<4x1xf32>
    %373 = vector.extract_strided_slice %370 {offsets = [0, 0], sizes = [1, 256], strides = [1, 1]} : vector<4x256xf32> to vector<1x256xf32>
    %374 = vector.broadcast %372 : vector<4x1xf32> to vector<4x256xf32>
    %375 = vector.broadcast %373 : vector<1x256xf32> to vector<4x256xf32>
    %376 = arith.mulf %374, %375 : vector<4x256xf32>
    %377 = vector.extract_strided_slice %371 {offsets = [0, 1], sizes = [4, 1], strides = [1, 1]} : vector<4x4xf32> to vector<4x1xf32>
    %378 = vector.extract_strided_slice %370 {offsets = [1, 0], sizes = [1, 256], strides = [1, 1]} : vector<4x256xf32> to vector<1x256xf32>
    %379 = vector.broadcast %377 : vector<4x1xf32> to vector<4x256xf32>
    %380 = vector.broadcast %378 : vector<1x256xf32> to vector<4x256xf32>
    %381 = arith.mulf %379, %380 : vector<4x256xf32>
    %382 = arith.addf %376, %381 : vector<4x256xf32>
    %383 = vector.extract_strided_slice %371 {offsets = [0, 2], sizes = [4, 1], strides = [1, 1]} : vector<4x4xf32> to vector<4x1xf32>
    %384 = vector.extract_strided_slice %370 {offsets = [2, 0], sizes = [1, 256], strides = [1, 1]} : vector<4x256xf32> to vector<1x256xf32>
    %385 = vector.broadcast %383 : vector<4x1xf32> to vector<4x256xf32>
    %386 = vector.broadcast %384 : vector<1x256xf32> to vector<4x256xf32>
    %387 = arith.mulf %385, %386 : vector<4x256xf32>
    %388 = arith.addf %382, %387 : vector<4x256xf32>
    %389 = vector.extract_strided_slice %371 {offsets = [0, 3], sizes = [4, 1], strides = [1, 1]} : vector<4x4xf32> to vector<4x1xf32>
    %390 = vector.extract_strided_slice %370 {offsets = [3, 0], sizes = [1, 256], strides = [1, 1]} : vector<4x256xf32> to vector<1x256xf32>
    %391 = vector.broadcast %389 : vector<4x1xf32> to vector<4x256xf32>
    %392 = vector.broadcast %390 : vector<1x256xf32> to vector<4x256xf32>
    %393 = arith.mulf %391, %392 : vector<4x256xf32>
    %394 = arith.addf %388, %393 : vector<4x256xf32>
    %c0_59 = arith.constant 0 : index
    %c0_60 = arith.constant 0 : index
    %395 = vector.load %arg13[%c0_59, %c0_60] : memref<4x1xf32, #tpu.memory_space<vmem>>, vector<4x1xf32>
    %396 = vector.broadcast %395 : vector<4x1xf32> to vector<4x256xf32>
    %397 = arith.addf %394, %396 : vector<4x256xf32>
    %398 = arith.mulf %368, %397 : vector<4x256xf32>
    %c0_61 = arith.constant 0 : index
    %c0_62 = arith.constant 0 : index
    %c0_63 = arith.constant 0 : index
    %399 = vector.load %arg14[%c0_61, %c0_62, %c0_63] : memref<1x4x256xf32, #tpu.memory_space<vmem>>, vector<1x4x256xf32>
    %400 = vector.shape_cast %399 : vector<1x4x256xf32> to vector<4x256xf32>
    %401 = vector.shape_cast %398 : vector<4x256xf32> to vector<1x4x256xf32>
    tpu.vector_store %arg14[%c0_61, %c0_62, %c0_63], %401 {strides = array<i32>} : memref<1x4x256xf32, #tpu.memory_space<vmem>>, vector<1x4x256xf32>,
    return
  }
  func.func @transform_0(%arg0: i32) -> (i32, i32, i32) {
    %c0_i32 = arith.constant 0 : i32
    %c0_i32_0 = arith.constant 0 : i32
    %c0_i32_1 = arith.constant 0 : i32
    return %arg0, %c0_i32, %c0_i32_0 : i32, i32, i32
  }
  func.func @transform_1(%arg0: i32) -> (i32, i32, i32) {
    %c0_i32 = arith.constant 0 : i32
    %c0_i32_0 = arith.constant 0 : i32
    %c0_i32_1 = arith.constant 0 : i32
    return %arg0, %c0_i32, %c0_i32_0 : i32, i32, i32
  }
  func.func @transform_2(%arg0: i32) -> (i32, i32) {
    %c0_i32 = arith.constant 0 : i32
    %c0_i32_0 = arith.constant 0 : i32
    %c0_i32_1 = arith.constant 0 : i32
    return %c0_i32, %c0_i32_0 : i32, i32
  }
  func.func @transform_3(%arg0: i32) -> (i32, i32) {
    %c0_i32 = arith.constant 0 : i32
    %c0_i32_0 = arith.constant 0 : i32
    %c0_i32_1 = arith.constant 0 : i32
    return %c0_i32, %c0_i32_0 : i32, i32
  }
  func.func @transform_4(%arg0: i32) -> (i32, i32) {
    %c0_i32 = arith.constant 0 : i32
    %c0_i32_0 = arith.constant 0 : i32
    %c0_i32_1 = arith.constant 0 : i32
    return %c0_i32, %c0_i32_0 : i32, i32
  }
  func.func @transform_5(%arg0: i32) -> (i32, i32) {
    %c0_i32 = arith.constant 0 : i32
    %c0_i32_0 = arith.constant 0 : i32
    %c0_i32_1 = arith.constant 0 : i32
    return %c0_i32, %c0_i32_0 : i32, i32
  }
  func.func @transform_6(%arg0: i32) -> (i32, i32) {
    %c0_i32 = arith.constant 0 : i32
    %c0_i32_0 = arith.constant 0 : i32
    %c0_i32_1 = arith.constant 0 : i32
    return %c0_i32, %c0_i32_0 : i32, i32
  }
  func.func @transform_7(%arg0: i32) -> (i32, i32) {
    %c0_i32 = arith.constant 0 : i32
    %c0_i32_0 = arith.constant 0 : i32
    %c0_i32_1 = arith.constant 0 : i32
    return %c0_i32, %c0_i32_0 : i32, i32
  }
  func.func @transform_8(%arg0: i32) -> (i32, i32) {
    %c0_i32 = arith.constant 0 : i32
    %c0_i32_0 = arith.constant 0 : i32
    %c0_i32_1 = arith.constant 0 : i32
    return %c0_i32, %c0_i32_0 : i32, i32
  }
  func.func @transform_9(%arg0: i32) -> (i32, i32) {
    %c0_i32 = arith.constant 0 : i32
    %c0_i32_0 = arith.constant 0 : i32
    %c0_i32_1 = arith.constant 0 : i32
    return %c0_i32, %c0_i32_0 : i32, i32
  }
  func.func @transform_10(%arg0: i32) -> (i32, i32) {
    %c0_i32 = arith.constant 0 : i32
    %c0_i32_0 = arith.constant 0 : i32
    %c0_i32_1 = arith.constant 0 : i32
    return %c0_i32, %c0_i32_0 : i32, i32
  }
  func.func @transform_11(%arg0: i32) -> (i32, i32) {
    %c0_i32 = arith.constant 0 : i32
    %c0_i32_0 = arith.constant 0 : i32
    %c0_i32_1 = arith.constant 0 : i32
    return %c0_i32, %c0_i32_0 : i32, i32
  }
  func.func @transform_12(%arg0: i32) -> (i32, i32) {
    %c0_i32 = arith.constant 0 : i32
    %c0_i32_0 = arith.constant 0 : i32
    %c0_i32_1 = arith.constant 0 : i32
    return %c0_i32, %c0_i32_0 : i32, i32
  }
  func.func @transform_13(%arg0: i32) -> (i32, i32, i32) {
    %c0_i32 = arith.constant 0 : i32
    %c0_i32_0 = arith.constant 0 : i32
    %c0_i32_1 = arith.constant 0 : i32
    return %arg0, %c0_i32, %c0_i32_0 : i32, i32, i32
  }
}

</mosaic_0001>

<llo_original>
// kernel: tpu_custom_call.1
$region0: #{tpu_custom_call.1}
  #allocation0 [shape = 'u32[]', space=smem, size = 0x4, offset = 0x4, fixed_abs, tag = 'smem constant byte address 0x4 - core index']
  #allocation1 [shape = 'u32[144,128]{1,0:T(1,128)}', space=vmem, size = 0x12000, scoped, tag = 'internal scratch']
  %s0 = inlined_call_operand.vmem [shape: f32[4,4,256], index: 0, kind: input, shape index: {}]
  %s1 = inlined_call_operand.vmem [shape: f32[4,4,256], index: 1, kind: input, shape index: {}]
  %s2 = inlined_call_operand.vmem [shape: f32[16,4], index: 2, kind: input, shape index: {}]
  %s3 = inlined_call_operand.vmem [shape: f32[8,4], index: 3, kind: input, shape index: {}]
  %s4 = inlined_call_operand.vmem [shape: f32[8,1], index: 4, kind: input, shape index: {}]
  %s5 = inlined_call_operand.vmem [shape: f32[33,8], index: 5, kind: input, shape index: {}]
  %s6 = inlined_call_operand.vmem [shape: f32[8,1], index: 6, kind: input, shape index: {}]
  %s7 = inlined_call_operand.vmem [shape: f32[8,1], index: 7, kind: input, shape index: {}]
  %s8 = inlined_call_operand.vmem [shape: f32[128,1], index: 8, kind: input, shape index: {}]
  %s9 = inlined_call_operand.vmem [shape: f32[8,1], index: 9, kind: input, shape index: {}]
  %s10 = inlined_call_operand.vmem [shape: f32[4,8], index: 10, kind: input, shape index: {}]
  %s11 = inlined_call_operand.vmem [shape: f32[4,4], index: 11, kind: input, shape index: {}]
  %s12 = inlined_call_operand.vmem [shape: f32[4,1], index: 12, kind: input, shape index: {}]
  %s13 = inlined_call_operand.hbm [shape: f32[4,4,256], index: 13, kind: output, shape index: {}]
  %s14 = sld [smem:[#allocation0]]
  $region85: #{tpu_custom_call.1} parent=0
    _
  %s16 = ssub.s32 1, %s14
  %s17 = scalar_select 0, %s16, %s14
  $region1: #{tpu_custom_call.1} parent=0
    #allocation2 [shape = 'u8[8192]{0}', space=vmem, size = 0x2000, scoped, tag = 'output window, operand 0']
    #allocation3 [shape = 's32[2]{0}', space=sflag, size = 0x8, scoped, tag = 'scoped memory for tpu_custom_call.1']
    %18 = vsyncpa [#allocation3], 0
    %s19 = scalar_lea.sflag [#allocation3], 1
    %20 = vsyncpa %s19, 0
    loop: start=0, step=1, limit=6
    $region2: #{tpu_custom_call.1} parent=1 // loop_pre_header
      _
    $region3: #{tpu_custom_call.1} parent=1 // loop_header
      %s22 = sphi 0, %s26
      %p23 = scmp.ge.s32.totalorder %s22, 6
      %s32 = sphi 0, %s34
      %s35 = sphi 0, %s32
      %s36 = sphi 0, %s35
      %s52 = sphi 0, %s36
      %s58 = sphi 0, %s60
      %s61 = sphi 0, %s58
      %s62 = sphi 0, %s61
      %s78 = sphi 0, %s62
      %s82 = sphi 0, %s82
      %s84 = sphi 0, %s82
      %s85 = sphi 0, %s84
      %s99 = sphi 0, %s85
      %s103 = sphi 0, %s103
      %s105 = sphi 0, %s103
      %s106 = sphi 0, %s105
      %s120 = sphi 0, %s106
      %s124 = sphi 0, %s124
      %s126 = sphi 0, %s124
      %s127 = sphi 0, %s126
      %s141 = sphi 0, %s127
      %s145 = sphi 0, %s145
      %s147 = sphi 0, %s145
      %s148 = sphi 0, %s147
      %s162 = sphi 0, %s148
      %s166 = sphi 0, %s166
      %s168 = sphi 0, %s166
      %s169 = sphi 0, %s168
      %s183 = sphi 0, %s169
      %s187 = sphi 0, %s187
      %s189 = sphi 0, %s187
      %s190 = sphi 0, %s189
      %s204 = sphi 0, %s190
      %s208 = sphi 0, %s208
      %s210 = sphi 0, %s208
      %s211 = sphi 0, %s210
      %s225 = sphi 0, %s211
      %s229 = sphi 0, %s229
      %s231 = sphi 0, %s229
      %s232 = sphi 0, %s231
      %s246 = sphi 0, %s232
      %s250 = sphi 0, %s250
      %s252 = sphi 0, %s250
      %s253 = sphi 0, %s252
      %s267 = sphi 0, %s253
      %s271 = sphi 0, %s271
      %s273 = sphi 0, %s271
      %s274 = sphi 0, %s273
      %s288 = sphi 0, %s274
      %s292 = sphi 0, %s292
      %s294 = sphi 0, %s292
      %s295 = sphi 0, %s294
      %s309 = sphi 0, %s295
      %s315 = sphi 0, %s317
      %s318 = sphi 0, %s315
      %s319 = sphi 0, %s318
      %s335 = sphi 0, %s319
    $region4: #{tpu_custom_call.1} parent=1 // loop_header_branch
      %25 = sbr.rel (%p23) target = $region8
    $region5: #{tpu_custom_call.1} parent=1 // loop_body
      %s27 = ssub.s32 %s22, 1
      %s28 = ssub.s32 %s22, 2
      %s29 = sadd.s32 %s22, 1
      %s30 = ssub.s32 %s22, %s29
      %p31 = scmp.eq.s32.totalorder %s30, 0
      %s33 = sadd.s32 %s32, 1
      %s34 = scalar_select %p31, %s32, %s33
      %p37 = pneg %p31
      %p38 = scmp.eq.s32.totalorder %s22, 3
      %p39 = por %p37, %p38
      %p40 = scmp.ne.s32.totalorder %s32, %s35
      %p41 = scmp.eq.s32.totalorder %s22, 0
      %p42 = por %p40, %p41
      %p43 = scmp.ne.s32.totalorder %s32, %s35
      %p44 = scmp.eq.s32.totalorder %s27, 3
      %p45 = por %p43, %p44
      %p46 = scmp.ne.s32.totalorder %s35, %s36
      %p47 = scmp.eq.s32.totalorder %s27, 0
      %p48 = por %p46, %p47
      %p49 = scmp.ne.s32.totalorder %s35, %s36
      %p50 = scmp.eq.s32.totalorder %s28, 3
      %p51 = por %p49, %p50
      %p53 = scmp.ne.s32.totalorder %s36, %s52
      %p54 = scmp.eq.s32.totalorder %s28, 0
      %p55 = por %p53, %p54
      %s56 = ssub.s32 %s22, %s29
      %p57 = scmp.eq.s32.totalorder %s56, 0
      %s59 = sadd.s32 %s58, 1
      %s60 = scalar_select %p57, %s58, %s59
      %p63 = pneg %p57
      %p64 = scmp.eq.s32.totalorder %s22, 3
      %p65 = por %p63, %p64
      %p66 = scmp.ne.s32.totalorder %s58, %s61
      %p67 = scmp.eq.s32.totalorder %s22, 0
      %p68 = por %p66, %p67
      %p69 = scmp.ne.s32.totalorder %s58, %s61
      %p70 = scmp.eq.s32.totalorder %s27, 3
      %p71 = por %p69, %p70
      %p72 = scmp.ne.s32.totalorder %s61, %s62
      %p73 = scmp.eq.s32.totalorder %s27, 0
      %p74 = por %p72, %p73
      %p75 = scmp.ne.s32.totalorder %s61, %s62
      %p76 = scmp.eq.s32.totalorder %s28, 3
      %p77 = por %p75, %p76
      %p79 = scmp.ne.s32.totalorder %s62, %s78
      %p80 = scmp.eq.s32.totalorder %s28, 0
      %p81 = por %p79, %p80
      %s83 = sadd.s32 %s82, 1
      %p86 = scmp.eq.s32.totalorder %s22, 3
      %p87 = scmp.ne.s32.totalorder %s82, %s84
      %p88 = scmp.eq.s32.totalorder %s22, 0
      %p89 = por %p87, %p88
      %p90 = scmp.ne.s32.totalorder %s82, %s84
      %p91 = scmp.eq.s32.totalorder %s27, 3
      %p92 = por %p90, %p91
      %p93 = scmp.ne.s32.totalorder %s84, %s85
      %p94 = scmp.eq.s32.totalorder %s27, 0
      %p95 = por %p93, %p94
      %p96 = scmp.ne.s32.totalorder %s84, %s85
      %p97 = scmp.eq.s32.totalorder %s28, 3
      %p98 = por %p96, %p97
      %p100 = scmp.ne.s32.totalorder %s85, %s99
      %p101 = scmp.eq.s32.totalorder %s28, 0
      %p102 = por %p100, %p101
      %s104 = sadd.s32 %s103, 1
      %p107 = scmp.eq.s32.totalorder %s22, 3
      %p108 = scmp.ne.s32.totalorder %s103, %s105
      %p109 = scmp.eq.s32.totalorder %s22, 0
      %p110 = por %p108, %p109
      %p111 = scmp.ne.s32.totalorder %s103, %s105
      %p112 = scmp.eq.s32.totalorder %s27, 3
      %p113 = por %p111, %p112
      %p114 = scmp.ne.s32.totalorder %s105, %s106
      %p115 = scmp.eq.s32.totalorder %s27, 0
      %p116 = por %p114, %p115
      %p117 = scmp.ne.s32.totalorder %s105, %s106
      %p118 = scmp.eq.s32.totalorder %s28, 3
      %p119 = por %p117, %p118
      %p121 = scmp.ne.s32.totalorder %s106, %s120
      %p122 = scmp.eq.s32.totalorder %s28, 0
      %p123 = por %p121, %p122
      %s125 = sadd.s32 %s124, 1
      %p128 = scmp.eq.s32.totalorder %s22, 3
      %p129 = scmp.ne.s32.totalorder %s124, %s126
      %p130 = scmp.eq.s32.totalorder %s22, 0
      %p131 = por %p129, %p130
      %p132 = scmp.ne.s32.totalorder %s124, %s126
      %p133 = scmp.eq.s32.totalorder %s27, 3
      %p134 = por %p132, %p133
      %p135 = scmp.ne.s32.totalorder %s126, %s127
      %p136 = scmp.eq.s32.totalorder %s27, 0
      %p137 = por %p135, %p136
      %p138 = scmp.ne.s32.totalorder %s126, %s127
      %p139 = scmp.eq.s32.totalorder %s28, 3
      %p140 = por %p138, %p139
      %p142 = scmp.ne.s32.totalorder %s127, %s141
      %p143 = scmp.eq.s32.totalorder %s28, 0
      %p144 = por %p142, %p143
      %s146 = sadd.s32 %s145, 1
      %p149 = scmp.eq.s32.totalorder %s22, 3
      %p150 = scmp.ne.s32.totalorder %s145, %s147
      %p151 = scmp.eq.s32.totalorder %s22, 0
      %p152 = por %p150, %p151
      %p153 = scmp.ne.s32.totalorder %s145, %s147
      %p154 = scmp.eq.s32.totalorder %s27, 3
      %p155 = por %p153, %p154
      %p156 = scmp.ne.s32.totalorder %s147, %s148
      %p157 = scmp.eq.s32.totalorder %s27, 0
      %p158 = por %p156, %p157
      %p159 = scmp.ne.s32.totalorder %s147, %s148
      %p160 = scmp.eq.s32.totalorder %s28, 3
      %p161 = por %p159, %p160
      %p163 = scmp.ne.s32.totalorder %s148, %s162
      %p164 = scmp.eq.s32.totalorder %s28, 0
      %p165 = por %p163, %p164
      %s167 = sadd.s32 %s166, 1
      %p170 = scmp.eq.s32.totalorder %s22, 3
      %p171 = scmp.ne.s32.totalorder %s166, %s168
      %p172 = scmp.eq.s32.totalorder %s22, 0
      %p173 = por %p171, %p172
      %p174 = scmp.ne.s32.totalorder %s166, %s168
      %p175 = scmp.eq.s32.totalorder %s27, 3
      %p176 = por %p174, %p175
      %p177 = scmp.ne.s32.totalorder %s168, %s169
      %p178 = scmp.eq.s32.totalorder %s27, 0
      %p179 = por %p177, %p178
      %p180 = scmp.ne.s32.totalorder %s168, %s169
      %p181 = scmp.eq.s32.totalorder %s28, 3
      %p182 = por %p180, %p181
      %p184 = scmp.ne.s32.totalorder %s169, %s183
      %p185 = scmp.eq.s32.totalorder %s28, 0
      %p186 = por %p184, %p185
      %s188 = sadd.s32 %s187, 1
      %p191 = scmp.eq.s32.totalorder %s22, 3
      %p192 = scmp.ne.s32.totalorder %s187, %s189
      %p193 = scmp.eq.s32.totalorder %s22, 0
      %p194 = por %p192, %p193
      %p195 = scmp.ne.s32.totalorder %s187, %s189
      %p196 = scmp.eq.s32.totalorder %s27, 3
      %p197 = por %p195, %p196
      %p198 = scmp.ne.s32.totalorder %s189, %s190
      %p199 = scmp.eq.s32.totalorder %s27, 0
      %p200 = por %p198, %p199
      %p201 = scmp.ne.s32.totalorder %s189, %s190
      %p202 = scmp.eq.s32.totalorder %s28, 3
      %p203 = por %p201, %p202
      %p205 = scmp.ne.s32.totalorder %s190, %s204
      %p206 = scmp.eq.s32.totalorder %s28, 0
      %p207 = por %p205, %p206
      %s209 = sadd.s32 %s208, 1
      %p212 = scmp.eq.s32.totalorder %s22, 3
      %p213 = scmp.ne.s32.totalorder %s208, %s210
      %p214 = scmp.eq.s32.totalorder %s22, 0
      %p215 = por %p213, %p214
      %p216 = scmp.ne.s32.totalorder %s208, %s210
      %p217 = scmp.eq.s32.totalorder %s27, 3
      %p218 = por %p216, %p217
      %p219 = scmp.ne.s32.totalorder %s210, %s211
      %p220 = scmp.eq.s32.totalorder %s27, 0
      %p221 = por %p219, %p220
      %p222 = scmp.ne.s32.totalorder %s210, %s211
      %p223 = scmp.eq.s32.totalorder %s28, 3
      %p224 = por %p222, %p223
      %p226 = scmp.ne.s32.totalorder %s211, %s225
      %p227 = scmp.eq.s32.totalorder %s28, 0
      %p228 = por %p226, %p227
      %s230 = sadd.s32 %s229, 1
      %p233 = scmp.eq.s32.totalorder %s22, 3
      %p234 = scmp.ne.s32.totalorder %s229, %s231
      %p235 = scmp.eq.s32.totalorder %s22, 0
      %p236 = por %p234, %p235
      %p237 = scmp.ne.s32.totalorder %s229, %s231
      %p238 = scmp.eq.s32.totalorder %s27, 3
      %p239 = por %p237, %p238
      %p240 = scmp.ne.s32.totalorder %s231, %s232
      %p241 = scmp.eq.s32.totalorder %s27, 0
      %p242 = por %p240, %p241
      %p243 = scmp.ne.s32.totalorder %s231, %s232
      %p244 = scmp.eq.s32.totalorder %s28, 3
      %p245 = por %p243, %p244
      %p247 = scmp.ne.s32.totalorder %s232, %s246
      %p248 = scmp.eq.s32.totalorder %s28, 0
      %p249 = por %p247, %p248
      %s251 = sadd.s32 %s250, 1
      %p254 = scmp.eq.s32.totalorder %s22, 3
      %p255 = scmp.ne.s32.totalorder %s250, %s252
      %p256 = scmp.eq.s32.totalorder %s22, 0
      %p257 = por %p255, %p256
      %p258 = scmp.ne.s32.totalorder %s250, %s252
      %p259 = scmp.eq.s32.totalorder %s27, 3
      %p260 = por %p258, %p259
      %p261 = scmp.ne.s32.totalorder %s252, %s253
      %p262 = scmp.eq.s32.totalorder %s27, 0
      %p263 = por %p261, %p262
      %p264 = scmp.ne.s32.totalorder %s252, %s253
      %p265 = scmp.eq.s32.totalorder %s28, 3
      %p266 = por %p264, %p265
      %p268 = scmp.ne.s32.totalorder %s253, %s267
      %p269 = scmp.eq.s32.totalorder %s28, 0
      %p270 = por %p268, %p269
      %s272 = sadd.s32 %s271, 1
      %p275 = scmp.eq.s32.totalorder %s22, 3
      %p276 = scmp.ne.s32.totalorder %s271, %s273
      %p277 = scmp.eq.s32.totalorder %s22, 0
      %p278 = por %p276, %p277
      %p279 = scmp.ne.s32.totalorder %s271, %s273
      %p280 = scmp.eq.s32.totalorder %s27, 3
      %p281 = por %p279, %p280
      %p282 = scmp.ne.s32.totalorder %s273, %s274
      %p283 = scmp.eq.s32.totalorder %s27, 0
      %p284 = por %p282, %p283
      %p285 = scmp.ne.s32.totalorder %s273, %s274
      %p286 = scmp.eq.s32.totalorder %s28, 3
      %p287 = por %p285, %p286
      %p289 = scmp.ne.s32.totalorder %s274, %s288
      %p290 = scmp.eq.s32.totalorder %s28, 0
      %p291 = por %p289, %p290
      %s293 = sadd.s32 %s292, 1
      %p296 = scmp.eq.s32.totalorder %s22, 3
      %p297 = scmp.ne.s32.totalorder %s292, %s294
      %p298 = scmp.eq.s32.totalorder %s22, 0
      %p299 = por %p297, %p298
      %p300 = scmp.ne.s32.totalorder %s292, %s294
      %p301 = scmp.eq.s32.totalorder %s27, 3
      %p302 = por %p300, %p301
      %p303 = scmp.ne.s32.totalorder %s294, %s295
      %p304 = scmp.eq.s32.totalorder %s27, 0
      %p305 = por %p303, %p304
      %p306 = scmp.ne.s32.totalorder %s294, %s295
      %p307 = scmp.eq.s32.totalorder %s28, 3
      %p308 = por %p306, %p307
      %p310 = scmp.ne.s32.totalorder %s295, %s309
      %p311 = scmp.eq.s32.totalorder %s28, 0
      %p312 = por %p310, %p311
      %s313 = ssub.s32 %s22, %s29
      %p314 = scmp.eq.s32.totalorder %s313, 0
      %s316 = sadd.s32 %s315, 1
      %s317 = scalar_select %p314, %s315, %s316
      %p320 = pneg %p314
      %p321 = scmp.eq.s32.totalorder %s22, 3
      %p322 = por %p320, %p321
      %p323 = scmp.ne.s32.totalorder %s315, %s318
      %p324 = scmp.eq.s32.totalorder %s22, 0
      %p325 = por %p323, %p324
      %p326 = scmp.ne.s32.totalorder %s315, %s318
      %p327 = scmp.eq.s32.totalorder %s27, 3
      %p328 = por %p326, %p327
      %p329 = scmp.ne.s32.totalorder %s318, %s319
      %p330 = scmp.eq.s32.totalorder %s27, 0
      %p331 = por %p329, %p330
      %p332 = scmp.ne.s32.totalorder %s318, %s319
      %p333 = scmp.eq.s32.totalorder %s28, 3
      %p334 = por %p332, %p333
      %p336 = scmp.ne.s32.totalorder %s319, %s335
      %p337 = scmp.eq.s32.totalorder %s28, 0
      %p338 = por %p336, %p337
      %p339 = scmp.le.s32.totalorder 1, %s22
      %p340 = scmp.lt.s32.totalorder %s22, 5
      %p341 = pnand %p339, %p340
      %p342 = pneg %p341
      // Predicated region
      $region9: #{tpu_custom_call.1} parent=5 // pred_check
        _
      $region10: #{tpu_custom_call.1} parent=5 // pred_check_branch
        %344 = sbr.rel (%p341) target = $region12
      $region11: #{tpu_custom_call.1} parent=5 // pred_region
        %s345 = ssub.s32 %s22, 1
        // Predicated region
        $region13: #{tpu_custom_call.1} parent=11 // pred_check
          %p346 = pneg %p95
        $region14: #{tpu_custom_call.1} parent=11 // pred_check_branch
          %348 = sbr.rel (%p346) target = $region16
        $region15: #{tpu_custom_call.1} parent=11 // pred_region
          _
        $region16: #{tpu_custom_call.1} parent=11 // pred_fallthru
          _
        // Predicated region
        $region17: #{tpu_custom_call.1} parent=11 // pred_check
          %p349 = pneg %p116
        $region18: #{tpu_custom_call.1} parent=11 // pred_check_branch
          %351 = sbr.rel (%p349) target = $region20
        $region19: #{tpu_custom_call.1} parent=11 // pred_region
          _
        $region20: #{tpu_custom_call.1} parent=11 // pred_fallthru
          _
        // Predicated region
        $region21: #{tpu_custom_call.1} parent=11 // pred_check
          %p352 = pneg %p137
        $region22: #{tpu_custom_call.1} parent=11 // pred_check_branch
          %354 = sbr.rel (%p352) target = $region24
        $region23: #{tpu_custom_call.1} parent=11 // pred_region
          _
        $region24: #{tpu_custom_call.1} parent=11 // pred_fallthru
          _
        // Predicated region
        $region25: #{tpu_custom_call.1} parent=11 // pred_check
          %p355 = pneg %p158
        $region26: #{tpu_custom_call.1} parent=11 // pred_check_branch
          %357 = sbr.rel (%p355) target = $region28
        $region27: #{tpu_custom_call.1} parent=11 // pred_region
          _
        $region28: #{tpu_custom_call.1} parent=11 // pred_fallthru
          _
        // Predicated region
        $region29: #{tpu_custom_call.1} parent=11 // pred_check
          %p358 = pneg %p179
        $region30: #{tpu_custom_call.1} parent=11 // pred_check_branch
          %360 = sbr.rel (%p358) target = $region32
        $region31: #{tpu_custom_call.1} parent=11 // pred_region
          _
        $region32: #{tpu_custom_call.1} parent=11 // pred_fallthru
          _
        // Predicated region
        $region33: #{tpu_custom_call.1} parent=11 // pred_check
          %p361 = pneg %p200
        $region34: #{tpu_custom_call.1} parent=11 // pred_check_branch
          %363 = sbr.rel (%p361) target = $region36
        $region35: #{tpu_custom_call.1} parent=11 // pred_region
          _
        $region36: #{tpu_custom_call.1} parent=11 // pred_fallthru
          _
        // Predicated region
        $region37: #{tpu_custom_call.1} parent=11 // pred_check
          %p364 = pneg %p221
        $region38: #{tpu_custom_call.1} parent=11 // pred_check_branch
          %366 = sbr.rel (%p364) target = $region40
        $region39: #{tpu_custom_call.1} parent=11 // pred_region
          _
        $region40: #{tpu_custom_call.1} parent=11 // pred_fallthru
          _
        // Predicated region
        $region41: #{tpu_custom_call.1} parent=11 // pred_check
          %p367 = pneg %p242
        $region42: #{tpu_custom_call.1} parent=11 // pred_check_branch
          %369 = sbr.rel (%p367) target = $region44
        $region43: #{tpu_custom_call.1} parent=11 // pred_region
          _
        $region44: #{tpu_custom_call.1} parent=11 // pred_fallthru
          _
        // Predicated region
        $region45: #{tpu_custom_call.1} parent=11 // pred_check
          %p370 = pneg %p263
        $region46: #{tpu_custom_call.1} parent=11 // pred_check_branch
          %372 = sbr.rel (%p370) target = $region48
        $region47: #{tpu_custom_call.1} parent=11 // pred_region
          _
        $region48: #{tpu_custom_call.1} parent=11 // pred_fallthru
          _
        // Predicated region
        $region49: #{tpu_custom_call.1} parent=11 // pred_check
          %p373 = pneg %p284
        $region50: #{tpu_custom_call.1} parent=11 // pred_check_branch
          %375 = sbr.rel (%p373) target = $region52
        $region51: #{tpu_custom_call.1} parent=11 // pred_region
          _
        $region52: #{tpu_custom_call.1} parent=11 // pred_fallthru
          _
        // Predicated region
        $region53: #{tpu_custom_call.1} parent=11 // pred_check
          %p376 = pneg %p305
        $region54: #{tpu_custom_call.1} parent=11 // pred_check_branch
          %378 = sbr.rel (%p376) target = $region56
        $region55: #{tpu_custom_call.1} parent=11 // pred_region
          _
        $region56: #{tpu_custom_call.1} parent=11 // pred_fallthru
          _
      $region12: #{tpu_custom_call.1} parent=5 // pred_fallthru
        _
      %p379 = scmp.lt.s32.totalorder %s22, 4
      // Predicated region
      $region57: #{tpu_custom_call.1} parent=5 // pred_check
        %p380 = pneg %p379
      $region58: #{tpu_custom_call.1} parent=5 // pred_check_branch
        %382 = sbr.rel (%p380) target = $region60
      $region59: #{tpu_custom_call.1} parent=5 // pred_region
        // Predicated region
        $region61: #{tpu_custom_call.1} parent=59 // pred_check
          %p383 = pneg %p42
        $region62: #{tpu_custom_call.1} parent=59 // pred_check_branch
          %385 = sbr.rel (%p383) target = $region64
        $region63: #{tpu_custom_call.1} parent=59 // pred_region
          %p386 = scmp.lt.s32.totalorder %s22, 3
          %s387 = scalar_select %p386, %s22, 3
          %s388 = smul.addr %s387, 2
          %s389 = smul.addr %s388, 4
          %s390 = scalar_lea.vmem %s0, %s389
        $region64: #{tpu_custom_call.1} parent=59 // pred_fallthru
          _
        // Predicated region
        $region65: #{tpu_custom_call.1} parent=59 // pred_check
          %p391 = pneg %p68
        $region66: #{tpu_custom_call.1} parent=59 // pred_check_branch
          %393 = sbr.rel (%p391) target = $region68
        $region67: #{tpu_custom_call.1} parent=59 // pred_region
          %p394 = scmp.lt.s32.totalorder %s22, 3
          %s395 = scalar_select %p394, %s22, 3
          %s396 = smul.addr %s395, 2
          %s397 = smul.addr %s396, 4
          %s398 = scalar_lea.vmem %s1, %s397
        $region68: #{tpu_custom_call.1} parent=59 // pred_fallthru
          _
      $region60: #{tpu_custom_call.1} parent=5 // pred_fallthru
        _
      %p399 = scmp.le.s32.totalorder 1, %s22
      %p400 = scmp.lt.s32.totalorder %s22, 5
      %p401 = pnand %p399, %p400
      %p402 = pneg %p401
      // Predicated region
      $region69: #{tpu_custom_call.1} parent=5 // pred_check
        _
      $region70: #{tpu_custom_call.1} parent=5 // pred_check_branch
        %404 = sbr.rel (%p401) target = $region72
      $region71: #{tpu_custom_call.1} parent=5 // pred_region
        %s405 = ssub.s32 %s22, 1
        %p406 = scmp.lt.s32.totalorder %s27, 3
        %s407 = scalar_select %p406, %s27, 3
        %s408 = smul.addr %s407, 2
        %s409 = smul.addr %s408, 4
        %s410 = scalar_lea.vmem %s0, %s409
        %p411 = pneg %p48
        %p412 = pneg %p45
        %p413 = scmp.lt.s32.totalorder %s27, 3
        %s414 = scalar_select %p413, %s27, 3
        %s415 = smul.addr %s414, 2
        %s416 = smul.addr %s415, 4
        %s417 = scalar_lea.vmem %s1, %s416
        %p418 = pneg %p74
        %p419 = pneg %p71
        %p420 = pneg %p95
        %p421 = pneg %p92
        %p422 = pneg %p116
        %p423 = pneg %p113
        %p424 = pneg %p137
        %p425 = pneg %p134
        %p426 = pneg %p158
        %p427 = pneg %p155
        %p428 = pneg %p179
        %p429 = pneg %p176
        %p430 = pneg %p200
        %p431 = pneg %p197
        %p432 = pneg %p221
        %p433 = pneg %p218
        %p434 = pneg %p242
        %p435 = pneg %p239
        %p436 = pneg %p263
        %p437 = pneg %p260
        %p438 = pneg %p284
        %p439 = pneg %p281
        %p440 = pneg %p305
        %p441 = pneg %p302
        %p442 = pneg %p331
        %p443 = pneg %p328
        %s444 = sand.u32 %s318, 1
        %s445 = scalar_lea.sflag [#allocation3], %s444
        %s446 = sand.u32 %s318, 1
        %s447 = smul.addr %s446, 8
        %s448 = scalar_lea.vmem [#allocation2], %s447
        %p449 = scmp.lt.s32.totalorder %s27, 3
        %s450 = scalar_select %p449, %s27, 3
        %s451 = smul.addr %s450, 2
        %s452 = smul.addr %s451, 4
        %s453 = scalar_lea.vmem %s0, %s452
        %p454 = scmp.lt.s32.totalorder %s27, 3
        %s455 = scalar_select %p454, %s27, 3
        %s456 = smul.addr %s455, 2
        %s457 = smul.addr %s456, 4
        %s458 = scalar_lea.vmem %s1, %s457
        %v459 = vld [vmem:[%s453] sm:$0xff]
        %v460 = vld [vmem:[%s2] sm:$0xff]
        %v461 = vld [vmem:[%s2 + $0x8] sm:$0xff]
        %463 = vset.pattern.permute.xlu0 0
        %464 = vperm.xlu0 %463, %v460
        %v465 = vpop.permute.xlu0 %464
        %468 = vset.pattern.permute.xlu0 0
        %469 = vperm.xlu0 %468, %v461
        %v470 = vpop.permute.xlu0 %469
        %v473 = vlaneseq
        %v474 = vshrl.u32 %v473, 7
        %v475 = vsub.s32 0, %v474
        %v476 = vrot.slane %v459, %v475
        %v477 = vlaneseq
        %v478 = vshrl.u32 %v477, 7
        %v479 = vsub.s32 4, %v478
        %v480 = vrot.slane %v459, %v479
        %v483 = vlaneseq
        %v484 = vshrl.u32 %v483, 7
        %v485 = vsub.s32 0, %v484
        %v486 = vrot.slane %v476, %v485
        %v487 = vlaneseq
        %v488 = vshrl.u32 %v487, 7
        %v489 = vsub.s32 0, %v488
        %v490 = vrot.slane %v480, %v489
        %v491 = vmul.f32 %v465, %v486
        %v492 = vmul.f32 %v465, %v490
        %v493 = vmul.f32 %v470, %v486
        %v494 = vmul.f32 %v470, %v490
        %495 = vset.pattern.permute.xlu0 1
        %496 = vperm.xlu0 %495, %v460
        %v497 = vpop.permute.xlu0 %496
        %499 = vset.pattern.permute.xlu0 1
        %500 = vperm.xlu0 %499, %v461
        %v501 = vpop.permute.xlu0 %500
        %v503 = vlaneseq
        %v504 = vshrl.u32 %v503, 7
        %v505 = vsub.s32 1, %v504
        %v506 = vrot.slane %v459, %v505
        %v507 = vlaneseq
        %v508 = vshrl.u32 %v507, 7
        %v509 = vsub.s32 5, %v508
        %v510 = vrot.slane %v459, %v509
        %v513 = vlaneseq
        %v514 = vshrl.u32 %v513, 7
        %v515 = vsub.s32 1, %v514
        %v516 = vrot.slane %v506, %v515
        %v517 = vlaneseq
        %v518 = vshrl.u32 %v517, 7
        %v519 = vsub.s32 1, %v518
        %v520 = vrot.slane %v510, %v519
        %v521 = vmul.f32 %v497, %v516
        %v522 = vmul.f32 %v497, %v520
        %v523 = vmul.f32 %v501, %v516
        %v524 = vmul.f32 %v501, %v520
        %v525 = vadd.f32 %v491, %v521
        %v526 = vadd.f32 %v492, %v522
        %v527 = vadd.f32 %v493, %v523
        %v528 = vadd.f32 %v494, %v524
        %529 = vset.pattern.permute.xlu0 2
        %530 = vperm.xlu0 %529, %v460
        %v531 = vpop.permute.xlu0 %530
        %533 = vset.pattern.permute.xlu0 2
        %534 = vperm.xlu0 %533, %v461
        %v535 = vpop.permute.xlu0 %534
        %v537 = vlaneseq
        %v538 = vshrl.u32 %v537, 7
        %v539 = vsub.s32 2, %v538
        %v540 = vrot.slane %v459, %v539
        %v541 = vlaneseq
        %v542 = vshrl.u32 %v541, 7
        %v543 = vsub.s32 6, %v542
        %v544 = vrot.slane %v459, %v543
        %v547 = vlaneseq
        %v548 = vshrl.u32 %v547, 7
        %v549 = vsub.s32 2, %v548
        %v550 = vrot.slane %v540, %v549
        %v551 = vlaneseq
        %v552 = vshrl.u32 %v551, 7
        %v553 = vsub.s32 2, %v552
        %v554 = vrot.slane %v544, %v553
        %v555 = vmul.f32 %v531, %v550
        %v556 = vmul.f32 %v531, %v554
        %v557 = vmul.f32 %v535, %v550
        %v558 = vmul.f32 %v535, %v554
        %v559 = vadd.f32 %v525, %v555
        %v560 = vadd.f32 %v526, %v556
        %v561 = vadd.f32 %v527, %v557
        %v562 = vadd.f32 %v528, %v558
        %563 = vset.pattern.permute.xlu0 3
        %564 = vperm.xlu0 %563, %v460
        %v565 = vpop.permute.xlu0 %564
        %567 = vset.pattern.permute.xlu0 3
        %568 = vperm.xlu0 %567, %v461
        %v569 = vpop.permute.xlu0 %568
        %v571 = vlaneseq
        %v572 = vshrl.u32 %v571, 7
        %v573 = vsub.s32 3, %v572
        %v574 = vrot.slane %v459, %v573
        %v575 = vlaneseq
        %v576 = vshrl.u32 %v575, 7
        %v577 = vsub.s32 7, %v576
        %v578 = vrot.slane %v459, %v577
        %v581 = vlaneseq
        %v582 = vshrl.u32 %v581, 7
        %v583 = vsub.s32 3, %v582
        %v584 = vrot.slane %v574, %v583
        %v585 = vlaneseq
        %v586 = vshrl.u32 %v585, 7
        %v587 = vsub.s32 3, %v586
        %v588 = vrot.slane %v578, %v587
        %v589 = vmul.f32 %v565, %v584
        %v590 = vmul.f32 %v565, %v588
        %v591 = vmul.f32 %v569, %v584
        %v592 = vmul.f32 %v569, %v588
        %v593 = vadd.f32 %v559, %v589
        %v594 = vadd.f32 %v560, %v590
        %v595 = vadd.f32 %v561, %v591
        %v596 = vadd.f32 %v562, %v592
        %v597 = vld [vmem:[%s3] sm:$0xff]
        %599 = vset.pattern.permute.xlu0 3
        %600 = vperm.xlu0 %599, %v597
        %v601 = vpop.permute.xlu0 %600
        %v603 = vmul.f32 %v601, %v593
        %v604 = vmul.f32 %v601, %v594
        %607 = vrot.lane.b32.xlu0 %v593, 3
        %v608 = vpop.permute.xlu0 %607
        %609 = vrot.lane.b32.xlu0 %v594, 3
        %v610 = vpop.permute.xlu0 %609
        %vm611 = vcmask 23552
        %v612 = vsel %vm611, %v608, %v610
        %v615 = vsel %vm611, 0.0, %v608
        %616 = vset.pattern.permute.xlu0 0
        %617 = vperm.xlu0 %616, %v597
        %v618 = vpop.permute.xlu0 %617
        %v620 = vmul.f32 %v618, %v615
        %v621 = vmul.f32 %v618, %v612
        %v622 = vadd.f32 %v603, %v620
        %v623 = vadd.f32 %v604, %v621
        %624 = vrot.lane.b32.xlu0 %v593, 2
        %v625 = vpop.permute.xlu0 %624
        %626 = vrot.lane.b32.xlu0 %v594, 2
        %v627 = vpop.permute.xlu0 %626
        %vm628 = vcmask 15360
        %v629 = vsel %vm628, %v625, %v627
        %v632 = vsel %vm628, 0.0, %v625
        %633 = vset.pattern.permute.xlu0 1
        %634 = vperm.xlu0 %633, %v597
        %v635 = vpop.permute.xlu0 %634
        %v637 = vmul.f32 %v635, %v632
        %v638 = vmul.f32 %v635, %v629
        %v639 = vadd.f32 %v622, %v637
        %v640 = vadd.f32 %v623, %v638
        %641 = vrot.lane.b32.xlu0 %v593, 1
        %v642 = vpop.permute.xlu0 %641
        %643 = vrot.lane.b32.xlu0 %v594, 1
        %v644 = vpop.permute.xlu0 %643
        %vm645 = vcmask 7168
        %v646 = vsel %vm645, %v642, %v644
        %v649 = vsel %vm645, 0.0, %v642
        %650 = vset.pattern.permute.xlu0 2
        %651 = vperm.xlu0 %650, %v597
        %v652 = vpop.permute.xlu0 %651
        %v654 = vmul.f32 %v652, %v649
        %v655 = vmul.f32 %v652, %v646
        %v656 = vadd.f32 %v639, %v654
        %v657 = vadd.f32 %v640, %v655
        %v658 = vld [vmem:[%s4] sm:$0xff]
        %660 = vset.pattern.permute.xlu0 0
        %661 = vperm.xlu0 %660, %v658
        %v662 = vpop.permute.xlu0 %661
        %v664 = vadd.f32 %v656, %v662
        %v665 = vadd.f32 %v657, %v662
        %v666 = vsub.f32 0.0, %v664
        %v667 = vsub.f32 0.0, %v665
        %v668 = vmul.f32 %v666, 1.442695
        %v669 = vpow.pop %v668
        %v670 = vmul.f32 %v667, 1.442695
        %v671 = vpow.pop %v670
        %v672 = vadd.f32 %v669, 1.0
        %v673 = vadd.f32 %v671, 1.0
        %v674 = vrcp.pop %v672
        %v675 = vmul.f32 1.0, %v674
        %v676 = vrcp.pop %v673
        %v677 = vmul.f32 1.0, %v676
        %v678 = vmul.f32 %v664, %v675
        %v679 = vmul.f32 %v665, %v677
        %v680 = vld [vmem:[%s5] sm:$0xff]
        %v681 = vld [vmem:[%s5 + $0x8] sm:$0xff]
        %v682 = vld [vmem:[%s5 + $0x10] sm:$0xff]
        %v683 = vld [vmem:[%s5 + $0x18] sm:$0xff]
        %v684 = vld [vmem:[%s5 + $0x20] sm:$0x1]
        %686 = vset.pattern.permute.xlu0 0
        %687 = vperm.xlu0 %686, %v680
        %v688 = vpop.permute.xlu0 %687
        %691 = vset.pattern.permute.xlu0 0
        %692 = vperm.xlu0 %691, %v681
        %v693 = vpop.permute.xlu0 %692
        %696 = vset.pattern.permute.xlu0 0
        %697 = vperm.xlu0 %696, %v682
        %v698 = vpop.permute.xlu0 %697
        %701 = vset.pattern.permute.xlu0 0
        %702 = vperm.xlu0 %701, %v683
        %v703 = vpop.permute.xlu0 %702
        %706 = vset.pattern.permute.xlu0 0
        %707 = vperm.xlu0 %706, %v684
        %v708 = vpop.permute.xlu0 %707
        %v710 = vlaneseq
        %v711 = vshrl.u32 %v710, 7
        %v712 = vsub.s32 0, %v711
        %v713 = vrot.slane %v678, %v712
        %v714 = vlaneseq
        %v715 = vshrl.u32 %v714, 7
        %v716 = vsub.s32 0, %v715
        %v717 = vrot.slane %v679, %v716
        %v718 = vmul.f32 %v688, %v713
        %v719 = vmul.f32 %v688, %v717
        %v720 = vmul.f32 %v693, %v713
        %v721 = vmul.f32 %v693, %v717
        %v722 = vmul.f32 %v698, %v713
        %v723 = vmul.f32 %v698, %v717
        %v724 = vmul.f32 %v703, %v713
        %v725 = vmul.f32 %v703, %v717
        %v726 = vmul.f32 %v708, %v713
        %v727 = vmul.f32 %v708, %v717
        %728 = vset.pattern.permute.xlu0 1
        %729 = vperm.xlu0 %728, %v680
        %v730 = vpop.permute.xlu0 %729
        %732 = vset.pattern.permute.xlu0 1
        %733 = vperm.xlu0 %732, %v681
        %v734 = vpop.permute.xlu0 %733
        %736 = vset.pattern.permute.xlu0 1
        %737 = vperm.xlu0 %736, %v682
        %v738 = vpop.permute.xlu0 %737
        %740 = vset.pattern.permute.xlu0 1
        %741 = vperm.xlu0 %740, %v683
        %v742 = vpop.permute.xlu0 %741
        %744 = vset.pattern.permute.xlu0 1
        %745 = vperm.xlu0 %744, %v684
        %v746 = vpop.permute.xlu0 %745
        %v748 = vlaneseq
        %v749 = vshrl.u32 %v748, 7
        %v750 = vsub.s32 1, %v749
        %v751 = vrot.slane %v678, %v750
        %v752 = vlaneseq
        %v753 = vshrl.u32 %v752, 7
        %v754 = vsub.s32 1, %v753
        %v755 = vrot.slane %v679, %v754
        %v756 = vmul.f32 %v730, %v751
        %v757 = vmul.f32 %v730, %v755
        %v758 = vmul.f32 %v734, %v751
        %v759 = vmul.f32 %v734, %v755
        %v760 = vmul.f32 %v738, %v751
        %v761 = vmul.f32 %v738, %v755
        %v762 = vmul.f32 %v742, %v751
        %v763 = vmul.f32 %v742, %v755
        %v764 = vmul.f32 %v746, %v751
        %v765 = vmul.f32 %v746, %v755
        %v766 = vadd.f32 %v718, %v756
        %v767 = vadd.f32 %v719, %v757
        %v768 = vadd.f32 %v720, %v758
        %v769 = vadd.f32 %v721, %v759
        %v770 = vadd.f32 %v722, %v760
        %v771 = vadd.f32 %v723, %v761
        %v772 = vadd.f32 %v724, %v762
        %v773 = vadd.f32 %v725, %v763
        %v774 = vadd.f32 %v726, %v764
        %v775 = vadd.f32 %v727, %v765
        %776 = vset.pattern.permute.xlu0 2
        %777 = vperm.xlu0 %776, %v680
        %v778 = vpop.permute.xlu0 %777
        %780 = vset.pattern.permute.xlu0 2
        %781 = vperm.xlu0 %780, %v681
        %v782 = vpop.permute.xlu0 %781
        %784 = vset.pattern.permute.xlu0 2
        %785 = vperm.xlu0 %784, %v682
        %v786 = vpop.permute.xlu0 %785
        %788 = vset.pattern.permute.xlu0 2
        %789 = vperm.xlu0 %788, %v683
        %v790 = vpop.permute.xlu0 %789
        %792 = vset.pattern.permute.xlu0 2
        %793 = vperm.xlu0 %792, %v684
        %v794 = vpop.permute.xlu0 %793
        %v796 = vlaneseq
        %v797 = vshrl.u32 %v796, 7
        %v798 = vsub.s32 2, %v797
        %v799 = vrot.slane %v678, %v798
        %v800 = vlaneseq
        %v801 = vshrl.u32 %v800, 7
        %v802 = vsub.s32 2, %v801
        %v803 = vrot.slane %v679, %v802
        %v804 = vmul.f32 %v778, %v799
        %v805 = vmul.f32 %v778, %v803
        %v806 = vmul.f32 %v782, %v799
        %v807 = vmul.f32 %v782, %v803
        %v808 = vmul.f32 %v786, %v799
        %v809 = vmul.f32 %v786, %v803
        %v810 = vmul.f32 %v790, %v799
        %v811 = vmul.f32 %v790, %v803
        %v812 = vmul.f32 %v794, %v799
        %v813 = vmul.f32 %v794, %v803
        %v814 = vadd.f32 %v766, %v804
        %v815 = vadd.f32 %v767, %v805
        %v816 = vadd.f32 %v768, %v806
        %v817 = vadd.f32 %v769, %v807
        %v818 = vadd.f32 %v770, %v808
        %v819 = vadd.f32 %v771, %v809
        %v820 = vadd.f32 %v772, %v810
        %v821 = vadd.f32 %v773, %v811
        %v822 = vadd.f32 %v774, %v812
        %v823 = vadd.f32 %v775, %v813
        %824 = vset.pattern.permute.xlu0 3
        %825 = vperm.xlu0 %824, %v680
        %v826 = vpop.permute.xlu0 %825
        %828 = vset.pattern.permute.xlu0 3
        %829 = vperm.xlu0 %828, %v681
        %v830 = vpop.permute.xlu0 %829
        %832 = vset.pattern.permute.xlu0 3
        %833 = vperm.xlu0 %832, %v682
        %v834 = vpop.permute.xlu0 %833
        %836 = vset.pattern.permute.xlu0 3
        %837 = vperm.xlu0 %836, %v683
        %v838 = vpop.permute.xlu0 %837
        %840 = vset.pattern.permute.xlu0 3
        %841 = vperm.xlu0 %840, %v684
        %v842 = vpop.permute.xlu0 %841
        %v844 = vlaneseq
        %v845 = vshrl.u32 %v844, 7
        %v846 = vsub.s32 3, %v845
        %v847 = vrot.slane %v678, %v846
        %v848 = vlaneseq
        %v849 = vshrl.u32 %v848, 7
        %v850 = vsub.s32 3, %v849
        %v851 = vrot.slane %v679, %v850
        %v852 = vmul.f32 %v826, %v847
        %v853 = vmul.f32 %v826, %v851
        %v854 = vmul.f32 %v830, %v847
        %v855 = vmul.f32 %v830, %v851
        %v856 = vmul.f32 %v834, %v847
        %v857 = vmul.f32 %v834, %v851
        %v858 = vmul.f32 %v838, %v847
        %v859 = vmul.f32 %v838, %v851
        %v860 = vmul.f32 %v842, %v847
        %v861 = vmul.f32 %v842, %v851
        %v862 = vadd.f32 %v814, %v852
        %v863 = vadd.f32 %v815, %v853
        %v864 = vadd.f32 %v816, %v854
        %v865 = vadd.f32 %v817, %v855
        %v866 = vadd.f32 %v818, %v856
        %v867 = vadd.f32 %v819, %v857
        %v868 = vadd.f32 %v820, %v858
        %v869 = vadd.f32 %v821, %v859
        %v870 = vadd.f32 %v822, %v860
        %v871 = vadd.f32 %v823, %v861
        %872 = vset.pattern.permute.xlu0 4
        %873 = vperm.xlu0 %872, %v680
        %v874 = vpop.permute.xlu0 %873
        %876 = vset.pattern.permute.xlu0 4
        %877 = vperm.xlu0 %876, %v681
        %v878 = vpop.permute.xlu0 %877
        %880 = vset.pattern.permute.xlu0 4
        %881 = vperm.xlu0 %880, %v682
        %v882 = vpop.permute.xlu0 %881
        %884 = vset.pattern.permute.xlu0 4
        %885 = vperm.xlu0 %884, %v683
        %v886 = vpop.permute.xlu0 %885
        %888 = vset.pattern.permute.xlu0 4
        %889 = vperm.xlu0 %888, %v684
        %v890 = vpop.permute.xlu0 %889
        %v892 = vlaneseq
        %v893 = vshrl.u32 %v892, 7
        %v894 = vsub.s32 4, %v893
        %v895 = vrot.slane %v678, %v894
        %v896 = vlaneseq
        %v897 = vshrl.u32 %v896, 7
        %v898 = vsub.s32 4, %v897
        %v899 = vrot.slane %v679, %v898
        %v900 = vmul.f32 %v874, %v895
        %v901 = vmul.f32 %v874, %v899
        %v902 = vmul.f32 %v878, %v895
        %v903 = vmul.f32 %v878, %v899
        %v904 = vmul.f32 %v882, %v895
        %v905 = vmul.f32 %v882, %v899
        %v906 = vmul.f32 %v886, %v895
        %v907 = vmul.f32 %v886, %v899
        %v908 = vmul.f32 %v890, %v895
        %v909 = vmul.f32 %v890, %v899
        %v910 = vadd.f32 %v862, %v900
        %v911 = vadd.f32 %v863, %v901
        %v912 = vadd.f32 %v864, %v902
        %v913 = vadd.f32 %v865, %v903
        %v914 = vadd.f32 %v866, %v904
        %v915 = vadd.f32 %v867, %v905
        %v916 = vadd.f32 %v868, %v906
        %v917 = vadd.f32 %v869, %v907
        %v918 = vadd.f32 %v870, %v908
        %v919 = vadd.f32 %v871, %v909
        %920 = vset.pattern.permute.xlu0 5
        %921 = vperm.xlu0 %920, %v680
        %v922 = vpop.permute.xlu0 %921
        %924 = vset.pattern.permute.xlu0 5
        %925 = vperm.xlu0 %924, %v681
        %v926 = vpop.permute.xlu0 %925
        %928 = vset.pattern.permute.xlu0 5
        %929 = vperm.xlu0 %928, %v682
        %v930 = vpop.permute.xlu0 %929
        %932 = vset.pattern.permute.xlu0 5
        %933 = vperm.xlu0 %932, %v683
        %v934 = vpop.permute.xlu0 %933
        %936 = vset.pattern.permute.xlu0 5
        %937 = vperm.xlu0 %936, %v684
        %v938 = vpop.permute.xlu0 %937
        %v940 = vlaneseq
        %v941 = vshrl.u32 %v940, 7
        %v942 = vsub.s32 5, %v941
        %v943 = vrot.slane %v678, %v942
        %v944 = vlaneseq
        %v945 = vshrl.u32 %v944, 7
        %v946 = vsub.s32 5, %v945
        %v947 = vrot.slane %v679, %v946
        %v948 = vmul.f32 %v922, %v943
        %v949 = vmul.f32 %v922, %v947
        %v950 = vmul.f32 %v926, %v943
        %v951 = vmul.f32 %v926, %v947
        %v952 = vmul.f32 %v930, %v943
        %v953 = vmul.f32 %v930, %v947
        %v954 = vmul.f32 %v934, %v943
        %v955 = vmul.f32 %v934, %v947
        %v956 = vmul.f32 %v938, %v943
        %v957 = vmul.f32 %v938, %v947
        %v958 = vadd.f32 %v910, %v948
        %v959 = vadd.f32 %v911, %v949
        %v960 = vadd.f32 %v912, %v950
        %v961 = vadd.f32 %v913, %v951
        %v962 = vadd.f32 %v914, %v952
        %v963 = vadd.f32 %v915, %v953
        %v964 = vadd.f32 %v916, %v954
        %v965 = vadd.f32 %v917, %v955
        %v966 = vadd.f32 %v918, %v956
        %v967 = vadd.f32 %v919, %v957
        %968 = vset.pattern.permute.xlu0 6
        %969 = vperm.xlu0 %968, %v680
        %v970 = vpop.permute.xlu0 %969
        %972 = vset.pattern.permute.xlu0 6
        %973 = vperm.xlu0 %972, %v681
        %v974 = vpop.permute.xlu0 %973
        %976 = vset.pattern.permute.xlu0 6
        %977 = vperm.xlu0 %976, %v682
        %v978 = vpop.permute.xlu0 %977
        %980 = vset.pattern.permute.xlu0 6
        %981 = vperm.xlu0 %980, %v683
        %v982 = vpop.permute.xlu0 %981
        %984 = vset.pattern.permute.xlu0 6
        %985 = vperm.xlu0 %984, %v684
        %v986 = vpop.permute.xlu0 %985
        %v988 = vlaneseq
        %v989 = vshrl.u32 %v988, 7
        %v990 = vsub.s32 6, %v989
        %v991 = vrot.slane %v678, %v990
        %v992 = vlaneseq
        %v993 = vshrl.u32 %v992, 7
        %v994 = vsub.s32 6, %v993
        %v995 = vrot.slane %v679, %v994
        %v996 = vmul.f32 %v970, %v991
        %v997 = vmul.f32 %v970, %v995
        %v998 = vmul.f32 %v974, %v991
        %v999 = vmul.f32 %v974, %v995
        %v1000 = vmul.f32 %v978, %v991
        %v1001 = vmul.f32 %v978, %v995
        %v1002 = vmul.f32 %v982, %v991
        %v1003 = vmul.f32 %v982, %v995
        %v1004 = vmul.f32 %v986, %v991
        %v1005 = vmul.f32 %v986, %v995
        %v1006 = vadd.f32 %v958, %v996
        %v1007 = vadd.f32 %v959, %v997
        %v1008 = vadd.f32 %v960, %v998
        %v1009 = vadd.f32 %v961, %v999
        %v1010 = vadd.f32 %v962, %v1000
        %v1011 = vadd.f32 %v963, %v1001
        %v1012 = vadd.f32 %v964, %v1002
        %v1013 = vadd.f32 %v965, %v1003
        %v1014 = vadd.f32 %v966, %v1004
        %v1015 = vadd.f32 %v967, %v1005
        %1016 = vset.pattern.permute.xlu0 7
        %1017 = vperm.xlu0 %1016, %v680
        %v1018 = vpop.permute.xlu0 %1017
        %1020 = vset.pattern.permute.xlu0 7
        %1021 = vperm.xlu0 %1020, %v681
        %v1022 = vpop.permute.xlu0 %1021
        %1024 = vset.pattern.permute.xlu0 7
        %1025 = vperm.xlu0 %1024, %v682
        %v1026 = vpop.permute.xlu0 %1025
        %1028 = vset.pattern.permute.xlu0 7
        %1029 = vperm.xlu0 %1028, %v683
        %v1030 = vpop.permute.xlu0 %1029
        %1032 = vset.pattern.permute.xlu0 7
        %1033 = vperm.xlu0 %1032, %v684
        %v1034 = vpop.permute.xlu0 %1033
        %v1036 = vlaneseq
        %v1037 = vshrl.u32 %v1036, 7
        %v1038 = vsub.s32 7, %v1037
        %v1039 = vrot.slane %v678, %v1038
        %v1040 = vlaneseq
        %v1041 = vshrl.u32 %v1040, 7
        %v1042 = vsub.s32 7, %v1041
        %v1043 = vrot.slane %v679, %v1042
        %v1044 = vmul.f32 %v1018, %v1039
        %v1045 = vmul.f32 %v1018, %v1043
        %v1046 = vmul.f32 %v1022, %v1039
        %v1047 = vmul.f32 %v1022, %v1043
        %v1048 = vmul.f32 %v1026, %v1039
        %v1049 = vmul.f32 %v1026, %v1043
        %v1050 = vmul.f32 %v1030, %v1039
        %v1051 = vmul.f32 %v1030, %v1043
        %v1052 = vmul.f32 %v1034, %v1039
        %v1053 = vmul.f32 %v1034, %v1043
        %v1054 = vadd.f32 %v1006, %v1044
        %v1055 = vadd.f32 %v1007, %v1045
        %v1056 = vadd.f32 %v1008, %v1046
        %v1057 = vadd.f32 %v1009, %v1047
        %v1058 = vadd.f32 %v1010, %v1048
        %v1059 = vadd.f32 %v1011, %v1049
        %v1060 = vadd.f32 %v1012, %v1050
        %v1061 = vadd.f32 %v1013, %v1051
        %v1062 = vadd.f32 %v1014, %v1052
        %v1063 = vadd.f32 %v1015, %v1053
        %v1064 = vld [vmem:[%s6] sm:$0xff]
        %1066 = vset.pattern.permute.xlu0 0
        %1067 = vperm.xlu0 %1066, %v1064
        %v1068 = vpop.permute.xlu0 %1067
        %v1070 = vlaneseq
        %v1071 = vshrl.u32 %v1070, 7
        %v1072 = vsub.s32 0, %v1071
        %v1073 = vrot.slane %v1062, %v1072
        %v1074 = vlaneseq
        %v1075 = vshrl.u32 %v1074, 7
        %v1076 = vsub.s32 0, %v1075
        %v1077 = vrot.slane %v1063, %v1076
        %v1078 = vmul.f32 %v1068, %v1073
        %v1079 = vmul.f32 %v1068, %v1077
        %v1080 = vld [vmem:[%s7] sm:$0xff]
        %1082 = vset.pattern.permute.xlu0 0
        %1083 = vperm.xlu0 %1082, %v1080
        %v1084 = vpop.permute.xlu0 %1083
        %v1086 = vadd.f32 %v1078, %v1084
        %v1087 = vadd.f32 %v1079, %v1084
        %v1088 = vmin.f32 %v1086, 20.0
        %v1089 = vmin.f32 %v1087, 20.0
        %vm1090 = vcmp.gt.f32.partialorder %v1086, 20.0
        %vm1091 = vcmp.gt.f32.partialorder %v1087, 20.0
        %v1092 = vmul.f32 %v1088, 1.442695
        %v1093 = vpow.pop %v1092
        %v1094 = vmul.f32 %v1089, 1.442695
        %v1095 = vpow.pop %v1094
        %v1096 = vadd.f32 %v1093, 1.0
        %v1097 = vadd.f32 %v1095, 1.0
        %v1098 = vlog2.pop %v1096
        %v1099 = vmul.f32 %v1098, 0.6931472
        %v1100 = vlog2.pop %v1097
        %v1101 = vmul.f32 %v1100, 0.6931472
        %v1102 = vsel %vm1090, %v1086, %v1099
        %v1103 = vsel %vm1091, %v1087, %v1101
        %v1104 = vmul.f32 %v1102, %v678
        %v1105 = vmul.f32 %v1103, %v679
        %v1106 = vld [vmem:[%s8] sm:$0xff]
        %v1107 = vld [vmem:[%s8 + $0x8] sm:$0xff]
        %v1108 = vld [vmem:[%s8 + $0x10] sm:$0xff]
        %v1109 = vld [vmem:[%s8 + $0x18] sm:$0xff]
        %v1110 = vld [vmem:[%s8 + $0x20] sm:$0xff]
        %v1111 = vld [vmem:[%s8 + $0x28] sm:$0xff]
        %v1112 = vld [vmem:[%s8 + $0x30] sm:$0xff]
        %v1113 = vld [vmem:[%s8 + $0x38] sm:$0xff]
        %v1114 = vld [vmem:[%s8 + $0x40] sm:$0xff]
        %v1115 = vld [vmem:[%s8 + $0x48] sm:$0xff]
        %v1116 = vld [vmem:[%s8 + $0x50] sm:$0xff]
        %v1117 = vld [vmem:[%s8 + $0x58] sm:$0xff]
        %v1118 = vld [vmem:[%s8 + $0x60] sm:$0xff]
        %v1119 = vld [vmem:[%s8 + $0x68] sm:$0xff]
        %v1120 = vld [vmem:[%s8 + $0x70] sm:$0xff]
        %v1121 = vld [vmem:[%s8 + $0x78] sm:$0xff]
        %v1122 = vlaneseq
        %v1123 = vshrl.u32 %v1122, 7
        %v1124 = vsub.s32 0, %v1123
        %v1125 = vrot.slane %v1102, %v1124
        %v1126 = vlaneseq
        %v1127 = vshrl.u32 %v1126, 7
        %v1128 = vsub.s32 0, %v1127
        %v1129 = vrot.slane %v1103, %v1128
        %1131 = vset.pattern.permute.xlu0 0
        %1132 = vperm.xlu0 %1131, %v1106
        %v1133 = vpop.permute.xlu0 %1132
        %1136 = vset.pattern.permute.xlu0 0
        %1137 = vperm.xlu0 %1136, %v1107
        %v1138 = vpop.permute.xlu0 %1137
        %v1140 = vmul.f32 %v1125, %v1133
        %v1141 = vmul.f32 %v1129, %v1133
        %v1142 = vmul.f32 %v1125, %v1138
        %v1143 = vmul.f32 %v1129, %v1138
        %v1144 = vmul.f32 %v1140, 1.442695
        %v1145 = vpow.pop %v1144
        %v1146 = vmul.f32 %v1141, 1.442695
        %v1147 = vpow.pop %v1146
        %v1148 = vmul.f32 %v1142, 1.442695
        %v1149 = vpow.pop %v1148
        %v1150 = vmul.f32 %v1143, 1.442695
        %v1151 = vpow.pop %v1150
        %v1152 = vlaneseq
        %v1153 = vshrl.u32 %v1152, 7
        %v1154 = vsub.s32 1, %v1153
        %v1155 = vrot.slane %v1102, %v1154
        %v1156 = vlaneseq
        %v1157 = vshrl.u32 %v1156, 7
        %v1158 = vsub.s32 1, %v1157
        %v1159 = vrot.slane %v1103, %v1158
        %1161 = vset.pattern.permute.xlu0 0
        %1162 = vperm.xlu0 %1161, %v1108
        %v1163 = vpop.permute.xlu0 %1162
        %1166 = vset.pattern.permute.xlu0 0
        %1167 = vperm.xlu0 %1166, %v1109
        %v1168 = vpop.permute.xlu0 %1167
        %v1170 = vmul.f32 %v1155, %v1163
        %v1171 = vmul.f32 %v1159, %v1163
        %v1172 = vmul.f32 %v1155, %v1168
        %v1173 = vmul.f32 %v1159, %v1168
        %v1174 = vmul.f32 %v1170, 1.442695
        %v1175 = vpow.pop %v1174
        %v1176 = vmul.f32 %v1171, 1.442695
        %v1177 = vpow.pop %v1176
        %v1178 = vmul.f32 %v1172, 1.442695
        %v1179 = vpow.pop %v1178
        %v1180 = vmul.f32 %v1173, 1.442695
        %v1181 = vpow.pop %v1180
        %v1182 = vlaneseq
        %v1183 = vshrl.u32 %v1182, 7
        %v1184 = vsub.s32 2, %v1183
        %v1185 = vrot.slane %v1102, %v1184
        %v1186 = vlaneseq
        %v1187 = vshrl.u32 %v1186, 7
        %v1188 = vsub.s32 2, %v1187
        %v1189 = vrot.slane %v1103, %v1188
        %1191 = vset.pattern.permute.xlu0 0
        %1192 = vperm.xlu0 %1191, %v1110
        %v1193 = vpop.permute.xlu0 %1192
        %1196 = vset.pattern.permute.xlu0 0
        %1197 = vperm.xlu0 %1196, %v1111
        %v1198 = vpop.permute.xlu0 %1197
        %v1200 = vmul.f32 %v1185, %v1193
        %v1201 = vmul.f32 %v1189, %v1193
        %v1202 = vmul.f32 %v1185, %v1198
        %v1203 = vmul.f32 %v1189, %v1198
        %v1204 = vmul.f32 %v1200, 1.442695
        %v1205 = vpow.pop %v1204
        %v1206 = vmul.f32 %v1201, 1.442695
        %v1207 = vpow.pop %v1206
        %v1208 = vmul.f32 %v1202, 1.442695
        %v1209 = vpow.pop %v1208
        %v1210 = vmul.f32 %v1203, 1.442695
        %v1211 = vpow.pop %v1210
        %v1212 = vlaneseq
        %v1213 = vshrl.u32 %v1212, 7
        %v1214 = vsub.s32 3, %v1213
        %v1215 = vrot.slane %v1102, %v1214
        %v1216 = vlaneseq
        %v1217 = vshrl.u32 %v1216, 7
        %v1218 = vsub.s32 3, %v1217
        %v1219 = vrot.slane %v1103, %v1218
        %1221 = vset.pattern.permute.xlu0 0
        %1222 = vperm.xlu0 %1221, %v1112
        %v1223 = vpop.permute.xlu0 %1222
        %1226 = vset.pattern.permute.xlu0 0
        %1227 = vperm.xlu0 %1226, %v1113
        %v1228 = vpop.permute.xlu0 %1227
        %v1230 = vmul.f32 %v1215, %v1223
        %v1231 = vmul.f32 %v1219, %v1223
        %v1232 = vmul.f32 %v1215, %v1228
        %v1233 = vmul.f32 %v1219, %v1228
        %v1234 = vmul.f32 %v1230, 1.442695
        %v1235 = vpow.pop %v1234
        %v1236 = vmul.f32 %v1231, 1.442695
        %v1237 = vpow.pop %v1236
        %v1238 = vmul.f32 %v1232, 1.442695
        %v1239 = vpow.pop %v1238
        %v1240 = vmul.f32 %v1233, 1.442695
        %v1241 = vpow.pop %v1240
        %v1242 = vlaneseq
        %v1243 = vshrl.u32 %v1242, 7
        %v1244 = vsub.s32 4, %v1243
        %v1245 = vrot.slane %v1102, %v1244
        %v1246 = vlaneseq
        %v1247 = vshrl.u32 %v1246, 7
        %v1248 = vsub.s32 4, %v1247
        %v1249 = vrot.slane %v1103, %v1248
        %1251 = vset.pattern.permute.xlu0 0
        %1252 = vperm.xlu0 %1251, %v1114
        %v1253 = vpop.permute.xlu0 %1252
        %1256 = vset.pattern.permute.xlu0 0
        %1257 = vperm.xlu0 %1256, %v1115
        %v1258 = vpop.permute.xlu0 %1257
        %v1260 = vmul.f32 %v1245, %v1253
        %v1261 = vmul.f32 %v1249, %v1253
        %v1262 = vmul.f32 %v1245, %v1258
        %v1263 = vmul.f32 %v1249, %v1258
        %v1264 = vmul.f32 %v1260, 1.442695
        %v1265 = vpow.pop %v1264
        %v1266 = vmul.f32 %v1261, 1.442695
        %v1267 = vpow.pop %v1266
        %v1268 = vmul.f32 %v1262, 1.442695
        %v1269 = vpow.pop %v1268
        %v1270 = vmul.f32 %v1263, 1.442695
        %v1271 = vpow.pop %v1270
        %v1272 = vlaneseq
        %v1273 = vshrl.u32 %v1272, 7
        %v1274 = vsub.s32 5, %v1273
        %v1275 = vrot.slane %v1102, %v1274
        %v1276 = vlaneseq
        %v1277 = vshrl.u32 %v1276, 7
        %v1278 = vsub.s32 5, %v1277
        %v1279 = vrot.slane %v1103, %v1278
        %1281 = vset.pattern.permute.xlu0 0
        %1282 = vperm.xlu0 %1281, %v1116
        %v1283 = vpop.permute.xlu0 %1282
        %1286 = vset.pattern.permute.xlu0 0
        %1287 = vperm.xlu0 %1286, %v1117
        %v1288 = vpop.permute.xlu0 %1287
        %v1290 = vmul.f32 %v1275, %v1283
        %v1291 = vmul.f32 %v1279, %v1283
        %v1292 = vmul.f32 %v1275, %v1288
        %v1293 = vmul.f32 %v1279, %v1288
        %v1294 = vmul.f32 %v1290, 1.442695
        %v1295 = vpow.pop %v1294
        %v1296 = vmul.f32 %v1291, 1.442695
        %v1297 = vpow.pop %v1296
        %v1298 = vmul.f32 %v1292, 1.442695
        %v1299 = vpow.pop %v1298
        %v1300 = vmul.f32 %v1293, 1.442695
        %v1301 = vpow.pop %v1300
        %v1302 = vlaneseq
        %v1303 = vshrl.u32 %v1302, 7
        %v1304 = vsub.s32 6, %v1303
        %v1305 = vrot.slane %v1102, %v1304
        %v1306 = vlaneseq
        %v1307 = vshrl.u32 %v1306, 7
        %v1308 = vsub.s32 6, %v1307
        %v1309 = vrot.slane %v1103, %v1308
        %1311 = vset.pattern.permute.xlu0 0
        %1312 = vperm.xlu0 %1311, %v1118
        %v1313 = vpop.permute.xlu0 %1312
        %1316 = vset.pattern.permute.xlu0 0
        %1317 = vperm.xlu0 %1316, %v1119
        %v1318 = vpop.permute.xlu0 %1317
        %v1320 = vmul.f32 %v1305, %v1313
        %v1321 = vmul.f32 %v1309, %v1313
        %v1322 = vmul.f32 %v1305, %v1318
        %v1323 = vmul.f32 %v1309, %v1318
        %v1324 = vmul.f32 %v1320, 1.442695
        %v1325 = vpow.pop %v1324
        %v1326 = vmul.f32 %v1321, 1.442695
        %v1327 = vpow.pop %v1326
        %v1328 = vmul.f32 %v1322, 1.442695
        %v1329 = vpow.pop %v1328
        %v1330 = vmul.f32 %v1323, 1.442695
        %v1331 = vpow.pop %v1330
        %v1332 = vlaneseq
        %v1333 = vshrl.u32 %v1332, 7
        %v1334 = vsub.s32 7, %v1333
        %v1335 = vrot.slane %v1102, %v1334
        %v1336 = vlaneseq
        %v1337 = vshrl.u32 %v1336, 7
        %v1338 = vsub.s32 7, %v1337
        %v1339 = vrot.slane %v1103, %v1338
        %1341 = vset.pattern.permute.xlu0 0
        %1342 = vperm.xlu0 %1341, %v1120
        %v1343 = vpop.permute.xlu0 %1342
        %1346 = vset.pattern.permute.xlu0 0
        %1347 = vperm.xlu0 %1346, %v1121
        %v1348 = vpop.permute.xlu0 %1347
        %v1350 = vmul.f32 %v1335, %v1343
        %v1351 = vmul.f32 %v1339, %v1343
        %v1352 = vmul.f32 %v1335, %v1348
        %v1353 = vmul.f32 %v1339, %v1348
        %v1354 = vmul.f32 %v1350, 1.442695
        %v1355 = vpow.pop %v1354
        %v1356 = vmul.f32 %v1351, 1.442695
        %v1357 = vpow.pop %v1356
        %v1358 = vmul.f32 %v1352, 1.442695
        %v1359 = vpow.pop %v1358
        %v1360 = vmul.f32 %v1353, 1.442695
        %v1361 = vpow.pop %v1360
        %v1362 = vlaneseq
        %v1363 = vshrl.u32 %v1362, 7
        %v1364 = vsub.s32 0, %v1363
        %v1365 = vrot.slane %v1104, %v1364
        %v1366 = vlaneseq
        %v1367 = vshrl.u32 %v1366, 7
        %v1368 = vsub.s32 0, %v1367
        %v1369 = vrot.slane %v1105, %v1368
        %v1370 = vmul.f32 %v1365, %v1054
        %v1371 = vmul.f32 %v1369, %v1055
        %v1372 = vmul.f32 %v1365, %v1056
        %v1373 = vmul.f32 %v1369, %v1057
        %v1374 = vlaneseq
        %v1375 = vshrl.u32 %v1374, 7
        %v1376 = vsub.s32 1, %v1375
        %v1377 = vrot.slane %v1104, %v1376
        %v1378 = vlaneseq
        %v1379 = vshrl.u32 %v1378, 7
        %v1380 = vsub.s32 1, %v1379
        %v1381 = vrot.slane %v1105, %v1380
        %v1382 = vmul.f32 %v1377, %v1054
        %v1383 = vmul.f32 %v1381, %v1055
        %v1384 = vmul.f32 %v1377, %v1056
        %v1385 = vmul.f32 %v1381, %v1057
        %v1386 = vlaneseq
        %v1387 = vshrl.u32 %v1386, 7
        %v1388 = vsub.s32 2, %v1387
        %v1389 = vrot.slane %v1104, %v1388
        %v1390 = vlaneseq
        %v1391 = vshrl.u32 %v1390, 7
        %v1392 = vsub.s32 2, %v1391
        %v1393 = vrot.slane %v1105, %v1392
        %v1394 = vmul.f32 %v1389, %v1054
        %v1395 = vmul.f32 %v1393, %v1055
        %v1396 = vmul.f32 %v1389, %v1056
        %v1397 = vmul.f32 %v1393, %v1057
        %v1398 = vlaneseq
        %v1399 = vshrl.u32 %v1398, 7
        %v1400 = vsub.s32 3, %v1399
        %v1401 = vrot.slane %v1104, %v1400
        %v1402 = vlaneseq
        %v1403 = vshrl.u32 %v1402, 7
        %v1404 = vsub.s32 3, %v1403
        %v1405 = vrot.slane %v1105, %v1404
        %v1406 = vmul.f32 %v1401, %v1054
        %v1407 = vmul.f32 %v1405, %v1055
        %v1408 = vmul.f32 %v1401, %v1056
        %v1409 = vmul.f32 %v1405, %v1057
        %v1410 = vlaneseq
        %v1411 = vshrl.u32 %v1410, 7
        %v1412 = vsub.s32 4, %v1411
        %v1413 = vrot.slane %v1104, %v1412
        %v1414 = vlaneseq
        %v1415 = vshrl.u32 %v1414, 7
        %v1416 = vsub.s32 4, %v1415
        %v1417 = vrot.slane %v1105, %v1416
        %v1418 = vmul.f32 %v1413, %v1054
        %v1419 = vmul.f32 %v1417, %v1055
        %v1420 = vmul.f32 %v1413, %v1056
        %v1421 = vmul.f32 %v1417, %v1057
        %v1422 = vlaneseq
        %v1423 = vshrl.u32 %v1422, 7
        %v1424 = vsub.s32 5, %v1423
        %v1425 = vrot.slane %v1104, %v1424
        %v1426 = vlaneseq
        %v1427 = vshrl.u32 %v1426, 7
        %v1428 = vsub.s32 5, %v1427
        %v1429 = vrot.slane %v1105, %v1428
        %v1430 = vmul.f32 %v1425, %v1054
        %v1431 = vmul.f32 %v1429, %v1055
        %v1432 = vmul.f32 %v1425, %v1056
        %v1433 = vmul.f32 %v1429, %v1057
        %v1434 = vlaneseq
        %v1435 = vshrl.u32 %v1434, 7
        %v1436 = vsub.s32 6, %v1435
        %v1437 = vrot.slane %v1104, %v1436
        %v1438 = vlaneseq
        %v1439 = vshrl.u32 %v1438, 7
        %v1440 = vsub.s32 6, %v1439
        %v1441 = vrot.slane %v1105, %v1440
        %v1442 = vmul.f32 %v1437, %v1054
        %v1443 = vmul.f32 %v1441, %v1055
        %v1444 = vmul.f32 %v1437, %v1056
        %v1445 = vmul.f32 %v1441, %v1057
        %v1446 = vlaneseq
        %v1447 = vshrl.u32 %v1446, 7
        %v1448 = vsub.s32 7, %v1447
        %v1449 = vrot.slane %v1104, %v1448
        %v1450 = vlaneseq
        %v1451 = vshrl.u32 %v1450, 7
        %v1452 = vsub.s32 7, %v1451
        %v1453 = vrot.slane %v1105, %v1452
        %v1454 = vmul.f32 %v1449, %v1054
        %v1455 = vmul.f32 %v1453, %v1055
        %v1456 = vmul.f32 %v1449, %v1056
        %v1457 = vmul.f32 %v1453, %v1057
        %1490 = vrot.lane.b32.xlu0 %v1370, 1
        %v1491 = vpop.permute.xlu0 %1490
        %1492 = vrot.lane.b32.xlu0 %v1371, 1
        %v1493 = vpop.permute.xlu0 %1492
        %1494 = vrot.lane.b32.xlu0 %v1372, 1
        %v1495 = vpop.permute.xlu0 %1494
        %1496 = vrot.lane.b32.xlu0 %v1373, 1
        %v1497 = vpop.permute.xlu0 %1496
        %1498 = vrot.lane.b32.xlu0 %v1382, 1
        %v1499 = vpop.permute.xlu0 %1498
        %1500 = vrot.lane.b32.xlu0 %v1383, 1
        %v1501 = vpop.permute.xlu0 %1500
        %1502 = vrot.lane.b32.xlu0 %v1384, 1
        %v1503 = vpop.permute.xlu0 %1502
        %1504 = vrot.lane.b32.xlu0 %v1385, 1
        %v1505 = vpop.permute.xlu0 %1504
        %1506 = vrot.lane.b32.xlu0 %v1394, 1
        %v1507 = vpop.permute.xlu0 %1506
        %1508 = vrot.lane.b32.xlu0 %v1395, 1
        %v1509 = vpop.permute.xlu0 %1508
        %1510 = vrot.lane.b32.xlu0 %v1396, 1
        %v1511 = vpop.permute.xlu0 %1510
        %1512 = vrot.lane.b32.xlu0 %v1397, 1
        %v1513 = vpop.permute.xlu0 %1512
        %1514 = vrot.lane.b32.xlu0 %v1406, 1
        %v1515 = vpop.permute.xlu0 %1514
        %1516 = vrot.lane.b32.xlu0 %v1407, 1
        %v1517 = vpop.permute.xlu0 %1516
        %1518 = vrot.lane.b32.xlu0 %v1408, 1
        %v1519 = vpop.permute.xlu0 %1518
        %1520 = vrot.lane.b32.xlu0 %v1409, 1
        %v1521 = vpop.permute.xlu0 %1520
        %1522 = vrot.lane.b32.xlu0 %v1418, 1
        %v1523 = vpop.permute.xlu0 %1522
        %1524 = vrot.lane.b32.xlu0 %v1419, 1
        %v1525 = vpop.permute.xlu0 %1524
        %1526 = vrot.lane.b32.xlu0 %v1420, 1
        %v1527 = vpop.permute.xlu0 %1526
        %1528 = vrot.lane.b32.xlu0 %v1421, 1
        %v1529 = vpop.permute.xlu0 %1528
        %1530 = vrot.lane.b32.xlu0 %v1430, 1
        %v1531 = vpop.permute.xlu0 %1530
        %1532 = vrot.lane.b32.xlu0 %v1431, 1
        %v1533 = vpop.permute.xlu0 %1532
        %1534 = vrot.lane.b32.xlu0 %v1432, 1
        %v1535 = vpop.permute.xlu0 %1534
        %1536 = vrot.lane.b32.xlu0 %v1433, 1
        %v1537 = vpop.permute.xlu0 %1536
        %1538 = vrot.lane.b32.xlu0 %v1442, 1
        %v1539 = vpop.permute.xlu0 %1538
        %1540 = vrot.lane.b32.xlu0 %v1443, 1
        %v1541 = vpop.permute.xlu0 %1540
        %1542 = vrot.lane.b32.xlu0 %v1444, 1
        %v1543 = vpop.permute.xlu0 %1542
        %1544 = vrot.lane.b32.xlu0 %v1445, 1
        %v1545 = vpop.permute.xlu0 %1544
        %1546 = vrot.lane.b32.xlu0 %v1454, 1
        %v1547 = vpop.permute.xlu0 %1546
        %1548 = vrot.lane.b32.xlu0 %v1455, 1
        %v1549 = vpop.permute.xlu0 %1548
        %1550 = vrot.lane.b32.xlu0 %v1456, 1
        %v1551 = vpop.permute.xlu0 %1550
        %1552 = vrot.lane.b32.xlu0 %v1457, 1
        %v1553 = vpop.permute.xlu0 %1552
        %v1554 = vsel %vm645, %v1491, %v1493
        %v1555 = vsel %vm645, %v1495, %v1497
        %v1556 = vsel %vm645, %v1499, %v1501
        %v1557 = vsel %vm645, %v1503, %v1505
        %v1558 = vsel %vm645, %v1507, %v1509
        %v1559 = vsel %vm645, %v1511, %v1513
        %v1560 = vsel %vm645, %v1515, %v1517
        %v1561 = vsel %vm645, %v1519, %v1521
        %v1562 = vsel %vm645, %v1523, %v1525
        %v1563 = vsel %vm645, %v1527, %v1529
        %v1564 = vsel %vm645, %v1531, %v1533
        %v1565 = vsel %vm645, %v1535, %v1537
        %v1566 = vsel %vm645, %v1539, %v1541
        %v1567 = vsel %vm645, %v1543, %v1545
        %v1568 = vsel %vm645, %v1547, %v1549
        %v1569 = vsel %vm645, %v1551, %v1553
        %v1602 = vsel %vm645, 0.0, %v1491
        %v1603 = vsel %vm645, 0.0, %v1495
        %v1604 = vsel %vm645, 0.0, %v1499
        %v1605 = vsel %vm645, 0.0, %v1503
        %v1606 = vsel %vm645, 0.0, %v1507
        %v1607 = vsel %vm645, 0.0, %v1511
        %v1608 = vsel %vm645, 0.0, %v1515
        %v1609 = vsel %vm645, 0.0, %v1519
        %v1610 = vsel %vm645, 0.0, %v1523
        %v1611 = vsel %vm645, 0.0, %v1527
        %v1612 = vsel %vm645, 0.0, %v1531
        %v1613 = vsel %vm645, 0.0, %v1535
        %v1614 = vsel %vm645, 0.0, %v1539
        %v1615 = vsel %vm645, 0.0, %v1543
        %v1616 = vsel %vm645, 0.0, %v1547
        %v1617 = vsel %vm645, 0.0, %v1551
        %v1618 = vmul.f32 %v1145, %v1602
        %v1619 = vmul.f32 %v1147, %v1554
        %v1620 = vmul.f32 %v1149, %v1603
        %v1621 = vmul.f32 %v1151, %v1555
        %v1622 = vmul.f32 %v1175, %v1604
        %v1623 = vmul.f32 %v1177, %v1556
        %v1624 = vmul.f32 %v1179, %v1605
        %v1625 = vmul.f32 %v1181, %v1557
        %v1626 = vmul.f32 %v1205, %v1606
        %v1627 = vmul.f32 %v1207, %v1558
        %v1628 = vmul.f32 %v1209, %v1607
        %v1629 = vmul.f32 %v1211, %v1559
        %v1630 = vmul.f32 %v1235, %v1608
        %v1631 = vmul.f32 %v1237, %v1560
        %v1632 = vmul.f32 %v1239, %v1609
        %v1633 = vmul.f32 %v1241, %v1561
        %v1634 = vmul.f32 %v1265, %v1610
        %v1635 = vmul.f32 %v1267, %v1562
        %v1636 = vmul.f32 %v1269, %v1611
        %v1637 = vmul.f32 %v1271, %v1563
        %v1638 = vmul.f32 %v1295, %v1612
        %v1639 = vmul.f32 %v1297, %v1564
        %v1640 = vmul.f32 %v1299, %v1613
        %v1641 = vmul.f32 %v1301, %v1565
        %v1642 = vmul.f32 %v1325, %v1614
        %v1643 = vmul.f32 %v1327, %v1566
        %v1644 = vmul.f32 %v1329, %v1615
        %v1645 = vmul.f32 %v1331, %v1567
        %v1646 = vmul.f32 %v1355, %v1616
        %v1647 = vmul.f32 %v1357, %v1568
        %v1648 = vmul.f32 %v1359, %v1617
        %v1649 = vmul.f32 %v1361, %v1569
        %v1650 = vadd.f32 %v1618, %v1370
        %v1651 = vadd.f32 %v1619, %v1371
        %v1652 = vadd.f32 %v1620, %v1372
        %v1653 = vadd.f32 %v1621, %v1373
        %v1654 = vadd.f32 %v1622, %v1382
        %v1655 = vadd.f32 %v1623, %v1383
        %v1656 = vadd.f32 %v1624, %v1384
        %v1657 = vadd.f32 %v1625, %v1385
        %v1658 = vadd.f32 %v1626, %v1394
        %v1659 = vadd.f32 %v1627, %v1395
        %v1660 = vadd.f32 %v1628, %v1396
        %v1661 = vadd.f32 %v1629, %v1397
        %v1662 = vadd.f32 %v1630, %v1406
        %v1663 = vadd.f32 %v1631, %v1407
        %v1664 = vadd.f32 %v1632, %v1408
        %v1665 = vadd.f32 %v1633, %v1409
        %v1666 = vadd.f32 %v1634, %v1418
        %v1667 = vadd.f32 %v1635, %v1419
        %v1668 = vadd.f32 %v1636, %v1420
        %v1669 = vadd.f32 %v1637, %v1421
        %v1670 = vadd.f32 %v1638, %v1430
        %v1671 = vadd.f32 %v1639, %v1431
        %v1672 = vadd.f32 %v1640, %v1432
        %v1673 = vadd.f32 %v1641, %v1433
        %v1674 = vadd.f32 %v1642, %v1442
        %v1675 = vadd.f32 %v1643, %v1443
        %v1676 = vadd.f32 %v1644, %v1444
        %v1677 = vadd.f32 %v1645, %v1445
        %v1678 = vadd.f32 %v1646, %v1454
        %v1679 = vadd.f32 %v1647, %v1455
        %v1680 = vadd.f32 %v1648, %v1456
        %v1681 = vadd.f32 %v1649, %v1457
        %1714 = vrot.lane.b32.xlu0 %v1145, 1
        %v1715 = vpop.permute.xlu0 %1714
        %1716 = vrot.lane.b32.xlu0 %v1147, 1
        %v1717 = vpop.permute.xlu0 %1716
        %1718 = vrot.lane.b32.xlu0 %v1149, 1
        %v1719 = vpop.permute.xlu0 %1718
        %1720 = vrot.lane.b32.xlu0 %v1151, 1
        %v1721 = vpop.permute.xlu0 %1720
        %1722 = vrot.lane.b32.xlu0 %v1175, 1
        %v1723 = vpop.permute.xlu0 %1722
        %1724 = vrot.lane.b32.xlu0 %v1177, 1
        %v1725 = vpop.permute.xlu0 %1724
        %1726 = vrot.lane.b32.xlu0 %v1179, 1
        %v1727 = vpop.permute.xlu0 %1726
        %1728 = vrot.lane.b32.xlu0 %v1181, 1
        %v1729 = vpop.permute.xlu0 %1728
        %1730 = vrot.lane.b32.xlu0 %v1205, 1
        %v1731 = vpop.permute.xlu0 %1730
        %1732 = vrot.lane.b32.xlu0 %v1207, 1
        %v1733 = vpop.permute.xlu0 %1732
        %1734 = vrot.lane.b32.xlu0 %v1209, 1
        %v1735 = vpop.permute.xlu0 %1734
        %1736 = vrot.lane.b32.xlu0 %v1211, 1
        %v1737 = vpop.permute.xlu0 %1736
        %1738 = vrot.lane.b32.xlu0 %v1235, 1
        %v1739 = vpop.permute.xlu0 %1738
        %1740 = vrot.lane.b32.xlu0 %v1237, 1
        %v1741 = vpop.permute.xlu0 %1740
        %1742 = vrot.lane.b32.xlu0 %v1239, 1
        %v1743 = vpop.permute.xlu0 %1742
        %1744 = vrot.lane.b32.xlu0 %v1241, 1
        %v1745 = vpop.permute.xlu0 %1744
        %1746 = vrot.lane.b32.xlu0 %v1265, 1
        %v1747 = vpop.permute.xlu0 %1746
        %1748 = vrot.lane.b32.xlu0 %v1267, 1
        %v1749 = vpop.permute.xlu0 %1748
        %1750 = vrot.lane.b32.xlu0 %v1269, 1
        %v1751 = vpop.permute.xlu0 %1750
        %1752 = vrot.lane.b32.xlu0 %v1271, 1
        %v1753 = vpop.permute.xlu0 %1752
        %1754 = vrot.lane.b32.xlu0 %v1295, 1
        %v1755 = vpop.permute.xlu0 %1754
        %1756 = vrot.lane.b32.xlu0 %v1297, 1
        %v1757 = vpop.permute.xlu0 %1756
        %1758 = vrot.lane.b32.xlu0 %v1299, 1
        %v1759 = vpop.permute.xlu0 %1758
        %1760 = vrot.lane.b32.xlu0 %v1301, 1
        %v1761 = vpop.permute.xlu0 %1760
        %1762 = vrot.lane.b32.xlu0 %v1325, 1
        %v1763 = vpop.permute.xlu0 %1762
        %1764 = vrot.lane.b32.xlu0 %v1327, 1
        %v1765 = vpop.permute.xlu0 %1764
        %1766 = vrot.lane.b32.xlu0 %v1329, 1
        %v1767 = vpop.permute.xlu0 %1766
        %1768 = vrot.lane.b32.xlu0 %v1331, 1
        %v1769 = vpop.permute.xlu0 %1768
        %1770 = vrot.lane.b32.xlu0 %v1355, 1
        %v1771 = vpop.permute.xlu0 %1770
        %1772 = vrot.lane.b32.xlu0 %v1357, 1
        %v1773 = vpop.permute.xlu0 %1772
        %1774 = vrot.lane.b32.xlu0 %v1359, 1
        %v1775 = vpop.permute.xlu0 %1774
        %1776 = vrot.lane.b32.xlu0 %v1361, 1
        %v1777 = vpop.permute.xlu0 %1776
        %v1778 = vsel %vm645, %v1715, %v1717
        %v1779 = vsel %vm645, %v1719, %v1721
        %v1780 = vsel %vm645, %v1723, %v1725
        %v1781 = vsel %vm645, %v1727, %v1729
        %v1782 = vsel %vm645, %v1731, %v1733
        %v1783 = vsel %vm645, %v1735, %v1737
        %v1784 = vsel %vm645, %v1739, %v1741
        %v1785 = vsel %vm645, %v1743, %v1745
        %v1786 = vsel %vm645, %v1747, %v1749
        %v1787 = vsel %vm645, %v1751, %v1753
        %v1788 = vsel %vm645, %v1755, %v1757
        %v1789 = vsel %vm645, %v1759, %v1761
        %v1790 = vsel %vm645, %v1763, %v1765
        %v1791 = vsel %vm645, %v1767, %v1769
        %v1792 = vsel %vm645, %v1771, %v1773
        %v1793 = vsel %vm645, %v1775, %v1777
        %v1826 = vsel %vm645, 1.0, %v1715
        %v1827 = vsel %vm645, 1.0, %v1719
        %v1828 = vsel %vm645, 1.0, %v1723
        %v1829 = vsel %vm645, 1.0, %v1727
        %v1830 = vsel %vm645, 1.0, %v1731
        %v1831 = vsel %vm645, 1.0, %v1735
        %v1832 = vsel %vm645, 1.0, %v1739
        %v1833 = vsel %vm645, 1.0, %v1743
        %v1834 = vsel %vm645, 1.0, %v1747
        %v1835 = vsel %vm645, 1.0, %v1751
        %v1836 = vsel %vm645, 1.0, %v1755
        %v1837 = vsel %vm645, 1.0, %v1759
        %v1838 = vsel %vm645, 1.0, %v1763
        %v1839 = vsel %vm645, 1.0, %v1767
        %v1840 = vsel %vm645, 1.0, %v1771
        %v1841 = vsel %vm645, 1.0, %v1775
        %v1842 = vmul.f32 %v1145, %v1826
        %v1843 = vmul.f32 %v1147, %v1778
        %v1844 = vmul.f32 %v1149, %v1827
        %v1845 = vmul.f32 %v1151, %v1779
        %v1846 = vmul.f32 %v1175, %v1828
        %v1847 = vmul.f32 %v1177, %v1780
        %v1848 = vmul.f32 %v1179, %v1829
        %v1849 = vmul.f32 %v1181, %v1781
        %v1850 = vmul.f32 %v1205, %v1830
        %v1851 = vmul.f32 %v1207, %v1782
        %v1852 = vmul.f32 %v1209, %v1831
        %v1853 = vmul.f32 %v1211, %v1783
        %v1854 = vmul.f32 %v1235, %v1832
        %v1855 = vmul.f32 %v1237, %v1784
        %v1856 = vmul.f32 %v1239, %v1833
        %v1857 = vmul.f32 %v1241, %v1785
        %v1858 = vmul.f32 %v1265, %v1834
        %v1859 = vmul.f32 %v1267, %v1786
        %v1860 = vmul.f32 %v1269, %v1835
        %v1861 = vmul.f32 %v1271, %v1787
        %v1862 = vmul.f32 %v1295, %v1836
        %v1863 = vmul.f32 %v1297, %v1788
        %v1864 = vmul.f32 %v1299, %v1837
        %v1865 = vmul.f32 %v1301, %v1789
        %v1866 = vmul.f32 %v1325, %v1838
        %v1867 = vmul.f32 %v1327, %v1790
        %v1868 = vmul.f32 %v1329, %v1839
        %v1869 = vmul.f32 %v1331, %v1791
        %v1870 = vmul.f32 %v1355, %v1840
        %v1871 = vmul.f32 %v1357, %v1792
        %v1872 = vmul.f32 %v1359, %v1841
        %v1873 = vmul.f32 %v1361, %v1793
        %1906 = vrot.lane.b32.xlu0 %v1650, 2
        %v1907 = vpop.permute.xlu0 %1906
        %1908 = vrot.lane.b32.xlu0 %v1651, 2
        %v1909 = vpop.permute.xlu0 %1908
        %1910 = vrot.lane.b32.xlu0 %v1652, 2
        %v1911 = vpop.permute.xlu0 %1910
        %1912 = vrot.lane.b32.xlu0 %v1653, 2
        %v1913 = vpop.permute.xlu0 %1912
        %1914 = vrot.lane.b32.xlu0 %v1654, 2
        %v1915 = vpop.permute.xlu0 %1914
        %1916 = vrot.lane.b32.xlu0 %v1655, 2
        %v1917 = vpop.permute.xlu0 %1916
        %1918 = vrot.lane.b32.xlu0 %v1656, 2
        %v1919 = vpop.permute.xlu0 %1918
        %1920 = vrot.lane.b32.xlu0 %v1657, 2
        %v1921 = vpop.permute.xlu0 %1920
        %1922 = vrot.lane.b32.xlu0 %v1658, 2
        %v1923 = vpop.permute.xlu0 %1922
        %1924 = vrot.lane.b32.xlu0 %v1659, 2
        %v1925 = vpop.permute.xlu0 %1924
        %1926 = vrot.lane.b32.xlu0 %v1660, 2
        %v1927 = vpop.permute.xlu0 %1926
        %1928 = vrot.lane.b32.xlu0 %v1661, 2
        %v1929 = vpop.permute.xlu0 %1928
        %1930 = vrot.lane.b32.xlu0 %v1662, 2
        %v1931 = vpop.permute.xlu0 %1930
        %1932 = vrot.lane.b32.xlu0 %v1663, 2
        %v1933 = vpop.permute.xlu0 %1932
        %1934 = vrot.lane.b32.xlu0 %v1664, 2
        %v1935 = vpop.permute.xlu0 %1934
        %1936 = vrot.lane.b32.xlu0 %v1665, 2
        %v1937 = vpop.permute.xlu0 %1936
        %1938 = vrot.lane.b32.xlu0 %v1666, 2
        %v1939 = vpop.permute.xlu0 %1938
        %1940 = vrot.lane.b32.xlu0 %v1667, 2
        %v1941 = vpop.permute.xlu0 %1940
        %1942 = vrot.lane.b32.xlu0 %v1668, 2
        %v1943 = vpop.permute.xlu0 %1942
        %1944 = vrot.lane.b32.xlu0 %v1669, 2
        %v1945 = vpop.permute.xlu0 %1944
        %1946 = vrot.lane.b32.xlu0 %v1670, 2
        %v1947 = vpop.permute.xlu0 %1946
        %1948 = vrot.lane.b32.xlu0 %v1671, 2
        %v1949 = vpop.permute.xlu0 %1948
        %1950 = vrot.lane.b32.xlu0 %v1672, 2
        %v1951 = vpop.permute.xlu0 %1950
        %1952 = vrot.lane.b32.xlu0 %v1673, 2
        %v1953 = vpop.permute.xlu0 %1952
        %1954 = vrot.lane.b32.xlu0 %v1674, 2
        %v1955 = vpop.permute.xlu0 %1954
        %1956 = vrot.lane.b32.xlu0 %v1675, 2
        %v1957 = vpop.permute.xlu0 %1956
        %1958 = vrot.lane.b32.xlu0 %v1676, 2
        %v1959 = vpop.permute.xlu0 %1958
        %1960 = vrot.lane.b32.xlu0 %v1677, 2
        %v1961 = vpop.permute.xlu0 %1960
        %1962 = vrot.lane.b32.xlu0 %v1678, 2
        %v1963 = vpop.permute.xlu0 %1962
        %1964 = vrot.lane.b32.xlu0 %v1679, 2
        %v1965 = vpop.permute.xlu0 %1964
        %1966 = vrot.lane.b32.xlu0 %v1680, 2
        %v1967 = vpop.permute.xlu0 %1966
        %1968 = vrot.lane.b32.xlu0 %v1681, 2
        %v1969 = vpop.permute.xlu0 %1968
        %v1970 = vsel %vm628, %v1907, %v1909
        %v1971 = vsel %vm628, %v1911, %v1913
        %v1972 = vsel %vm628, %v1915, %v1917
        %v1973 = vsel %vm628, %v1919, %v1921
        %v1974 = vsel %vm628, %v1923, %v1925
        %v1975 = vsel %vm628, %v1927, %v1929
        %v1976 = vsel %vm628, %v1931, %v1933
        %v1977 = vsel %vm628, %v1935, %v1937
        %v1978 = vsel %vm628, %v1939, %v1941
        %v1979 = vsel %vm628, %v1943, %v1945
        %v1980 = vsel %vm628, %v1947, %v1949
        %v1981 = vsel %vm628, %v1951, %v1953
        %v1982 = vsel %vm628, %v1955, %v1957
        %v1983 = vsel %vm628, %v1959, %v1961
        %v1984 = vsel %vm628, %v1963, %v1965
        %v1985 = vsel %vm628, %v1967, %v1969
        %v2018 = vsel %vm628, 0.0, %v1907
        %v2019 = vsel %vm628, 0.0, %v1911
        %v2020 = vsel %vm628, 0.0, %v1915
        %v2021 = vsel %vm628, 0.0, %v1919
        %v2022 = vsel %vm628, 0.0, %v1923
        %v2023 = vsel %vm628, 0.0, %v1927
        %v2024 = vsel %vm628, 0.0, %v1931
        %v2025 = vsel %vm628, 0.0, %v1935
        %v2026 = vsel %vm628, 0.0, %v1939
        %v2027 = vsel %vm628, 0.0, %v1943
        %v2028 = vsel %vm628, 0.0, %v1947
        %v2029 = vsel %vm628, 0.0, %v1951
        %v2030 = vsel %vm628, 0.0, %v1955
        %v2031 = vsel %vm628, 0.0, %v1959
        %v2032 = vsel %vm628, 0.0, %v1963
        %v2033 = vsel %vm628, 0.0, %v1967
        %v2034 = vmul.f32 %v1842, %v2018
        %v2035 = vmul.f32 %v1843, %v1970
        %v2036 = vmul.f32 %v1844, %v2019
        %v2037 = vmul.f32 %v1845, %v1971
        %v2038 = vmul.f32 %v1846, %v2020
        %v2039 = vmul.f32 %v1847, %v1972
        %v2040 = vmul.f32 %v1848, %v2021
        %v2041 = vmul.f32 %v1849, %v1973
        %v2042 = vmul.f32 %v1850, %v2022
        %v2043 = vmul.f32 %v1851, %v1974
        %v2044 = vmul.f32 %v1852, %v2023
        %v2045 = vmul.f32 %v1853, %v1975
        %v2046 = vmul.f32 %v1854, %v2024
        %v2047 = vmul.f32 %v1855, %v1976
        %v2048 = vmul.f32 %v1856, %v2025
        %v2049 = vmul.f32 %v1857, %v1977
        %v2050 = vmul.f32 %v1858, %v2026
        %v2051 = vmul.f32 %v1859, %v1978
        %v2052 = vmul.f32 %v1860, %v2027
        %v2053 = vmul.f32 %v1861, %v1979
        %v2054 = vmul.f32 %v1862, %v2028
        %v2055 = vmul.f32 %v1863, %v1980
        %v2056 = vmul.f32 %v1864, %v2029
        %v2057 = vmul.f32 %v1865, %v1981
        %v2058 = vmul.f32 %v1866, %v2030
        %v2059 = vmul.f32 %v1867, %v1982
        %v2060 = vmul.f32 %v1868, %v2031
        %v2061 = vmul.f32 %v1869, %v1983
        %v2062 = vmul.f32 %v1870, %v2032
        %v2063 = vmul.f32 %v1871, %v1984
        %v2064 = vmul.f32 %v1872, %v2033
        %v2065 = vmul.f32 %v1873, %v1985
        %v2066 = vadd.f32 %v2034, %v1650
        %v2067 = vadd.f32 %v2035, %v1651
        %v2068 = vadd.f32 %v2036, %v1652
        %v2069 = vadd.f32 %v2037, %v1653
        %v2070 = vadd.f32 %v2038, %v1654
        %v2071 = vadd.f32 %v2039, %v1655
        %v2072 = vadd.f32 %v2040, %v1656
        %v2073 = vadd.f32 %v2041, %v1657
        %v2074 = vadd.f32 %v2042, %v1658
        %v2075 = vadd.f32 %v2043, %v1659
        %v2076 = vadd.f32 %v2044, %v1660
        %v2077 = vadd.f32 %v2045, %v1661
        %v2078 = vadd.f32 %v2046, %v1662
        %v2079 = vadd.f32 %v2047, %v1663
        %v2080 = vadd.f32 %v2048, %v1664
        %v2081 = vadd.f32 %v2049, %v1665
        %v2082 = vadd.f32 %v2050, %v1666
        %v2083 = vadd.f32 %v2051, %v1667
        %v2084 = vadd.f32 %v2052, %v1668
        %v2085 = vadd.f32 %v2053, %v1669
        %v2086 = vadd.f32 %v2054, %v1670
        %v2087 = vadd.f32 %v2055, %v1671
        %v2088 = vadd.f32 %v2056, %v1672
        %v2089 = vadd.f32 %v2057, %v1673
        %v2090 = vadd.f32 %v2058, %v1674
        %v2091 = vadd.f32 %v2059, %v1675
        %v2092 = vadd.f32 %v2060, %v1676
        %v2093 = vadd.f32 %v2061, %v1677
        %v2094 = vadd.f32 %v2062, %v1678
        %v2095 = vadd.f32 %v2063, %v1679
        %v2096 = vadd.f32 %v2064, %v1680
        %v2097 = vadd.f32 %v2065, %v1681
        %2130 = vrot.lane.b32.xlu0 %v1842, 2
        %v2131 = vpop.permute.xlu0 %2130
        %2132 = vrot.lane.b32.xlu0 %v1843, 2
        %v2133 = vpop.permute.xlu0 %2132
        %2134 = vrot.lane.b32.xlu0 %v1844, 2
        %v2135 = vpop.permute.xlu0 %2134
        %2136 = vrot.lane.b32.xlu0 %v1845, 2
        %v2137 = vpop.permute.xlu0 %2136
        %2138 = vrot.lane.b32.xlu0 %v1846, 2
        %v2139 = vpop.permute.xlu0 %2138
        %2140 = vrot.lane.b32.xlu0 %v1847, 2
        %v2141 = vpop.permute.xlu0 %2140
        %2142 = vrot.lane.b32.xlu0 %v1848, 2
        %v2143 = vpop.permute.xlu0 %2142
        %2144 = vrot.lane.b32.xlu0 %v1849, 2
        %v2145 = vpop.permute.xlu0 %2144
        %2146 = vrot.lane.b32.xlu0 %v1850, 2
        %v2147 = vpop.permute.xlu0 %2146
        %2148 = vrot.lane.b32.xlu0 %v1851, 2
        %v2149 = vpop.permute.xlu0 %2148
        %2150 = vrot.lane.b32.xlu0 %v1852, 2
        %v2151 = vpop.permute.xlu0 %2150
        %2152 = vrot.lane.b32.xlu0 %v1853, 2
        %v2153 = vpop.permute.xlu0 %2152
        %2154 = vrot.lane.b32.xlu0 %v1854, 2
        %v2155 = vpop.permute.xlu0 %2154
        %2156 = vrot.lane.b32.xlu0 %v1855, 2
        %v2157 = vpop.permute.xlu0 %2156
        %2158 = vrot.lane.b32.xlu0 %v1856, 2
        %v2159 = vpop.permute.xlu0 %2158
        %2160 = vrot.lane.b32.xlu0 %v1857, 2
        %v2161 = vpop.permute.xlu0 %2160
        %2162 = vrot.lane.b32.xlu0 %v1858, 2
        %v2163 = vpop.permute.xlu0 %2162
        %2164 = vrot.lane.b32.xlu0 %v1859, 2
        %v2165 = vpop.permute.xlu0 %2164
        %2166 = vrot.lane.b32.xlu0 %v1860, 2
        %v2167 = vpop.permute.xlu0 %2166
        %2168 = vrot.lane.b32.xlu0 %v1861, 2
        %v2169 = vpop.permute.xlu0 %2168
        %2170 = vrot.lane.b32.xlu0 %v1862, 2
        %v2171 = vpop.permute.xlu0 %2170
        %2172 = vrot.lane.b32.xlu0 %v1863, 2
        %v2173 = vpop.permute.xlu0 %2172
        %2174 = vrot.lane.b32.xlu0 %v1864, 2
        %v2175 = vpop.permute.xlu0 %2174
        %2176 = vrot.lane.b32.xlu0 %v1865, 2
        %v2177 = vpop.permute.xlu0 %2176
        %2178 = vrot.lane.b32.xlu0 %v1866, 2
        %v2179 = vpop.permute.xlu0 %2178
        %2180 = vrot.lane.b32.xlu0 %v1867, 2
        %v2181 = vpop.permute.xlu0 %2180
        %2182 = vrot.lane.b32.xlu0 %v1868, 2
        %v2183 = vpop.permute.xlu0 %2182
        %2184 = vrot.lane.b32.xlu0 %v1869, 2
        %v2185 = vpop.permute.xlu0 %2184
        %2186 = vrot.lane.b32.xlu0 %v1870, 2
        %v2187 = vpop.permute.xlu0 %2186
        %2188 = vrot.lane.b32.xlu0 %v1871, 2
        %v2189 = vpop.permute.xlu0 %2188
        %2190 = vrot.lane.b32.xlu0 %v1872, 2
        %v2191 = vpop.permute.xlu0 %2190
        %2192 = vrot.lane.b32.xlu0 %v1873, 2
        %v2193 = vpop.permute.xlu0 %2192
        %v2194 = vsel %vm628, %v2131, %v2133
        %v2195 = vsel %vm628, %v2135, %v2137
        %v2196 = vsel %vm628, %v2139, %v2141
        %v2197 = vsel %vm628, %v2143, %v2145
        %v2198 = vsel %vm628, %v2147, %v2149
        %v2199 = vsel %vm628, %v2151, %v2153
        %v2200 = vsel %vm628, %v2155, %v2157
        %v2201 = vsel %vm628, %v2159, %v2161
        %v2202 = vsel %vm628, %v2163, %v2165
        %v2203 = vsel %vm628, %v2167, %v2169
        %v2204 = vsel %vm628, %v2171, %v2173
        %v2205 = vsel %vm628, %v2175, %v2177
        %v2206 = vsel %vm628, %v2179, %v2181
        %v2207 = vsel %vm628, %v2183, %v2185
        %v2208 = vsel %vm628, %v2187, %v2189
        %v2209 = vsel %vm628, %v2191, %v2193
        %v2242 = vsel %vm628, 1.0, %v2131
        %v2243 = vsel %vm628, 1.0, %v2135
        %v2244 = vsel %vm628, 1.0, %v2139
        %v2245 = vsel %vm628, 1.0, %v2143
        %v2246 = vsel %vm628, 1.0, %v2147
        %v2247 = vsel %vm628, 1.0, %v2151
        %v2248 = vsel %vm628, 1.0, %v2155
        %v2249 = vsel %vm628, 1.0, %v2159
        %v2250 = vsel %vm628, 1.0, %v2163
        %v2251 = vsel %vm628, 1.0, %v2167
        %v2252 = vsel %vm628, 1.0, %v2171
        %v2253 = vsel %vm628, 1.0, %v2175
        %v2254 = vsel %vm628, 1.0, %v2179
        %v2255 = vsel %vm628, 1.0, %v2183
        %v2256 = vsel %vm628, 1.0, %v2187
        %v2257 = vsel %vm628, 1.0, %v2191
        %v2258 = vmul.f32 %v1842, %v2242
        %v2259 = vmul.f32 %v1843, %v2194
        %v2260 = vmul.f32 %v1844, %v2243
        %v2261 = vmul.f32 %v1845, %v2195
        %v2262 = vmul.f32 %v1846, %v2244
        %v2263 = vmul.f32 %v1847, %v2196
        %v2264 = vmul.f32 %v1848, %v2245
        %v2265 = vmul.f32 %v1849, %v2197
        %v2266 = vmul.f32 %v1850, %v2246
        %v2267 = vmul.f32 %v1851, %v2198
        %v2268 = vmul.f32 %v1852, %v2247
        %v2269 = vmul.f32 %v1853, %v2199
        %v2270 = vmul.f32 %v1854, %v2248
        %v2271 = vmul.f32 %v1855, %v2200
        %v2272 = vmul.f32 %v1856, %v2249
        %v2273 = vmul.f32 %v1857, %v2201
        %v2274 = vmul.f32 %v1858, %v2250
        %v2275 = vmul.f32 %v1859, %v2202
        %v2276 = vmul.f32 %v1860, %v2251
        %v2277 = vmul.f32 %v1861, %v2203
        %v2278 = vmul.f32 %v1862, %v2252
        %v2279 = vmul.f32 %v1863, %v2204
        %v2280 = vmul.f32 %v1864, %v2253
        %v2281 = vmul.f32 %v1865, %v2205
        %v2282 = vmul.f32 %v1866, %v2254
        %v2283 = vmul.f32 %v1867, %v2206
        %v2284 = vmul.f32 %v1868, %v2255
        %v2285 = vmul.f32 %v1869, %v2207
        %v2286 = vmul.f32 %v1870, %v2256
        %v2287 = vmul.f32 %v1871, %v2208
        %v2288 = vmul.f32 %v1872, %v2257
        %v2289 = vmul.f32 %v1873, %v2209
        %2322 = vrot.lane.b32.xlu0 %v2066, 4
        %v2323 = vpop.permute.xlu0 %2322
        %2324 = vrot.lane.b32.xlu0 %v2067, 4
        %v2325 = vpop.permute.xlu0 %2324
        %2326 = vrot.lane.b32.xlu0 %v2068, 4
        %v2327 = vpop.permute.xlu0 %2326
        %2328 = vrot.lane.b32.xlu0 %v2069, 4
        %v2329 = vpop.permute.xlu0 %2328
        %2330 = vrot.lane.b32.xlu0 %v2070, 4
        %v2331 = vpop.permute.xlu0 %2330
        %2332 = vrot.lane.b32.xlu0 %v2071, 4
        %v2333 = vpop.permute.xlu0 %2332
        %2334 = vrot.lane.b32.xlu0 %v2072, 4
        %v2335 = vpop.permute.xlu0 %2334
        %2336 = vrot.lane.b32.xlu0 %v2073, 4
        %v2337 = vpop.permute.xlu0 %2336
        %2338 = vrot.lane.b32.xlu0 %v2074, 4
        %v2339 = vpop.permute.xlu0 %2338
        %2340 = vrot.lane.b32.xlu0 %v2075, 4
        %v2341 = vpop.permute.xlu0 %2340
        %2342 = vrot.lane.b32.xlu0 %v2076, 4
        %v2343 = vpop.permute.xlu0 %2342
        %2344 = vrot.lane.b32.xlu0 %v2077, 4
        %v2345 = vpop.permute.xlu0 %2344
        %2346 = vrot.lane.b32.xlu0 %v2078, 4
        %v2347 = vpop.permute.xlu0 %2346
        %2348 = vrot.lane.b32.xlu0 %v2079, 4
        %v2349 = vpop.permute.xlu0 %2348
        %2350 = vrot.lane.b32.xlu0 %v2080, 4
        %v2351 = vpop.permute.xlu0 %2350
        %2352 = vrot.lane.b32.xlu0 %v2081, 4
        %v2353 = vpop.permute.xlu0 %2352
        %2354 = vrot.lane.b32.xlu0 %v2082, 4
        %v2355 = vpop.permute.xlu0 %2354
        %2356 = vrot.lane.b32.xlu0 %v2083, 4
        %v2357 = vpop.permute.xlu0 %2356
        %2358 = vrot.lane.b32.xlu0 %v2084, 4
        %v2359 = vpop.permute.xlu0 %2358
        %2360 = vrot.lane.b32.xlu0 %v2085, 4
        %v2361 = vpop.permute.xlu0 %2360
        %2362 = vrot.lane.b32.xlu0 %v2086, 4
        %v2363 = vpop.permute.xlu0 %2362
        %2364 = vrot.lane.b32.xlu0 %v2087, 4
        %v2365 = vpop.permute.xlu0 %2364
        %2366 = vrot.lane.b32.xlu0 %v2088, 4
        %v2367 = vpop.permute.xlu0 %2366
        %2368 = vrot.lane.b32.xlu0 %v2089, 4
        %v2369 = vpop.permute.xlu0 %2368
        %2370 = vrot.lane.b32.xlu0 %v2090, 4
        %v2371 = vpop.permute.xlu0 %2370
        %2372 = vrot.lane.b32.xlu0 %v2091, 4
        %v2373 = vpop.permute.xlu0 %2372
        %2374 = vrot.lane.b32.xlu0 %v2092, 4
        %v2375 = vpop.permute.xlu0 %2374
        %2376 = vrot.lane.b32.xlu0 %v2093, 4
        %v2377 = vpop.permute.xlu0 %2376
        %2378 = vrot.lane.b32.xlu0 %v2094, 4
        %v2379 = vpop.permute.xlu0 %2378
        %2380 = vrot.lane.b32.xlu0 %v2095, 4
        %v2381 = vpop.permute.xlu0 %2380
        %2382 = vrot.lane.b32.xlu0 %v2096, 4
        %v2383 = vpop.permute.xlu0 %2382
        %2384 = vrot.lane.b32.xlu0 %v2097, 4
        %v2385 = vpop.permute.xlu0 %2384
        %vm2386 = vcmask 31744
        %v2387 = vsel %vm2386, %v2323, %v2325
        %v2388 = vsel %vm2386, %v2327, %v2329
        %v2389 = vsel %vm2386, %v2331, %v2333
        %v2390 = vsel %vm2386, %v2335, %v2337
        %v2391 = vsel %vm2386, %v2339, %v2341
        %v2392 = vsel %vm2386, %v2343, %v2345
        %v2393 = vsel %vm2386, %v2347, %v2349
        %v2394 = vsel %vm2386, %v2351, %v2353
        %v2395 = vsel %vm2386, %v2355, %v2357
        %v2396 = vsel %vm2386, %v2359, %v2361
        %v2397 = vsel %vm2386, %v2363, %v2365
        %v2398 = vsel %vm2386, %v2367, %v2369
        %v2399 = vsel %vm2386, %v2371, %v2373
        %v2400 = vsel %vm2386, %v2375, %v2377
        %v2401 = vsel %vm2386, %v2379, %v2381
        %v2402 = vsel %vm2386, %v2383, %v2385
        %v2435 = vsel %vm2386, 0.0, %v2323
        %v2436 = vsel %vm2386, 0.0, %v2327
        %v2437 = vsel %vm2386, 0.0, %v2331
        %v2438 = vsel %vm2386, 0.0, %v2335
        %v2439 = vsel %vm2386, 0.0, %v2339
        %v2440 = vsel %vm2386, 0.0, %v2343
        %v2441 = vsel %vm2386, 0.0, %v2347
        %v2442 = vsel %vm2386, 0.0, %v2351
        %v2443 = vsel %vm2386, 0.0, %v2355
        %v2444 = vsel %vm2386, 0.0, %v2359
        %v2445 = vsel %vm2386, 0.0, %v2363
        %v2446 = vsel %vm2386, 0.0, %v2367
        %v2447 = vsel %vm2386, 0.0, %v2371
        %v2448 = vsel %vm2386, 0.0, %v2375
        %v2449 = vsel %vm2386, 0.0, %v2379
        %v2450 = vsel %vm2386, 0.0, %v2383
        %v2451 = vmul.f32 %v2258, %v2435
        %v2452 = vmul.f32 %v2259, %v2387
        %v2453 = vmul.f32 %v2260, %v2436
        %v2454 = vmul.f32 %v2261, %v2388
        %v2455 = vmul.f32 %v2262, %v2437
        %v2456 = vmul.f32 %v2263, %v2389
        %v2457 = vmul.f32 %v2264, %v2438
        %v2458 = vmul.f32 %v2265, %v2390
        %v2459 = vmul.f32 %v2266, %v2439
        %v2460 = vmul.f32 %v2267, %v2391
        %v2461 = vmul.f32 %v2268, %v2440
        %v2462 = vmul.f32 %v2269, %v2392
        %v2463 = vmul.f32 %v2270, %v2441
        %v2464 = vmul.f32 %v2271, %v2393
        %v2465 = vmul.f32 %v2272, %v2442
        %v2466 = vmul.f32 %v2273, %v2394
        %v2467 = vmul.f32 %v2274, %v2443
        %v2468 = vmul.f32 %v2275, %v2395
        %v2469 = vmul.f32 %v2276, %v2444
        %v2470 = vmul.f32 %v2277, %v2396
        %v2471 = vmul.f32 %v2278, %v2445
        %v2472 = vmul.f32 %v2279, %v2397
        %v2473 = vmul.f32 %v2280, %v2446
        %v2474 = vmul.f32 %v2281, %v2398
        %v2475 = vmul.f32 %v2282, %v2447
        %v2476 = vmul.f32 %v2283, %v2399
        %v2477 = vmul.f32 %v2284, %v2448
        %v2478 = vmul.f32 %v2285, %v2400
        %v2479 = vmul.f32 %v2286, %v2449
        %v2480 = vmul.f32 %v2287, %v2401
        %v2481 = vmul.f32 %v2288, %v2450
        %v2482 = vmul.f32 %v2289, %v2402
        %v2483 = vadd.f32 %v2451, %v2066
        %v2484 = vadd.f32 %v2452, %v2067
        %v2485 = vadd.f32 %v2453, %v2068
        %v2486 = vadd.f32 %v2454, %v2069
        %v2487 = vadd.f32 %v2455, %v2070
        %v2488 = vadd.f32 %v2456, %v2071
        %v2489 = vadd.f32 %v2457, %v2072
        %v2490 = vadd.f32 %v2458, %v2073
        %v2491 = vadd.f32 %v2459, %v2074
        %v2492 = vadd.f32 %v2460, %v2075
        %v2493 = vadd.f32 %v2461, %v2076
        %v2494 = vadd.f32 %v2462, %v2077
        %v2495 = vadd.f32 %v2463, %v2078
        %v2496 = vadd.f32 %v2464, %v2079
        %v2497 = vadd.f32 %v2465, %v2080
        %v2498 = vadd.f32 %v2466, %v2081
        %v2499 = vadd.f32 %v2467, %v2082
        %v2500 = vadd.f32 %v2468, %v2083
        %v2501 = vadd.f32 %v2469, %v2084
        %v2502 = vadd.f32 %v2470, %v2085
        %v2503 = vadd.f32 %v2471, %v2086
        %v2504 = vadd.f32 %v2472, %v2087
        %v2505 = vadd.f32 %v2473, %v2088
        %v2506 = vadd.f32 %v2474, %v2089
        %v2507 = vadd.f32 %v2475, %v2090
        %v2508 = vadd.f32 %v2476, %v2091
        %v2509 = vadd.f32 %v2477, %v2092
        %v2510 = vadd.f32 %v2478, %v2093
        %v2511 = vadd.f32 %v2479, %v2094
        %v2512 = vadd.f32 %v2480, %v2095
        %v2513 = vadd.f32 %v2481, %v2096
        %v2514 = vadd.f32 %v2482, %v2097
        %2547 = vrot.lane.b32.xlu0 %v2258, 4
        %v2548 = vpop.permute.xlu0 %2547
        %2549 = vrot.lane.b32.xlu0 %v2259, 4
        %v2550 = vpop.permute.xlu0 %2549
        %2551 = vrot.lane.b32.xlu0 %v2260, 4
        %v2552 = vpop.permute.xlu0 %2551
        %2553 = vrot.lane.b32.xlu0 %v2261, 4
        %v2554 = vpop.permute.xlu0 %2553
        %2555 = vrot.lane.b32.xlu0 %v2262, 4
        %v2556 = vpop.permute.xlu0 %2555
        %2557 = vrot.lane.b32.xlu0 %v2263, 4
        %v2558 = vpop.permute.xlu0 %2557
        %2559 = vrot.lane.b32.xlu0 %v2264, 4
        %v2560 = vpop.permute.xlu0 %2559
        %2561 = vrot.lane.b32.xlu0 %v2265, 4
        %v2562 = vpop.permute.xlu0 %2561
        %2563 = vrot.lane.b32.xlu0 %v2266, 4
        %v2564 = vpop.permute.xlu0 %2563
        %2565 = vrot.lane.b32.xlu0 %v2267, 4
        %v2566 = vpop.permute.xlu0 %2565
        %2567 = vrot.lane.b32.xlu0 %v2268, 4
        %v2568 = vpop.permute.xlu0 %2567
        %2569 = vrot.lane.b32.xlu0 %v2269, 4
        %v2570 = vpop.permute.xlu0 %2569
        %2571 = vrot.lane.b32.xlu0 %v2270, 4
        %v2572 = vpop.permute.xlu0 %2571
        %2573 = vrot.lane.b32.xlu0 %v2271, 4
        %v2574 = vpop.permute.xlu0 %2573
        %2575 = vrot.lane.b32.xlu0 %v2272, 4
        %v2576 = vpop.permute.xlu0 %2575
        %2577 = vrot.lane.b32.xlu0 %v2273, 4
        %v2578 = vpop.permute.xlu0 %2577
        %2579 = vrot.lane.b32.xlu0 %v2274, 4
        %v2580 = vpop.permute.xlu0 %2579
        %2581 = vrot.lane.b32.xlu0 %v2275, 4
        %v2582 = vpop.permute.xlu0 %2581
        %2583 = vrot.lane.b32.xlu0 %v2276, 4
        %v2584 = vpop.permute.xlu0 %2583
        %2585 = vrot.lane.b32.xlu0 %v2277, 4
        %v2586 = vpop.permute.xlu0 %2585
        %2587 = vrot.lane.b32.xlu0 %v2278, 4
        %v2588 = vpop.permute.xlu0 %2587
        %2589 = vrot.lane.b32.xlu0 %v2279, 4
        %v2590 = vpop.permute.xlu0 %2589
        %2591 = vrot.lane.b32.xlu0 %v2280, 4
        %v2592 = vpop.permute.xlu0 %2591
        %2593 = vrot.lane.b32.xlu0 %v2281, 4
        %v2594 = vpop.permute.xlu0 %2593
        %2595 = vrot.lane.b32.xlu0 %v2282, 4
        %v2596 = vpop.permute.xlu0 %2595
        %2597 = vrot.lane.b32.xlu0 %v2283, 4
        %v2598 = vpop.permute.xlu0 %2597
        %2599 = vrot.lane.b32.xlu0 %v2284, 4
        %v2600 = vpop.permute.xlu0 %2599
        %2601 = vrot.lane.b32.xlu0 %v2285, 4
        %v2602 = vpop.permute.xlu0 %2601
        %2603 = vrot.lane.b32.xlu0 %v2286, 4
        %v2604 = vpop.permute.xlu0 %2603
        %2605 = vrot.lane.b32.xlu0 %v2287, 4
        %v2606 = vpop.permute.xlu0 %2605
        %2607 = vrot.lane.b32.xlu0 %v2288, 4
        %v2608 = vpop.permute.xlu0 %2607
        %2609 = vrot.lane.b32.xlu0 %v2289, 4
        %v2610 = vpop.permute.xlu0 %2609
        %v2611 = vsel %vm2386, %v2548, %v2550
        %v2612 = vsel %vm2386, %v2552, %v2554
        %v2613 = vsel %vm2386, %v2556, %v2558
        %v2614 = vsel %vm2386, %v2560, %v2562
        %v2615 = vsel %vm2386, %v2564, %v2566
        %v2616 = vsel %vm2386, %v2568, %v2570
        %v2617 = vsel %vm2386, %v2572, %v2574
        %v2618 = vsel %vm2386, %v2576, %v2578
        %v2619 = vsel %vm2386, %v2580, %v2582
        %v2620 = vsel %vm2386, %v2584, %v2586
        %v2621 = vsel %vm2386, %v2588, %v2590
        %v2622 = vsel %vm2386, %v2592, %v2594
        %v2623 = vsel %vm2386, %v2596, %v2598
        %v2624 = vsel %vm2386, %v2600, %v2602
        %v2625 = vsel %vm2386, %v2604, %v2606
        %v2626 = vsel %vm2386, %v2608, %v2610
        %v2659 = vsel %vm2386, 1.0, %v2548
        %v2660 = vsel %vm2386, 1.0, %v2552
        %v2661 = vsel %vm2386, 1.0, %v2556
        %v2662 = vsel %vm2386, 1.0, %v2560
        %v2663 = vsel %vm2386, 1.0, %v2564
        %v2664 = vsel %vm2386, 1.0, %v2568
        %v2665 = vsel %vm2386, 1.0, %v2572
        %v2666 = vsel %vm2386, 1.0, %v2576
        %v2667 = vsel %vm2386, 1.0, %v2580
        %v2668 = vsel %vm2386, 1.0, %v2584
        %v2669 = vsel %vm2386, 1.0, %v2588
        %v2670 = vsel %vm2386, 1.0, %v2592
        %v2671 = vsel %vm2386, 1.0, %v2596
        %v2672 = vsel %vm2386, 1.0, %v2600
        %v2673 = vsel %vm2386, 1.0, %v2604
        %v2674 = vsel %vm2386, 1.0, %v2608
        %v2675 = vmul.f32 %v2258, %v2659
        %v2676 = vmul.f32 %v2259, %v2611
        %v2677 = vmul.f32 %v2260, %v2660
        %v2678 = vmul.f32 %v2261, %v2612
        %v2679 = vmul.f32 %v2262, %v2661
        %v2680 = vmul.f32 %v2263, %v2613
        %v2681 = vmul.f32 %v2264, %v2662
        %v2682 = vmul.f32 %v2265, %v2614
        %v2683 = vmul.f32 %v2266, %v2663
        %v2684 = vmul.f32 %v2267, %v2615
        %v2685 = vmul.f32 %v2268, %v2664
        %v2686 = vmul.f32 %v2269, %v2616
        %v2687 = vmul.f32 %v2270, %v2665
        %v2688 = vmul.f32 %v2271, %v2617
        %v2689 = vmul.f32 %v2272, %v2666
        %v2690 = vmul.f32 %v2273, %v2618
        %v2691 = vmul.f32 %v2274, %v2667
        %v2692 = vmul.f32 %v2275, %v2619
        %v2693 = vmul.f32 %v2276, %v2668
        %v2694 = vmul.f32 %v2277, %v2620
        %v2695 = vmul.f32 %v2278, %v2669
        %v2696 = vmul.f32 %v2279, %v2621
        %v2697 = vmul.f32 %v2280, %v2670
        %v2698 = vmul.f32 %v2281, %v2622
        %v2699 = vmul.f32 %v2282, %v2671
        %v2700 = vmul.f32 %v2283, %v2623
        %v2701 = vmul.f32 %v2284, %v2672
        %v2702 = vmul.f32 %v2285, %v2624
        %v2703 = vmul.f32 %v2286, %v2673
        %v2704 = vmul.f32 %v2287, %v2625
        %v2705 = vmul.f32 %v2288, %v2674
        %v2706 = vmul.f32 %v2289, %v2626
        %2739 = vrot.lane.b32.xlu0 %v2483, 8
        %v2740 = vpop.permute.xlu0 %2739
        %2741 = vrot.lane.b32.xlu0 %v2484, 8
        %v2742 = vpop.permute.xlu0 %2741
        %2743 = vrot.lane.b32.xlu0 %v2485, 8
        %v2744 = vpop.permute.xlu0 %2743
        %2745 = vrot.lane.b32.xlu0 %v2486, 8
        %v2746 = vpop.permute.xlu0 %2745
        %2747 = vrot.lane.b32.xlu0 %v2487, 8
        %v2748 = vpop.permute.xlu0 %2747
        %2749 = vrot.lane.b32.xlu0 %v2488, 8
        %v2750 = vpop.permute.xlu0 %2749
        %2751 = vrot.lane.b32.xlu0 %v2489, 8
        %v2752 = vpop.permute.xlu0 %2751
        %2753 = vrot.lane.b32.xlu0 %v2490, 8
        %v2754 = vpop.permute.xlu0 %2753
        %2755 = vrot.lane.b32.xlu0 %v2491, 8
        %v2756 = vpop.permute.xlu0 %2755
        %2757 = vrot.lane.b32.xlu0 %v2492, 8
        %v2758 = vpop.permute.xlu0 %2757
        %2759 = vrot.lane.b32.xlu0 %v2493, 8
        %v2760 = vpop.permute.xlu0 %2759
        %2761 = vrot.lane.b32.xlu0 %v2494, 8
        %v2762 = vpop.permute.xlu0 %2761
        %2763 = vrot.lane.b32.xlu0 %v2495, 8
        %v2764 = vpop.permute.xlu0 %2763
        %2765 = vrot.lane.b32.xlu0 %v2496, 8
        %v2766 = vpop.permute.xlu0 %2765
        %2767 = vrot.lane.b32.xlu0 %v2497, 8
        %v2768 = vpop.permute.xlu0 %2767
        %2769 = vrot.lane.b32.xlu0 %v2498, 8
        %v2770 = vpop.permute.xlu0 %2769
        %2771 = vrot.lane.b32.xlu0 %v2499, 8
        %v2772 = vpop.permute.xlu0 %2771
        %2773 = vrot.lane.b32.xlu0 %v2500, 8
        %v2774 = vpop.permute.xlu0 %2773
        %2775 = vrot.lane.b32.xlu0 %v2501, 8
        %v2776 = vpop.permute.xlu0 %2775
        %2777 = vrot.lane.b32.xlu0 %v2502, 8
        %v2778 = vpop.permute.xlu0 %2777
        %2779 = vrot.lane.b32.xlu0 %v2503, 8
        %v2780 = vpop.permute.xlu0 %2779
        %2781 = vrot.lane.b32.xlu0 %v2504, 8
        %v2782 = vpop.permute.xlu0 %2781
        %2783 = vrot.lane.b32.xlu0 %v2505, 8
        %v2784 = vpop.permute.xlu0 %2783
        %2785 = vrot.lane.b32.xlu0 %v2506, 8
        %v2786 = vpop.permute.xlu0 %2785
        %2787 = vrot.lane.b32.xlu0 %v2507, 8
        %v2788 = vpop.permute.xlu0 %2787
        %2789 = vrot.lane.b32.xlu0 %v2508, 8
        %v2790 = vpop.permute.xlu0 %2789
        %2791 = vrot.lane.b32.xlu0 %v2509, 8
        %v2792 = vpop.permute.xlu0 %2791
        %2793 = vrot.lane.b32.xlu0 %v2510, 8
        %v2794 = vpop.permute.xlu0 %2793
        %2795 = vrot.lane.b32.xlu0 %v2511, 8
        %v2796 = vpop.permute.xlu0 %2795
        %2797 = vrot.lane.b32.xlu0 %v2512, 8
        %v2798 = vpop.permute.xlu0 %2797
        %2799 = vrot.lane.b32.xlu0 %v2513, 8
        %v2800 = vpop.permute.xlu0 %2799
        %2801 = vrot.lane.b32.xlu0 %v2514, 8
        %v2802 = vpop.permute.xlu0 %2801
        %vm2803 = vcmask 64512
        %v2804 = vsel %vm2803, %v2740, %v2742
        %v2805 = vsel %vm2803, %v2744, %v2746
        %v2806 = vsel %vm2803, %v2748, %v2750
        %v2807 = vsel %vm2803, %v2752, %v2754
        %v2808 = vsel %vm2803, %v2756, %v2758
        %v2809 = vsel %vm2803, %v2760, %v2762
        %v2810 = vsel %vm2803, %v2764, %v2766
        %v2811 = vsel %vm2803, %v2768, %v2770
        %v2812 = vsel %vm2803, %v2772, %v2774
        %v2813 = vsel %vm2803, %v2776, %v2778
        %v2814 = vsel %vm2803, %v2780, %v2782
        %v2815 = vsel %vm2803, %v2784, %v2786
        %v2816 = vsel %vm2803, %v2788, %v2790
        %v2817 = vsel %vm2803, %v2792, %v2794
        %v2818 = vsel %vm2803, %v2796, %v2798
        %v2819 = vsel %vm2803, %v2800, %v2802
        %v2852 = vsel %vm2803, 0.0, %v2740
        %v2853 = vsel %vm2803, 0.0, %v2744
        %v2854 = vsel %vm2803, 0.0, %v2748
        %v2855 = vsel %vm2803, 0.0, %v2752
        %v2856 = vsel %vm2803, 0.0, %v2756
        %v2857 = vsel %vm2803, 0.0, %v2760
        %v2858 = vsel %vm2803, 0.0, %v2764
        %v2859 = vsel %vm2803, 0.0, %v2768
        %v2860 = vsel %vm2803, 0.0, %v2772
        %v2861 = vsel %vm2803, 0.0, %v2776
        %v2862 = vsel %vm2803, 0.0, %v2780
        %v2863 = vsel %vm2803, 0.0, %v2784
        %v2864 = vsel %vm2803, 0.0, %v2788
        %v2865 = vsel %vm2803, 0.0, %v2792
        %v2866 = vsel %vm2803, 0.0, %v2796
        %v2867 = vsel %vm2803, 0.0, %v2800
        %v2868 = vmul.f32 %v2675, %v2852
        %v2869 = vmul.f32 %v2676, %v2804
        %v2870 = vmul.f32 %v2677, %v2853
        %v2871 = vmul.f32 %v2678, %v2805
        %v2872 = vmul.f32 %v2679, %v2854
        %v2873 = vmul.f32 %v2680, %v2806
        %v2874 = vmul.f32 %v2681, %v2855
        %v2875 = vmul.f32 %v2682, %v2807
        %v2876 = vmul.f32 %v2683, %v2856
        %v2877 = vmul.f32 %v2684, %v2808
        %v2878 = vmul.f32 %v2685, %v2857
        %v2879 = vmul.f32 %v2686, %v2809
        %v2880 = vmul.f32 %v2687, %v2858
        %v2881 = vmul.f32 %v2688, %v2810
        %v2882 = vmul.f32 %v2689, %v2859
        %v2883 = vmul.f32 %v2690, %v2811
        %v2884 = vmul.f32 %v2691, %v2860
        %v2885 = vmul.f32 %v2692, %v2812
        %v2886 = vmul.f32 %v2693, %v2861
        %v2887 = vmul.f32 %v2694, %v2813
        %v2888 = vmul.f32 %v2695, %v2862
        %v2889 = vmul.f32 %v2696, %v2814
        %v2890 = vmul.f32 %v2697, %v2863
        %v2891 = vmul.f32 %v2698, %v2815
        %v2892 = vmul.f32 %v2699, %v2864
        %v2893 = vmul.f32 %v2700, %v2816
        %v2894 = vmul.f32 %v2701, %v2865
        %v2895 = vmul.f32 %v2702, %v2817
        %v2896 = vmul.f32 %v2703, %v2866
        %v2897 = vmul.f32 %v2704, %v2818
        %v2898 = vmul.f32 %v2705, %v2867
        %v2899 = vmul.f32 %v2706, %v2819
        %v2900 = vadd.f32 %v2868, %v2483
        %v2901 = vadd.f32 %v2869, %v2484
        %v2902 = vadd.f32 %v2870, %v2485
        %v2903 = vadd.f32 %v2871, %v2486
        %v2904 = vadd.f32 %v2872, %v2487
        %v2905 = vadd.f32 %v2873, %v2488
        %v2906 = vadd.f32 %v2874, %v2489
        %v2907 = vadd.f32 %v2875, %v2490
        %v2908 = vadd.f32 %v2876, %v2491
        %v2909 = vadd.f32 %v2877, %v2492
        %v2910 = vadd.f32 %v2878, %v2493
        %v2911 = vadd.f32 %v2879, %v2494
        %v2912 = vadd.f32 %v2880, %v2495
        %v2913 = vadd.f32 %v2881, %v2496
        %v2914 = vadd.f32 %v2882, %v2497
        %v2915 = vadd.f32 %v2883, %v2498
        %v2916 = vadd.f32 %v2884, %v2499
        %v2917 = vadd.f32 %v2885, %v2500
        %v2918 = vadd.f32 %v2886, %v2501
        %v2919 = vadd.f32 %v2887, %v2502
        %v2920 = vadd.f32 %v2888, %v2503
        %v2921 = vadd.f32 %v2889, %v2504
        %v2922 = vadd.f32 %v2890, %v2505
        %v2923 = vadd.f32 %v2891, %v2506
        %v2924 = vadd.f32 %v2892, %v2507
        %v2925 = vadd.f32 %v2893, %v2508
        %v2926 = vadd.f32 %v2894, %v2509
        %v2927 = vadd.f32 %v2895, %v2510
        %v2928 = vadd.f32 %v2896, %v2511
        %v2929 = vadd.f32 %v2897, %v2512
        %v2930 = vadd.f32 %v2898, %v2513
        %v2931 = vadd.f32 %v2899, %v2514
        %2964 = vrot.lane.b32.xlu0 %v2675, 8
        %v2965 = vpop.permute.xlu0 %2964
        %2966 = vrot.lane.b32.xlu0 %v2676, 8
        %v2967 = vpop.permute.xlu0 %2966
        %2968 = vrot.lane.b32.xlu0 %v2677, 8
        %v2969 = vpop.permute.xlu0 %2968
        %2970 = vrot.lane.b32.xlu0 %v2678, 8
        %v2971 = vpop.permute.xlu0 %2970
        %2972 = vrot.lane.b32.xlu0 %v2679, 8
        %v2973 = vpop.permute.xlu0 %2972
        %2974 = vrot.lane.b32.xlu0 %v2680, 8
        %v2975 = vpop.permute.xlu0 %2974
        %2976 = vrot.lane.b32.xlu0 %v2681, 8
        %v2977 = vpop.permute.xlu0 %2976
        %2978 = vrot.lane.b32.xlu0 %v2682, 8
        %v2979 = vpop.permute.xlu0 %2978
        %2980 = vrot.lane.b32.xlu0 %v2683, 8
        %v2981 = vpop.permute.xlu0 %2980
        %2982 = vrot.lane.b32.xlu0 %v2684, 8
        %v2983 = vpop.permute.xlu0 %2982
        %2984 = vrot.lane.b32.xlu0 %v2685, 8
        %v2985 = vpop.permute.xlu0 %2984
        %2986 = vrot.lane.b32.xlu0 %v2686, 8
        %v2987 = vpop.permute.xlu0 %2986
        %2988 = vrot.lane.b32.xlu0 %v2687, 8
        %v2989 = vpop.permute.xlu0 %2988
        %2990 = vrot.lane.b32.xlu0 %v2688, 8
        %v2991 = vpop.permute.xlu0 %2990
        %2992 = vrot.lane.b32.xlu0 %v2689, 8
        %v2993 = vpop.permute.xlu0 %2992
        %2994 = vrot.lane.b32.xlu0 %v2690, 8
        %v2995 = vpop.permute.xlu0 %2994
        %2996 = vrot.lane.b32.xlu0 %v2691, 8
        %v2997 = vpop.permute.xlu0 %2996
        %2998 = vrot.lane.b32.xlu0 %v2692, 8
        %v2999 = vpop.permute.xlu0 %2998
        %3000 = vrot.lane.b32.xlu0 %v2693, 8
        %v3001 = vpop.permute.xlu0 %3000
        %3002 = vrot.lane.b32.xlu0 %v2694, 8
        %v3003 = vpop.permute.xlu0 %3002
        %3004 = vrot.lane.b32.xlu0 %v2695, 8
        %v3005 = vpop.permute.xlu0 %3004
        %3006 = vrot.lane.b32.xlu0 %v2696, 8
        %v3007 = vpop.permute.xlu0 %3006
        %3008 = vrot.lane.b32.xlu0 %v2697, 8
        %v3009 = vpop.permute.xlu0 %3008
        %3010 = vrot.lane.b32.xlu0 %v2698, 8
        %v3011 = vpop.permute.xlu0 %3010
        %3012 = vrot.lane.b32.xlu0 %v2699, 8
        %v3013 = vpop.permute.xlu0 %3012
        %3014 = vrot.lane.b32.xlu0 %v2700, 8
        %v3015 = vpop.permute.xlu0 %3014
        %3016 = vrot.lane.b32.xlu0 %v2701, 8
        %v3017 = vpop.permute.xlu0 %3016
        %3018 = vrot.lane.b32.xlu0 %v2702, 8
        %v3019 = vpop.permute.xlu0 %3018
        %3020 = vrot.lane.b32.xlu0 %v2703, 8
        %v3021 = vpop.permute.xlu0 %3020
        %3022 = vrot.lane.b32.xlu0 %v2704, 8
        %v3023 = vpop.permute.xlu0 %3022
        %3024 = vrot.lane.b32.xlu0 %v2705, 8
        %v3025 = vpop.permute.xlu0 %3024
        %3026 = vrot.lane.b32.xlu0 %v2706, 8
        %v3027 = vpop.permute.xlu0 %3026
        %v3028 = vsel %vm2803, %v2965, %v2967
        %v3029 = vsel %vm2803, %v2969, %v2971
        %v3030 = vsel %vm2803, %v2973, %v2975
        %v3031 = vsel %vm2803, %v2977, %v2979
        %v3032 = vsel %vm2803, %v2981, %v2983
        %v3033 = vsel %vm2803, %v2985, %v2987
        %v3034 = vsel %vm2803, %v2989, %v2991
        %v3035 = vsel %vm2803, %v2993, %v2995
        %v3036 = vsel %vm2803, %v2997, %v2999
        %v3037 = vsel %vm2803, %v3001, %v3003
        %v3038 = vsel %vm2803, %v3005, %v3007
        %v3039 = vsel %vm2803, %v3009, %v3011
        %v3040 = vsel %vm2803, %v3013, %v3015
        %v3041 = vsel %vm2803, %v3017, %v3019
        %v3042 = vsel %vm2803, %v3021, %v3023
        %v3043 = vsel %vm2803, %v3025, %v3027
        %v3076 = vsel %vm2803, 1.0, %v2965
        %v3077 = vsel %vm2803, 1.0, %v2969
        %v3078 = vsel %vm2803, 1.0, %v2973
        %v3079 = vsel %vm2803, 1.0, %v2977
        %v3080 = vsel %vm2803, 1.0, %v2981
        %v3081 = vsel %vm2803, 1.0, %v2985
        %v3082 = vsel %vm2803, 1.0, %v2989
        %v3083 = vsel %vm2803, 1.0, %v2993
        %v3084 = vsel %vm2803, 1.0, %v2997
        %v3085 = vsel %vm2803, 1.0, %v3001
        %v3086 = vsel %vm2803, 1.0, %v3005
        %v3087 = vsel %vm2803, 1.0, %v3009
        %v3088 = vsel %vm2803, 1.0, %v3013
        %v3089 = vsel %vm2803, 1.0, %v3017
        %v3090 = vsel %vm2803, 1.0, %v3021
        %v3091 = vsel %vm2803, 1.0, %v3025
        %v3092 = vmul.f32 %v2675, %v3076
        %v3093 = vmul.f32 %v2676, %v3028
        %v3094 = vmul.f32 %v2677, %v3077
        %v3095 = vmul.f32 %v2678, %v3029
        %v3096 = vmul.f32 %v2679, %v3078
        %v3097 = vmul.f32 %v2680, %v3030
        %v3098 = vmul.f32 %v2681, %v3079
        %v3099 = vmul.f32 %v2682, %v3031
        %v3100 = vmul.f32 %v2683, %v3080
        %v3101 = vmul.f32 %v2684, %v3032
        %v3102 = vmul.f32 %v2685, %v3081
        %v3103 = vmul.f32 %v2686, %v3033
        %v3104 = vmul.f32 %v2687, %v3082
        %v3105 = vmul.f32 %v2688, %v3034
        %v3106 = vmul.f32 %v2689, %v3083
        %v3107 = vmul.f32 %v2690, %v3035
        %v3108 = vmul.f32 %v2691, %v3084
        %v3109 = vmul.f32 %v2692, %v3036
        %v3110 = vmul.f32 %v2693, %v3085
        %v3111 = vmul.f32 %v2694, %v3037
        %v3112 = vmul.f32 %v2695, %v3086
        %v3113 = vmul.f32 %v2696, %v3038
        %v3114 = vmul.f32 %v2697, %v3087
        %v3115 = vmul.f32 %v2698, %v3039
        %v3116 = vmul.f32 %v2699, %v3088
        %v3117 = vmul.f32 %v2700, %v3040
        %v3118 = vmul.f32 %v2701, %v3089
        %v3119 = vmul.f32 %v2702, %v3041
        %v3120 = vmul.f32 %v2703, %v3090
        %v3121 = vmul.f32 %v2704, %v3042
        %v3122 = vmul.f32 %v2705, %v3091
        %v3123 = vmul.f32 %v2706, %v3043
        %3156 = vrot.lane.b32.xlu0 %v2900, 16
        %v3157 = vpop.permute.xlu0 %3156
        %3158 = vrot.lane.b32.xlu0 %v2901, 16
        %v3159 = vpop.permute.xlu0 %3158
        %3160 = vrot.lane.b32.xlu0 %v2902, 16
        %v3161 = vpop.permute.xlu0 %3160
        %3162 = vrot.lane.b32.xlu0 %v2903, 16
        %v3163 = vpop.permute.xlu0 %3162
        %3164 = vrot.lane.b32.xlu0 %v2904, 16
        %v3165 = vpop.permute.xlu0 %3164
        %3166 = vrot.lane.b32.xlu0 %v2905, 16
        %v3167 = vpop.permute.xlu0 %3166
        %3168 = vrot.lane.b32.xlu0 %v2906, 16
        %v3169 = vpop.permute.xlu0 %3168
        %3170 = vrot.lane.b32.xlu0 %v2907, 16
        %v3171 = vpop.permute.xlu0 %3170
        %3172 = vrot.lane.b32.xlu0 %v2908, 16
        %v3173 = vpop.permute.xlu0 %3172
        %3174 = vrot.lane.b32.xlu0 %v2909, 16
        %v3175 = vpop.permute.xlu0 %3174
        %3176 = vrot.lane.b32.xlu0 %v2910, 16
        %v3177 = vpop.permute.xlu0 %3176
        %3178 = vrot.lane.b32.xlu0 %v2911, 16
        %v3179 = vpop.permute.xlu0 %3178
        %3180 = vrot.lane.b32.xlu0 %v2912, 16
        %v3181 = vpop.permute.xlu0 %3180
        %3182 = vrot.lane.b32.xlu0 %v2913, 16
        %v3183 = vpop.permute.xlu0 %3182
        %3184 = vrot.lane.b32.xlu0 %v2914, 16
        %v3185 = vpop.permute.xlu0 %3184
        %3186 = vrot.lane.b32.xlu0 %v2915, 16
        %v3187 = vpop.permute.xlu0 %3186
        %3188 = vrot.lane.b32.xlu0 %v2916, 16
        %v3189 = vpop.permute.xlu0 %3188
        %3190 = vrot.lane.b32.xlu0 %v2917, 16
        %v3191 = vpop.permute.xlu0 %3190
        %3192 = vrot.lane.b32.xlu0 %v2918, 16
        %v3193 = vpop.permute.xlu0 %3192
        %3194 = vrot.lane.b32.xlu0 %v2919, 16
        %v3195 = vpop.permute.xlu0 %3194
        %3196 = vrot.lane.b32.xlu0 %v2920, 16
        %v3197 = vpop.permute.xlu0 %3196
        %3198 = vrot.lane.b32.xlu0 %v2921, 16
        %v3199 = vpop.permute.xlu0 %3198
        %3200 = vrot.lane.b32.xlu0 %v2922, 16
        %v3201 = vpop.permute.xlu0 %3200
        %3202 = vrot.lane.b32.xlu0 %v2923, 16
        %v3203 = vpop.permute.xlu0 %3202
        %3204 = vrot.lane.b32.xlu0 %v2924, 16
        %v3205 = vpop.permute.xlu0 %3204
        %3206 = vrot.lane.b32.xlu0 %v2925, 16
        %v3207 = vpop.permute.xlu0 %3206
        %3208 = vrot.lane.b32.xlu0 %v2926, 16
        %v3209 = vpop.permute.xlu0 %3208
        %3210 = vrot.lane.b32.xlu0 %v2927, 16
        %v3211 = vpop.permute.xlu0 %3210
        %3212 = vrot.lane.b32.xlu0 %v2928, 16
        %v3213 = vpop.permute.xlu0 %3212
        %3214 = vrot.lane.b32.xlu0 %v2929, 16
        %v3215 = vpop.permute.xlu0 %3214
        %3216 = vrot.lane.b32.xlu0 %v2930, 16
        %v3217 = vpop.permute.xlu0 %3216
        %3218 = vrot.lane.b32.xlu0 %v2931, 16
        %v3219 = vpop.permute.xlu0 %3218
        %vm3220 = vcmask 130048
        %v3221 = vsel %vm3220, %v3157, %v3159
        %v3222 = vsel %vm3220, %v3161, %v3163
        %v3223 = vsel %vm3220, %v3165, %v3167
        %v3224 = vsel %vm3220, %v3169, %v3171
        %v3225 = vsel %vm3220, %v3173, %v3175
        %v3226 = vsel %vm3220, %v3177, %v3179
        %v3227 = vsel %vm3220, %v3181, %v3183
        %v3228 = vsel %vm3220, %v3185, %v3187
        %v3229 = vsel %vm3220, %v3189, %v3191
        %v3230 = vsel %vm3220, %v3193, %v3195
        %v3231 = vsel %vm3220, %v3197, %v3199
        %v3232 = vsel %vm3220, %v3201, %v3203
        %v3233 = vsel %vm3220, %v3205, %v3207
        %v3234 = vsel %vm3220, %v3209, %v3211
        %v3235 = vsel %vm3220, %v3213, %v3215
        %v3236 = vsel %vm3220, %v3217, %v3219
        %v3269 = vsel %vm3220, 0.0, %v3157
        %v3270 = vsel %vm3220, 0.0, %v3161
        %v3271 = vsel %vm3220, 0.0, %v3165
        %v3272 = vsel %vm3220, 0.0, %v3169
        %v3273 = vsel %vm3220, 0.0, %v3173
        %v3274 = vsel %vm3220, 0.0, %v3177
        %v3275 = vsel %vm3220, 0.0, %v3181
        %v3276 = vsel %vm3220, 0.0, %v3185
        %v3277 = vsel %vm3220, 0.0, %v3189
        %v3278 = vsel %vm3220, 0.0, %v3193
        %v3279 = vsel %vm3220, 0.0, %v3197
        %v3280 = vsel %vm3220, 0.0, %v3201
        %v3281 = vsel %vm3220, 0.0, %v3205
        %v3282 = vsel %vm3220, 0.0, %v3209
        %v3283 = vsel %vm3220, 0.0, %v3213
        %v3284 = vsel %vm3220, 0.0, %v3217
        %v3285 = vmul.f32 %v3092, %v3269
        %v3286 = vmul.f32 %v3093, %v3221
        %v3287 = vmul.f32 %v3094, %v3270
        %v3288 = vmul.f32 %v3095, %v3222
        %v3289 = vmul.f32 %v3096, %v3271
        %v3290 = vmul.f32 %v3097, %v3223
        %v3291 = vmul.f32 %v3098, %v3272
        %v3292 = vmul.f32 %v3099, %v3224
        %v3293 = vmul.f32 %v3100, %v3273
        %v3294 = vmul.f32 %v3101, %v3225
        %v3295 = vmul.f32 %v3102, %v3274
        %v3296 = vmul.f32 %v3103, %v3226
        %v3297 = vmul.f32 %v3104, %v3275
        %v3298 = vmul.f32 %v3105, %v3227
        %v3299 = vmul.f32 %v3106, %v3276
        %v3300 = vmul.f32 %v3107, %v3228
        %v3301 = vmul.f32 %v3108, %v3277
        %v3302 = vmul.f32 %v3109, %v3229
        %v3303 = vmul.f32 %v3110, %v3278
        %v3304 = vmul.f32 %v3111, %v3230
        %v3305 = vmul.f32 %v3112, %v3279
        %v3306 = vmul.f32 %v3113, %v3231
        %v3307 = vmul.f32 %v3114, %v3280
        %v3308 = vmul.f32 %v3115, %v3232
        %v3309 = vmul.f32 %v3116, %v3281
        %v3310 = vmul.f32 %v3117, %v3233
        %v3311 = vmul.f32 %v3118, %v3282
        %v3312 = vmul.f32 %v3119, %v3234
        %v3313 = vmul.f32 %v3120, %v3283
        %v3314 = vmul.f32 %v3121, %v3235
        %v3315 = vmul.f32 %v3122, %v3284
        %v3316 = vmul.f32 %v3123, %v3236
        %v3317 = vadd.f32 %v3285, %v2900
        %v3318 = vadd.f32 %v3286, %v2901
        %v3319 = vadd.f32 %v3287, %v2902
        %v3320 = vadd.f32 %v3288, %v2903
        %v3321 = vadd.f32 %v3289, %v2904
        %v3322 = vadd.f32 %v3290, %v2905
        %v3323 = vadd.f32 %v3291, %v2906
        %v3324 = vadd.f32 %v3292, %v2907
        %v3325 = vadd.f32 %v3293, %v2908
        %v3326 = vadd.f32 %v3294, %v2909
        %v3327 = vadd.f32 %v3295, %v2910
        %v3328 = vadd.f32 %v3296, %v2911
        %v3329 = vadd.f32 %v3297, %v2912
        %v3330 = vadd.f32 %v3298, %v2913
        %v3331 = vadd.f32 %v3299, %v2914
        %v3332 = vadd.f32 %v3300, %v2915
        %v3333 = vadd.f32 %v3301, %v2916
        %v3334 = vadd.f32 %v3302, %v2917
        %v3335 = vadd.f32 %v3303, %v2918
        %v3336 = vadd.f32 %v3304, %v2919
        %v3337 = vadd.f32 %v3305, %v2920
        %v3338 = vadd.f32 %v3306, %v2921
        %v3339 = vadd.f32 %v3307, %v2922
        %v3340 = vadd.f32 %v3308, %v2923
        %v3341 = vadd.f32 %v3309, %v2924
        %v3342 = vadd.f32 %v3310, %v2925
        %v3343 = vadd.f32 %v3311, %v2926
        %v3344 = vadd.f32 %v3312, %v2927
        %v3345 = vadd.f32 %v3313, %v2928
        %v3346 = vadd.f32 %v3314, %v2929
        %v3347 = vadd.f32 %v3315, %v2930
        %v3348 = vadd.f32 %v3316, %v2931
        %3381 = vrot.lane.b32.xlu0 %v3092, 16
        %v3382 = vpop.permute.xlu0 %3381
        %3383 = vrot.lane.b32.xlu0 %v3093, 16
        %v3384 = vpop.permute.xlu0 %3383
        %3385 = vrot.lane.b32.xlu0 %v3094, 16
        %v3386 = vpop.permute.xlu0 %3385
        %3387 = vrot.lane.b32.xlu0 %v3095, 16
        %v3388 = vpop.permute.xlu0 %3387
        %3389 = vrot.lane.b32.xlu0 %v3096, 16
        %v3390 = vpop.permute.xlu0 %3389
        %3391 = vrot.lane.b32.xlu0 %v3097, 16
        %v3392 = vpop.permute.xlu0 %3391
        %3393 = vrot.lane.b32.xlu0 %v3098, 16
        %v3394 = vpop.permute.xlu0 %3393
        %3395 = vrot.lane.b32.xlu0 %v3099, 16
        %v3396 = vpop.permute.xlu0 %3395
        %3397 = vrot.lane.b32.xlu0 %v3100, 16
        %v3398 = vpop.permute.xlu0 %3397
        %3399 = vrot.lane.b32.xlu0 %v3101, 16
        %v3400 = vpop.permute.xlu0 %3399
        %3401 = vrot.lane.b32.xlu0 %v3102, 16
        %v3402 = vpop.permute.xlu0 %3401
        %3403 = vrot.lane.b32.xlu0 %v3103, 16
        %v3404 = vpop.permute.xlu0 %3403
        %3405 = vrot.lane.b32.xlu0 %v3104, 16
        %v3406 = vpop.permute.xlu0 %3405
        %3407 = vrot.lane.b32.xlu0 %v3105, 16
        %v3408 = vpop.permute.xlu0 %3407
        %3409 = vrot.lane.b32.xlu0 %v3106, 16
        %v3410 = vpop.permute.xlu0 %3409
        %3411 = vrot.lane.b32.xlu0 %v3107, 16
        %v3412 = vpop.permute.xlu0 %3411
        %3413 = vrot.lane.b32.xlu0 %v3108, 16
        %v3414 = vpop.permute.xlu0 %3413
        %3415 = vrot.lane.b32.xlu0 %v3109, 16
        %v3416 = vpop.permute.xlu0 %3415
        %3417 = vrot.lane.b32.xlu0 %v3110, 16
        %v3418 = vpop.permute.xlu0 %3417
        %3419 = vrot.lane.b32.xlu0 %v3111, 16
        %v3420 = vpop.permute.xlu0 %3419
        %3421 = vrot.lane.b32.xlu0 %v3112, 16
        %v3422 = vpop.permute.xlu0 %3421
        %3423 = vrot.lane.b32.xlu0 %v3113, 16
        %v3424 = vpop.permute.xlu0 %3423
        %3425 = vrot.lane.b32.xlu0 %v3114, 16
        %v3426 = vpop.permute.xlu0 %3425
        %3427 = vrot.lane.b32.xlu0 %v3115, 16
        %v3428 = vpop.permute.xlu0 %3427
        %3429 = vrot.lane.b32.xlu0 %v3116, 16
        %v3430 = vpop.permute.xlu0 %3429
        %3431 = vrot.lane.b32.xlu0 %v3117, 16
        %v3432 = vpop.permute.xlu0 %3431
        %3433 = vrot.lane.b32.xlu0 %v3118, 16
        %v3434 = vpop.permute.xlu0 %3433
        %3435 = vrot.lane.b32.xlu0 %v3119, 16
        %v3436 = vpop.permute.xlu0 %3435
        %3437 = vrot.lane.b32.xlu0 %v3120, 16
        %v3438 = vpop.permute.xlu0 %3437
        %3439 = vrot.lane.b32.xlu0 %v3121, 16
        %v3440 = vpop.permute.xlu0 %3439
        %3441 = vrot.lane.b32.xlu0 %v3122, 16
        %v3442 = vpop.permute.xlu0 %3441
        %3443 = vrot.lane.b32.xlu0 %v3123, 16
        %v3444 = vpop.permute.xlu0 %3443
        %v3445 = vsel %vm3220, %v3382, %v3384
        %v3446 = vsel %vm3220, %v3386, %v3388
        %v3447 = vsel %vm3220, %v3390, %v3392
        %v3448 = vsel %vm3220, %v3394, %v3396
        %v3449 = vsel %vm3220, %v3398, %v3400
        %v3450 = vsel %vm3220, %v3402, %v3404
        %v3451 = vsel %vm3220, %v3406, %v3408
        %v3452 = vsel %vm3220, %v3410, %v3412
        %v3453 = vsel %vm3220, %v3414, %v3416
        %v3454 = vsel %vm3220, %v3418, %v3420
        %v3455 = vsel %vm3220, %v3422, %v3424
        %v3456 = vsel %vm3220, %v3426, %v3428
        %v3457 = vsel %vm3220, %v3430, %v3432
        %v3458 = vsel %vm3220, %v3434, %v3436
        %v3459 = vsel %vm3220, %v3438, %v3440
        %v3460 = vsel %vm3220, %v3442, %v3444
        %v3493 = vsel %vm3220, 1.0, %v3382
        %v3494 = vsel %vm3220, 1.0, %v3386
        %v3495 = vsel %vm3220, 1.0, %v3390
        %v3496 = vsel %vm3220, 1.0, %v3394
        %v3497 = vsel %vm3220, 1.0, %v3398
        %v3498 = vsel %vm3220, 1.0, %v3402
        %v3499 = vsel %vm3220, 1.0, %v3406
        %v3500 = vsel %vm3220, 1.0, %v3410
        %v3501 = vsel %vm3220, 1.0, %v3414
        %v3502 = vsel %vm3220, 1.0, %v3418
        %v3503 = vsel %vm3220, 1.0, %v3422
        %v3504 = vsel %vm3220, 1.0, %v3426
        %v3505 = vsel %vm3220, 1.0, %v3430
        %v3506 = vsel %vm3220, 1.0, %v3434
        %v3507 = vsel %vm3220, 1.0, %v3438
        %v3508 = vsel %vm3220, 1.0, %v3442
        %v3509 = vmul.f32 %v3092, %v3493
        %v3510 = vmul.f32 %v3093, %v3445
        %v3511 = vmul.f32 %v3094, %v3494
        %v3512 = vmul.f32 %v3095, %v3446
        %v3513 = vmul.f32 %v3096, %v3495
        %v3514 = vmul.f32 %v3097, %v3447
        %v3515 = vmul.f32 %v3098, %v3496
        %v3516 = vmul.f32 %v3099, %v3448
        %v3517 = vmul.f32 %v3100, %v3497
        %v3518 = vmul.f32 %v3101, %v3449
        %v3519 = vmul.f32 %v3102, %v3498
        %v3520 = vmul.f32 %v3103, %v3450
        %v3521 = vmul.f32 %v3104, %v3499
        %v3522 = vmul.f32 %v3105, %v3451
        %v3523 = vmul.f32 %v3106, %v3500
        %v3524 = vmul.f32 %v3107, %v3452
        %v3525 = vmul.f32 %v3108, %v3501
        %v3526 = vmul.f32 %v3109, %v3453
        %v3527 = vmul.f32 %v3110, %v3502
        %v3528 = vmul.f32 %v3111, %v3454
        %v3529 = vmul.f32 %v3112, %v3503
        %v3530 = vmul.f32 %v3113, %v3455
        %v3531 = vmul.f32 %v3114, %v3504
        %v3532 = vmul.f32 %v3115, %v3456
        %v3533 = vmul.f32 %v3116, %v3505
        %v3534 = vmul.f32 %v3117, %v3457
        %v3535 = vmul.f32 %v3118, %v3506
        %v3536 = vmul.f32 %v3119, %v3458
        %v3537 = vmul.f32 %v3120, %v3507
        %v3538 = vmul.f32 %v3121, %v3459
        %v3539 = vmul.f32 %v3122, %v3508
        %v3540 = vmul.f32 %v3123, %v3460
        %3573 = vrot.lane.b32.xlu0 %v3317, 32
        %v3574 = vpop.permute.xlu0 %3573
        %3575 = vrot.lane.b32.xlu0 %v3318, 32
        %v3576 = vpop.permute.xlu0 %3575
        %3577 = vrot.lane.b32.xlu0 %v3319, 32
        %v3578 = vpop.permute.xlu0 %3577
        %3579 = vrot.lane.b32.xlu0 %v3320, 32
        %v3580 = vpop.permute.xlu0 %3579
        %3581 = vrot.lane.b32.xlu0 %v3321, 32
        %v3582 = vpop.permute.xlu0 %3581
        %3583 = vrot.lane.b32.xlu0 %v3322, 32
        %v3584 = vpop.permute.xlu0 %3583
        %3585 = vrot.lane.b32.xlu0 %v3323, 32
        %v3586 = vpop.permute.xlu0 %3585
        %3587 = vrot.lane.b32.xlu0 %v3324, 32
        %v3588 = vpop.permute.xlu0 %3587
        %3589 = vrot.lane.b32.xlu0 %v3325, 32
        %v3590 = vpop.permute.xlu0 %3589
        %3591 = vrot.lane.b32.xlu0 %v3326, 32
        %v3592 = vpop.permute.xlu0 %3591
        %3593 = vrot.lane.b32.xlu0 %v3327, 32
        %v3594 = vpop.permute.xlu0 %3593
        %3595 = vrot.lane.b32.xlu0 %v3328, 32
        %v3596 = vpop.permute.xlu0 %3595
        %3597 = vrot.lane.b32.xlu0 %v3329, 32
        %v3598 = vpop.permute.xlu0 %3597
        %3599 = vrot.lane.b32.xlu0 %v3330, 32
        %v3600 = vpop.permute.xlu0 %3599
        %3601 = vrot.lane.b32.xlu0 %v3331, 32
        %v3602 = vpop.permute.xlu0 %3601
        %3603 = vrot.lane.b32.xlu0 %v3332, 32
        %v3604 = vpop.permute.xlu0 %3603
        %3605 = vrot.lane.b32.xlu0 %v3333, 32
        %v3606 = vpop.permute.xlu0 %3605
        %3607 = vrot.lane.b32.xlu0 %v3334, 32
        %v3608 = vpop.permute.xlu0 %3607
        %3609 = vrot.lane.b32.xlu0 %v3335, 32
        %v3610 = vpop.permute.xlu0 %3609
        %3611 = vrot.lane.b32.xlu0 %v3336, 32
        %v3612 = vpop.permute.xlu0 %3611
        %3613 = vrot.lane.b32.xlu0 %v3337, 32
        %v3614 = vpop.permute.xlu0 %3613
        %3615 = vrot.lane.b32.xlu0 %v3338, 32
        %v3616 = vpop.permute.xlu0 %3615
        %3617 = vrot.lane.b32.xlu0 %v3339, 32
        %v3618 = vpop.permute.xlu0 %3617
        %3619 = vrot.lane.b32.xlu0 %v3340, 32
        %v3620 = vpop.permute.xlu0 %3619
        %3621 = vrot.lane.b32.xlu0 %v3341, 32
        %v3622 = vpop.permute.xlu0 %3621
        %3623 = vrot.lane.b32.xlu0 %v3342, 32
        %v3624 = vpop.permute.xlu0 %3623
        %3625 = vrot.lane.b32.xlu0 %v3343, 32
        %v3626 = vpop.permute.xlu0 %3625
        %3627 = vrot.lane.b32.xlu0 %v3344, 32
        %v3628 = vpop.permute.xlu0 %3627
        %3629 = vrot.lane.b32.xlu0 %v3345, 32
        %v3630 = vpop.permute.xlu0 %3629
        %3631 = vrot.lane.b32.xlu0 %v3346, 32
        %v3632 = vpop.permute.xlu0 %3631
        %3633 = vrot.lane.b32.xlu0 %v3347, 32
        %v3634 = vpop.permute.xlu0 %3633
        %3635 = vrot.lane.b32.xlu0 %v3348, 32
        %v3636 = vpop.permute.xlu0 %3635
        %vm3637 = vcmask 261120
        %v3638 = vsel %vm3637, %v3574, %v3576
        %v3639 = vsel %vm3637, %v3578, %v3580
        %v3640 = vsel %vm3637, %v3582, %v3584
        %v3641 = vsel %vm3637, %v3586, %v3588
        %v3642 = vsel %vm3637, %v3590, %v3592
        %v3643 = vsel %vm3637, %v3594, %v3596
        %v3644 = vsel %vm3637, %v3598, %v3600
        %v3645 = vsel %vm3637, %v3602, %v3604
        %v3646 = vsel %vm3637, %v3606, %v3608
        %v3647 = vsel %vm3637, %v3610, %v3612
        %v3648 = vsel %vm3637, %v3614, %v3616
        %v3649 = vsel %vm3637, %v3618, %v3620
        %v3650 = vsel %vm3637, %v3622, %v3624
        %v3651 = vsel %vm3637, %v3626, %v3628
        %v3652 = vsel %vm3637, %v3630, %v3632
        %v3653 = vsel %vm3637, %v3634, %v3636
        %v3686 = vsel %vm3637, 0.0, %v3574
        %v3687 = vsel %vm3637, 0.0, %v3578
        %v3688 = vsel %vm3637, 0.0, %v3582
        %v3689 = vsel %vm3637, 0.0, %v3586
        %v3690 = vsel %vm3637, 0.0, %v3590
        %v3691 = vsel %vm3637, 0.0, %v3594
        %v3692 = vsel %vm3637, 0.0, %v3598
        %v3693 = vsel %vm3637, 0.0, %v3602
        %v3694 = vsel %vm3637, 0.0, %v3606
        %v3695 = vsel %vm3637, 0.0, %v3610
        %v3696 = vsel %vm3637, 0.0, %v3614
        %v3697 = vsel %vm3637, 0.0, %v3618
        %v3698 = vsel %vm3637, 0.0, %v3622
        %v3699 = vsel %vm3637, 0.0, %v3626
        %v3700 = vsel %vm3637, 0.0, %v3630
        %v3701 = vsel %vm3637, 0.0, %v3634
        %v3702 = vmul.f32 %v3509, %v3686
        %v3703 = vmul.f32 %v3510, %v3638
        %v3704 = vmul.f32 %v3511, %v3687
        %v3705 = vmul.f32 %v3512, %v3639
        %v3706 = vmul.f32 %v3513, %v3688
        %v3707 = vmul.f32 %v3514, %v3640
        %v3708 = vmul.f32 %v3515, %v3689
        %v3709 = vmul.f32 %v3516, %v3641
        %v3710 = vmul.f32 %v3517, %v3690
        %v3711 = vmul.f32 %v3518, %v3642
        %v3712 = vmul.f32 %v3519, %v3691
        %v3713 = vmul.f32 %v3520, %v3643
        %v3714 = vmul.f32 %v3521, %v3692
        %v3715 = vmul.f32 %v3522, %v3644
        %v3716 = vmul.f32 %v3523, %v3693
        %v3717 = vmul.f32 %v3524, %v3645
        %v3718 = vmul.f32 %v3525, %v3694
        %v3719 = vmul.f32 %v3526, %v3646
        %v3720 = vmul.f32 %v3527, %v3695
        %v3721 = vmul.f32 %v3528, %v3647
        %v3722 = vmul.f32 %v3529, %v3696
        %v3723 = vmul.f32 %v3530, %v3648
        %v3724 = vmul.f32 %v3531, %v3697
        %v3725 = vmul.f32 %v3532, %v3649
        %v3726 = vmul.f32 %v3533, %v3698
        %v3727 = vmul.f32 %v3534, %v3650
        %v3728 = vmul.f32 %v3535, %v3699
        %v3729 = vmul.f32 %v3536, %v3651
        %v3730 = vmul.f32 %v3537, %v3700
        %v3731 = vmul.f32 %v3538, %v3652
        %v3732 = vmul.f32 %v3539, %v3701
        %v3733 = vmul.f32 %v3540, %v3653
        %v3734 = vadd.f32 %v3702, %v3317
        %v3735 = vadd.f32 %v3703, %v3318
        %v3736 = vadd.f32 %v3704, %v3319
        %v3737 = vadd.f32 %v3705, %v3320
        %v3738 = vadd.f32 %v3706, %v3321
        %v3739 = vadd.f32 %v3707, %v3322
        %v3740 = vadd.f32 %v3708, %v3323
        %v3741 = vadd.f32 %v3709, %v3324
        %v3742 = vadd.f32 %v3710, %v3325
        %v3743 = vadd.f32 %v3711, %v3326
        %v3744 = vadd.f32 %v3712, %v3327
        %v3745 = vadd.f32 %v3713, %v3328
        %v3746 = vadd.f32 %v3714, %v3329
        %v3747 = vadd.f32 %v3715, %v3330
        %v3748 = vadd.f32 %v3716, %v3331
        %v3749 = vadd.f32 %v3717, %v3332
        %v3750 = vadd.f32 %v3718, %v3333
        %v3751 = vadd.f32 %v3719, %v3334
        %v3752 = vadd.f32 %v3720, %v3335
        %v3753 = vadd.f32 %v3721, %v3336
        %v3754 = vadd.f32 %v3722, %v3337
        %v3755 = vadd.f32 %v3723, %v3338
        %v3756 = vadd.f32 %v3724, %v3339
        %v3757 = vadd.f32 %v3725, %v3340
        %v3758 = vadd.f32 %v3726, %v3341
        %v3759 = vadd.f32 %v3727, %v3342
        %v3760 = vadd.f32 %v3728, %v3343
        %v3761 = vadd.f32 %v3729, %v3344
        %v3762 = vadd.f32 %v3730, %v3345
        %v3763 = vadd.f32 %v3731, %v3346
        %v3764 = vadd.f32 %v3732, %v3347
        %v3765 = vadd.f32 %v3733, %v3348
        %3798 = vrot.lane.b32.xlu0 %v3509, 32
        %v3799 = vpop.permute.xlu0 %3798
        %3800 = vrot.lane.b32.xlu0 %v3510, 32
        %v3801 = vpop.permute.xlu0 %3800
        %3802 = vrot.lane.b32.xlu0 %v3511, 32
        %v3803 = vpop.permute.xlu0 %3802
        %3804 = vrot.lane.b32.xlu0 %v3512, 32
        %v3805 = vpop.permute.xlu0 %3804
        %3806 = vrot.lane.b32.xlu0 %v3513, 32
        %v3807 = vpop.permute.xlu0 %3806
        %3808 = vrot.lane.b32.xlu0 %v3514, 32
        %v3809 = vpop.permute.xlu0 %3808
        %3810 = vrot.lane.b32.xlu0 %v3515, 32
        %v3811 = vpop.permute.xlu0 %3810
        %3812 = vrot.lane.b32.xlu0 %v3516, 32
        %v3813 = vpop.permute.xlu0 %3812
        %3814 = vrot.lane.b32.xlu0 %v3517, 32
        %v3815 = vpop.permute.xlu0 %3814
        %3816 = vrot.lane.b32.xlu0 %v3518, 32
        %v3817 = vpop.permute.xlu0 %3816
        %3818 = vrot.lane.b32.xlu0 %v3519, 32
        %v3819 = vpop.permute.xlu0 %3818
        %3820 = vrot.lane.b32.xlu0 %v3520, 32
        %v3821 = vpop.permute.xlu0 %3820
        %3822 = vrot.lane.b32.xlu0 %v3521, 32
        %v3823 = vpop.permute.xlu0 %3822
        %3824 = vrot.lane.b32.xlu0 %v3522, 32
        %v3825 = vpop.permute.xlu0 %3824
        %3826 = vrot.lane.b32.xlu0 %v3523, 32
        %v3827 = vpop.permute.xlu0 %3826
        %3828 = vrot.lane.b32.xlu0 %v3524, 32
        %v3829 = vpop.permute.xlu0 %3828
        %3830 = vrot.lane.b32.xlu0 %v3525, 32
        %v3831 = vpop.permute.xlu0 %3830
        %3832 = vrot.lane.b32.xlu0 %v3526, 32
        %v3833 = vpop.permute.xlu0 %3832
        %3834 = vrot.lane.b32.xlu0 %v3527, 32
        %v3835 = vpop.permute.xlu0 %3834
        %3836 = vrot.lane.b32.xlu0 %v3528, 32
        %v3837 = vpop.permute.xlu0 %3836
        %3838 = vrot.lane.b32.xlu0 %v3529, 32
        %v3839 = vpop.permute.xlu0 %3838
        %3840 = vrot.lane.b32.xlu0 %v3530, 32
        %v3841 = vpop.permute.xlu0 %3840
        %3842 = vrot.lane.b32.xlu0 %v3531, 32
        %v3843 = vpop.permute.xlu0 %3842
        %3844 = vrot.lane.b32.xlu0 %v3532, 32
        %v3845 = vpop.permute.xlu0 %3844
        %3846 = vrot.lane.b32.xlu0 %v3533, 32
        %v3847 = vpop.permute.xlu0 %3846
        %3848 = vrot.lane.b32.xlu0 %v3534, 32
        %v3849 = vpop.permute.xlu0 %3848
        %3850 = vrot.lane.b32.xlu0 %v3535, 32
        %v3851 = vpop.permute.xlu0 %3850
        %3852 = vrot.lane.b32.xlu0 %v3536, 32
        %v3853 = vpop.permute.xlu0 %3852
        %3854 = vrot.lane.b32.xlu0 %v3537, 32
        %v3855 = vpop.permute.xlu0 %3854
        %3856 = vrot.lane.b32.xlu0 %v3538, 32
        %v3857 = vpop.permute.xlu0 %3856
        %3858 = vrot.lane.b32.xlu0 %v3539, 32
        %v3859 = vpop.permute.xlu0 %3858
        %3860 = vrot.lane.b32.xlu0 %v3540, 32
        %v3861 = vpop.permute.xlu0 %3860
        %v3862 = vsel %vm3637, %v3799, %v3801
        %v3863 = vsel %vm3637, %v3803, %v3805
        %v3864 = vsel %vm3637, %v3807, %v3809
        %v3865 = vsel %vm3637, %v3811, %v3813
        %v3866 = vsel %vm3637, %v3815, %v3817
        %v3867 = vsel %vm3637, %v3819, %v3821
        %v3868 = vsel %vm3637, %v3823, %v3825
        %v3869 = vsel %vm3637, %v3827, %v3829
        %v3870 = vsel %vm3637, %v3831, %v3833
        %v3871 = vsel %vm3637, %v3835, %v3837
        %v3872 = vsel %vm3637, %v3839, %v3841
        %v3873 = vsel %vm3637, %v3843, %v3845
        %v3874 = vsel %vm3637, %v3847, %v3849
        %v3875 = vsel %vm3637, %v3851, %v3853
        %v3876 = vsel %vm3637, %v3855, %v3857
        %v3877 = vsel %vm3637, %v3859, %v3861
        %v3910 = vsel %vm3637, 1.0, %v3799
        %v3911 = vsel %vm3637, 1.0, %v3803
        %v3912 = vsel %vm3637, 1.0, %v3807
        %v3913 = vsel %vm3637, 1.0, %v3811
        %v3914 = vsel %vm3637, 1.0, %v3815
        %v3915 = vsel %vm3637, 1.0, %v3819
        %v3916 = vsel %vm3637, 1.0, %v3823
        %v3917 = vsel %vm3637, 1.0, %v3827
        %v3918 = vsel %vm3637, 1.0, %v3831
        %v3919 = vsel %vm3637, 1.0, %v3835
        %v3920 = vsel %vm3637, 1.0, %v3839
        %v3921 = vsel %vm3637, 1.0, %v3843
        %v3922 = vsel %vm3637, 1.0, %v3847
        %v3923 = vsel %vm3637, 1.0, %v3851
        %v3924 = vsel %vm3637, 1.0, %v3855
        %v3925 = vsel %vm3637, 1.0, %v3859
        %v3926 = vmul.f32 %v3509, %v3910
        %v3927 = vmul.f32 %v3510, %v3862
        %v3928 = vmul.f32 %v3511, %v3911
        %v3929 = vmul.f32 %v3512, %v3863
        %v3930 = vmul.f32 %v3513, %v3912
        %v3931 = vmul.f32 %v3514, %v3864
        %v3932 = vmul.f32 %v3515, %v3913
        %v3933 = vmul.f32 %v3516, %v3865
        %v3934 = vmul.f32 %v3517, %v3914
        %v3935 = vmul.f32 %v3518, %v3866
        %v3936 = vmul.f32 %v3519, %v3915
        %v3937 = vmul.f32 %v3520, %v3867
        %v3938 = vmul.f32 %v3521, %v3916
        %v3939 = vmul.f32 %v3522, %v3868
        %v3940 = vmul.f32 %v3523, %v3917
        %v3941 = vmul.f32 %v3524, %v3869
        %v3942 = vmul.f32 %v3525, %v3918
        %v3943 = vmul.f32 %v3526, %v3870
        %v3944 = vmul.f32 %v3527, %v3919
        %v3945 = vmul.f32 %v3528, %v3871
        %v3946 = vmul.f32 %v3529, %v3920
        %v3947 = vmul.f32 %v3530, %v3872
        %v3948 = vmul.f32 %v3531, %v3921
        %v3949 = vmul.f32 %v3532, %v3873
        %v3950 = vmul.f32 %v3533, %v3922
        %v3951 = vmul.f32 %v3534, %v3874
        %v3952 = vmul.f32 %v3535, %v3923
        %v3953 = vmul.f32 %v3536, %v3875
        %v3954 = vmul.f32 %v3537, %v3924
        %v3955 = vmul.f32 %v3538, %v3876
        %v3956 = vmul.f32 %v3539, %v3925
        %v3957 = vmul.f32 %v3540, %v3877
        %3990 = vrot.lane.b32.xlu0 %v3734, 64
        %v3991 = vpop.permute.xlu0 %3990
        %3992 = vrot.lane.b32.xlu0 %v3735, 64
        %v3993 = vpop.permute.xlu0 %3992
        %3994 = vrot.lane.b32.xlu0 %v3736, 64
        %v3995 = vpop.permute.xlu0 %3994
        %3996 = vrot.lane.b32.xlu0 %v3737, 64
        %v3997 = vpop.permute.xlu0 %3996
        %3998 = vrot.lane.b32.xlu0 %v3738, 64
        %v3999 = vpop.permute.xlu0 %3998
        %4000 = vrot.lane.b32.xlu0 %v3739, 64
        %v4001 = vpop.permute.xlu0 %4000
        %4002 = vrot.lane.b32.xlu0 %v3740, 64
        %v4003 = vpop.permute.xlu0 %4002
        %4004 = vrot.lane.b32.xlu0 %v3741, 64
        %v4005 = vpop.permute.xlu0 %4004
        %4006 = vrot.lane.b32.xlu0 %v3742, 64
        %v4007 = vpop.permute.xlu0 %4006
        %4008 = vrot.lane.b32.xlu0 %v3743, 64
        %v4009 = vpop.permute.xlu0 %4008
        %4010 = vrot.lane.b32.xlu0 %v3744, 64
        %v4011 = vpop.permute.xlu0 %4010
        %4012 = vrot.lane.b32.xlu0 %v3745, 64
        %v4013 = vpop.permute.xlu0 %4012
        %4014 = vrot.lane.b32.xlu0 %v3746, 64
        %v4015 = vpop.permute.xlu0 %4014
        %4016 = vrot.lane.b32.xlu0 %v3747, 64
        %v4017 = vpop.permute.xlu0 %4016
        %4018 = vrot.lane.b32.xlu0 %v3748, 64
        %v4019 = vpop.permute.xlu0 %4018
        %4020 = vrot.lane.b32.xlu0 %v3749, 64
        %v4021 = vpop.permute.xlu0 %4020
        %4022 = vrot.lane.b32.xlu0 %v3750, 64
        %v4023 = vpop.permute.xlu0 %4022
        %4024 = vrot.lane.b32.xlu0 %v3751, 64
        %v4025 = vpop.permute.xlu0 %4024
        %4026 = vrot.lane.b32.xlu0 %v3752, 64
        %v4027 = vpop.permute.xlu0 %4026
        %4028 = vrot.lane.b32.xlu0 %v3753, 64
        %v4029 = vpop.permute.xlu0 %4028
        %4030 = vrot.lane.b32.xlu0 %v3754, 64
        %v4031 = vpop.permute.xlu0 %4030
        %4032 = vrot.lane.b32.xlu0 %v3755, 64
        %v4033 = vpop.permute.xlu0 %4032
        %4034 = vrot.lane.b32.xlu0 %v3756, 64
        %v4035 = vpop.permute.xlu0 %4034
        %4036 = vrot.lane.b32.xlu0 %v3757, 64
        %v4037 = vpop.permute.xlu0 %4036
        %4038 = vrot.lane.b32.xlu0 %v3758, 64
        %v4039 = vpop.permute.xlu0 %4038
        %4040 = vrot.lane.b32.xlu0 %v3759, 64
        %v4041 = vpop.permute.xlu0 %4040
        %4042 = vrot.lane.b32.xlu0 %v3760, 64
        %v4043 = vpop.permute.xlu0 %4042
        %4044 = vrot.lane.b32.xlu0 %v3761, 64
        %v4045 = vpop.permute.xlu0 %4044
        %4046 = vrot.lane.b32.xlu0 %v3762, 64
        %v4047 = vpop.permute.xlu0 %4046
        %4048 = vrot.lane.b32.xlu0 %v3763, 64
        %v4049 = vpop.permute.xlu0 %4048
        %4050 = vrot.lane.b32.xlu0 %v3764, 64
        %v4051 = vpop.permute.xlu0 %4050
        %4052 = vrot.lane.b32.xlu0 %v3765, 64
        %v4053 = vpop.permute.xlu0 %4052
        %vm4054 = vcmask 523264
        %v4055 = vsel %vm4054, %v3991, %v3993
        %v4056 = vsel %vm4054, %v3995, %v3997
        %v4057 = vsel %vm4054, %v3999, %v4001
        %v4058 = vsel %vm4054, %v4003, %v4005
        %v4059 = vsel %vm4054, %v4007, %v4009
        %v4060 = vsel %vm4054, %v4011, %v4013
        %v4061 = vsel %vm4054, %v4015, %v4017
        %v4062 = vsel %vm4054, %v4019, %v4021
        %v4063 = vsel %vm4054, %v4023, %v4025
        %v4064 = vsel %vm4054, %v4027, %v4029
        %v4065 = vsel %vm4054, %v4031, %v4033
        %v4066 = vsel %vm4054, %v4035, %v4037
        %v4067 = vsel %vm4054, %v4039, %v4041
        %v4068 = vsel %vm4054, %v4043, %v4045
        %v4069 = vsel %vm4054, %v4047, %v4049
        %v4070 = vsel %vm4054, %v4051, %v4053
        %v4103 = vsel %vm4054, 0.0, %v3991
        %v4104 = vsel %vm4054, 0.0, %v3995
        %v4105 = vsel %vm4054, 0.0, %v3999
        %v4106 = vsel %vm4054, 0.0, %v4003
        %v4107 = vsel %vm4054, 0.0, %v4007
        %v4108 = vsel %vm4054, 0.0, %v4011
        %v4109 = vsel %vm4054, 0.0, %v4015
        %v4110 = vsel %vm4054, 0.0, %v4019
        %v4111 = vsel %vm4054, 0.0, %v4023
        %v4112 = vsel %vm4054, 0.0, %v4027
        %v4113 = vsel %vm4054, 0.0, %v4031
        %v4114 = vsel %vm4054, 0.0, %v4035
        %v4115 = vsel %vm4054, 0.0, %v4039
        %v4116 = vsel %vm4054, 0.0, %v4043
        %v4117 = vsel %vm4054, 0.0, %v4047
        %v4118 = vsel %vm4054, 0.0, %v4051
        %v4119 = vmul.f32 %v3926, %v4103
        %v4120 = vmul.f32 %v3927, %v4055
        %v4121 = vmul.f32 %v3928, %v4104
        %v4122 = vmul.f32 %v3929, %v4056
        %v4123 = vmul.f32 %v3930, %v4105
        %v4124 = vmul.f32 %v3931, %v4057
        %v4125 = vmul.f32 %v3932, %v4106
        %v4126 = vmul.f32 %v3933, %v4058
        %v4127 = vmul.f32 %v3934, %v4107
        %v4128 = vmul.f32 %v3935, %v4059
        %v4129 = vmul.f32 %v3936, %v4108
        %v4130 = vmul.f32 %v3937, %v4060
        %v4131 = vmul.f32 %v3938, %v4109
        %v4132 = vmul.f32 %v3939, %v4061
        %v4133 = vmul.f32 %v3940, %v4110
        %v4134 = vmul.f32 %v3941, %v4062
        %v4135 = vmul.f32 %v3942, %v4111
        %v4136 = vmul.f32 %v3943, %v4063
        %v4137 = vmul.f32 %v3944, %v4112
        %v4138 = vmul.f32 %v3945, %v4064
        %v4139 = vmul.f32 %v3946, %v4113
        %v4140 = vmul.f32 %v3947, %v4065
        %v4141 = vmul.f32 %v3948, %v4114
        %v4142 = vmul.f32 %v3949, %v4066
        %v4143 = vmul.f32 %v3950, %v4115
        %v4144 = vmul.f32 %v3951, %v4067
        %v4145 = vmul.f32 %v3952, %v4116
        %v4146 = vmul.f32 %v3953, %v4068
        %v4147 = vmul.f32 %v3954, %v4117
        %v4148 = vmul.f32 %v3955, %v4069
        %v4149 = vmul.f32 %v3956, %v4118
        %v4150 = vmul.f32 %v3957, %v4070
        %v4151 = vadd.f32 %v4119, %v3734
        %v4152 = vadd.f32 %v4120, %v3735
        %v4153 = vadd.f32 %v4121, %v3736
        %v4154 = vadd.f32 %v4122, %v3737
        %v4155 = vadd.f32 %v4123, %v3738
        %v4156 = vadd.f32 %v4124, %v3739
        %v4157 = vadd.f32 %v4125, %v3740
        %v4158 = vadd.f32 %v4126, %v3741
        %v4159 = vadd.f32 %v4127, %v3742
        %v4160 = vadd.f32 %v4128, %v3743
        %v4161 = vadd.f32 %v4129, %v3744
        %v4162 = vadd.f32 %v4130, %v3745
        %v4163 = vadd.f32 %v4131, %v3746
        %v4164 = vadd.f32 %v4132, %v3747
        %v4165 = vadd.f32 %v4133, %v3748
        %v4166 = vadd.f32 %v4134, %v3749
        %v4167 = vadd.f32 %v4135, %v3750
        %v4168 = vadd.f32 %v4136, %v3751
        %v4169 = vadd.f32 %v4137, %v3752
        %v4170 = vadd.f32 %v4138, %v3753
        %v4171 = vadd.f32 %v4139, %v3754
        %v4172 = vadd.f32 %v4140, %v3755
        %v4173 = vadd.f32 %v4141, %v3756
        %v4174 = vadd.f32 %v4142, %v3757
        %v4175 = vadd.f32 %v4143, %v3758
        %v4176 = vadd.f32 %v4144, %v3759
        %v4177 = vadd.f32 %v4145, %v3760
        %v4178 = vadd.f32 %v4146, %v3761
        %v4179 = vadd.f32 %v4147, %v3762
        %v4180 = vadd.f32 %v4148, %v3763
        %v4181 = vadd.f32 %v4149, %v3764
        %v4182 = vadd.f32 %v4150, %v3765
        %4215 = vrot.lane.b32.xlu0 %v3926, 64
        %v4216 = vpop.permute.xlu0 %4215
        %4217 = vrot.lane.b32.xlu0 %v3927, 64
        %v4218 = vpop.permute.xlu0 %4217
        %4219 = vrot.lane.b32.xlu0 %v3928, 64
        %v4220 = vpop.permute.xlu0 %4219
        %4221 = vrot.lane.b32.xlu0 %v3929, 64
        %v4222 = vpop.permute.xlu0 %4221
        %4223 = vrot.lane.b32.xlu0 %v3930, 64
        %v4224 = vpop.permute.xlu0 %4223
        %4225 = vrot.lane.b32.xlu0 %v3931, 64
        %v4226 = vpop.permute.xlu0 %4225
        %4227 = vrot.lane.b32.xlu0 %v3932, 64
        %v4228 = vpop.permute.xlu0 %4227
        %4229 = vrot.lane.b32.xlu0 %v3933, 64
        %v4230 = vpop.permute.xlu0 %4229
        %4231 = vrot.lane.b32.xlu0 %v3934, 64
        %v4232 = vpop.permute.xlu0 %4231
        %4233 = vrot.lane.b32.xlu0 %v3935, 64
        %v4234 = vpop.permute.xlu0 %4233
        %4235 = vrot.lane.b32.xlu0 %v3936, 64
        %v4236 = vpop.permute.xlu0 %4235
        %4237 = vrot.lane.b32.xlu0 %v3937, 64
        %v4238 = vpop.permute.xlu0 %4237
        %4239 = vrot.lane.b32.xlu0 %v3938, 64
        %v4240 = vpop.permute.xlu0 %4239
        %4241 = vrot.lane.b32.xlu0 %v3939, 64
        %v4242 = vpop.permute.xlu0 %4241
        %4243 = vrot.lane.b32.xlu0 %v3940, 64
        %v4244 = vpop.permute.xlu0 %4243
        %4245 = vrot.lane.b32.xlu0 %v3941, 64
        %v4246 = vpop.permute.xlu0 %4245
        %4247 = vrot.lane.b32.xlu0 %v3942, 64
        %v4248 = vpop.permute.xlu0 %4247
        %4249 = vrot.lane.b32.xlu0 %v3943, 64
        %v4250 = vpop.permute.xlu0 %4249
        %4251 = vrot.lane.b32.xlu0 %v3944, 64
        %v4252 = vpop.permute.xlu0 %4251
        %4253 = vrot.lane.b32.xlu0 %v3945, 64
        %v4254 = vpop.permute.xlu0 %4253
        %4255 = vrot.lane.b32.xlu0 %v3946, 64
        %v4256 = vpop.permute.xlu0 %4255
        %4257 = vrot.lane.b32.xlu0 %v3947, 64
        %v4258 = vpop.permute.xlu0 %4257
        %4259 = vrot.lane.b32.xlu0 %v3948, 64
        %v4260 = vpop.permute.xlu0 %4259
        %4261 = vrot.lane.b32.xlu0 %v3949, 64
        %v4262 = vpop.permute.xlu0 %4261
        %4263 = vrot.lane.b32.xlu0 %v3950, 64
        %v4264 = vpop.permute.xlu0 %4263
        %4265 = vrot.lane.b32.xlu0 %v3951, 64
        %v4266 = vpop.permute.xlu0 %4265
        %4267 = vrot.lane.b32.xlu0 %v3952, 64
        %v4268 = vpop.permute.xlu0 %4267
        %4269 = vrot.lane.b32.xlu0 %v3953, 64
        %v4270 = vpop.permute.xlu0 %4269
        %4271 = vrot.lane.b32.xlu0 %v3954, 64
        %v4272 = vpop.permute.xlu0 %4271
        %4273 = vrot.lane.b32.xlu0 %v3955, 64
        %v4274 = vpop.permute.xlu0 %4273
        %4275 = vrot.lane.b32.xlu0 %v3956, 64
        %v4276 = vpop.permute.xlu0 %4275
        %4277 = vrot.lane.b32.xlu0 %v3957, 64
        %v4278 = vpop.permute.xlu0 %4277
        %v4279 = vsel %vm4054, %v4216, %v4218
        %v4280 = vsel %vm4054, %v4220, %v4222
        %v4281 = vsel %vm4054, %v4224, %v4226
        %v4282 = vsel %vm4054, %v4228, %v4230
        %v4283 = vsel %vm4054, %v4232, %v4234
        %v4284 = vsel %vm4054, %v4236, %v4238
        %v4285 = vsel %vm4054, %v4240, %v4242
        %v4286 = vsel %vm4054, %v4244, %v4246
        %v4287 = vsel %vm4054, %v4248, %v4250
        %v4288 = vsel %vm4054, %v4252, %v4254
        %v4289 = vsel %vm4054, %v4256, %v4258
        %v4290 = vsel %vm4054, %v4260, %v4262
        %v4291 = vsel %vm4054, %v4264, %v4266
        %v4292 = vsel %vm4054, %v4268, %v4270
        %v4293 = vsel %vm4054, %v4272, %v4274
        %v4294 = vsel %vm4054, %v4276, %v4278
        %v4327 = vsel %vm4054, 1.0, %v4216
        %v4328 = vsel %vm4054, 1.0, %v4220
        %v4329 = vsel %vm4054, 1.0, %v4224
        %v4330 = vsel %vm4054, 1.0, %v4228
        %v4331 = vsel %vm4054, 1.0, %v4232
        %v4332 = vsel %vm4054, 1.0, %v4236
        %v4333 = vsel %vm4054, 1.0, %v4240
        %v4334 = vsel %vm4054, 1.0, %v4244
        %v4335 = vsel %vm4054, 1.0, %v4248
        %v4336 = vsel %vm4054, 1.0, %v4252
        %v4337 = vsel %vm4054, 1.0, %v4256
        %v4338 = vsel %vm4054, 1.0, %v4260
        %v4339 = vsel %vm4054, 1.0, %v4264
        %v4340 = vsel %vm4054, 1.0, %v4268
        %v4341 = vsel %vm4054, 1.0, %v4272
        %v4342 = vsel %vm4054, 1.0, %v4276
        %v4343 = vmul.f32 %v3926, %v4327
        %v4344 = vmul.f32 %v3927, %v4279
        %v4345 = vmul.f32 %v3928, %v4328
        %v4346 = vmul.f32 %v3929, %v4280
        %v4347 = vmul.f32 %v3930, %v4329
        %v4348 = vmul.f32 %v3931, %v4281
        %v4349 = vmul.f32 %v3932, %v4330
        %v4350 = vmul.f32 %v3933, %v4282
        %v4351 = vmul.f32 %v3934, %v4331
        %v4352 = vmul.f32 %v3935, %v4283
        %v4353 = vmul.f32 %v3936, %v4332
        %v4354 = vmul.f32 %v3937, %v4284
        %v4355 = vmul.f32 %v3938, %v4333
        %v4356 = vmul.f32 %v3939, %v4285
        %v4357 = vmul.f32 %v3940, %v4334
        %v4358 = vmul.f32 %v3941, %v4286
        %v4359 = vmul.f32 %v3942, %v4335
        %v4360 = vmul.f32 %v3943, %v4287
        %v4361 = vmul.f32 %v3944, %v4336
        %v4362 = vmul.f32 %v3945, %v4288
        %v4363 = vmul.f32 %v3946, %v4337
        %v4364 = vmul.f32 %v3947, %v4289
        %v4365 = vmul.f32 %v3948, %v4338
        %v4366 = vmul.f32 %v3949, %v4290
        %v4367 = vmul.f32 %v3950, %v4339
        %v4368 = vmul.f32 %v3951, %v4291
        %v4369 = vmul.f32 %v3952, %v4340
        %v4370 = vmul.f32 %v3953, %v4292
        %v4371 = vmul.f32 %v3954, %v4341
        %v4372 = vmul.f32 %v3955, %v4293
        %v4373 = vmul.f32 %v3956, %v4342
        %v4374 = vmul.f32 %v3957, %v4294
        %v4375 = vmul.f32 %v4343, 0.0
        %v4376 = vmul.f32 %v4344, %v4151
        %v4377 = vmul.f32 %v4345, 0.0
        %v4378 = vmul.f32 %v4346, %v4153
        %v4379 = vmul.f32 %v4347, 0.0
        %v4380 = vmul.f32 %v4348, %v4155
        %v4381 = vmul.f32 %v4349, 0.0
        %v4382 = vmul.f32 %v4350, %v4157
        %v4383 = vmul.f32 %v4351, 0.0
        %v4384 = vmul.f32 %v4352, %v4159
        %v4385 = vmul.f32 %v4353, 0.0
        %v4386 = vmul.f32 %v4354, %v4161
        %v4387 = vmul.f32 %v4355, 0.0
        %v4388 = vmul.f32 %v4356, %v4163
        %v4389 = vmul.f32 %v4357, 0.0
        %v4390 = vmul.f32 %v4358, %v4165
        %v4391 = vmul.f32 %v4359, 0.0
        %v4392 = vmul.f32 %v4360, %v4167
        %v4393 = vmul.f32 %v4361, 0.0
        %v4394 = vmul.f32 %v4362, %v4169
        %v4395 = vmul.f32 %v4363, 0.0
        %v4396 = vmul.f32 %v4364, %v4171
        %v4397 = vmul.f32 %v4365, 0.0
        %v4398 = vmul.f32 %v4366, %v4173
        %v4399 = vmul.f32 %v4367, 0.0
        %v4400 = vmul.f32 %v4368, %v4175
        %v4401 = vmul.f32 %v4369, 0.0
        %v4402 = vmul.f32 %v4370, %v4177
        %v4403 = vmul.f32 %v4371, 0.0
        %v4404 = vmul.f32 %v4372, %v4179
        %v4405 = vmul.f32 %v4373, 0.0
        %v4406 = vmul.f32 %v4374, %v4181
        %v4407 = vadd.f32 %v4375, %v4151
        %v4408 = vadd.f32 %v4376, %v4152
        %v4409 = vadd.f32 %v4377, %v4153
        %v4410 = vadd.f32 %v4378, %v4154
        %v4411 = vadd.f32 %v4379, %v4155
        %v4412 = vadd.f32 %v4380, %v4156
        %v4413 = vadd.f32 %v4381, %v4157
        %v4414 = vadd.f32 %v4382, %v4158
        %v4415 = vadd.f32 %v4383, %v4159
        %v4416 = vadd.f32 %v4384, %v4160
        %v4417 = vadd.f32 %v4385, %v4161
        %v4418 = vadd.f32 %v4386, %v4162
        %v4419 = vadd.f32 %v4387, %v4163
        %v4420 = vadd.f32 %v4388, %v4164
        %v4421 = vadd.f32 %v4389, %v4165
        %v4422 = vadd.f32 %v4390, %v4166
        %v4423 = vadd.f32 %v4391, %v4167
        %v4424 = vadd.f32 %v4392, %v4168
        %v4425 = vadd.f32 %v4393, %v4169
        %v4426 = vadd.f32 %v4394, %v4170
        %v4427 = vadd.f32 %v4395, %v4171
        %v4428 = vadd.f32 %v4396, %v4172
        %v4429 = vadd.f32 %v4397, %v4173
        %v4430 = vadd.f32 %v4398, %v4174
        %v4431 = vadd.f32 %v4399, %v4175
        %v4432 = vadd.f32 %v4400, %v4176
        %v4433 = vadd.f32 %v4401, %v4177
        %v4434 = vadd.f32 %v4402, %v4178
        %v4435 = vadd.f32 %v4403, %v4179
        %v4436 = vadd.f32 %v4404, %v4180
        %v4437 = vadd.f32 %v4405, %v4181
        %v4438 = vadd.f32 %v4406, %v4182
        %v4439 = vmul.f32 %v4407, %v1058
        %v4440 = vmul.f32 %v4408, %v1059
        %v4441 = vmul.f32 %v4409, %v1060
        %v4442 = vmul.f32 %v4410, %v1061
        %v4443 = vadd.f32 %v4439, %v4441
        %v4444 = vrot.slane %v4443, 4
        %v4445 = vadd.f32 %v4443, %v4444
        %v4446 = vrot.slane %v4445, 2
        %v4447 = vadd.f32 %v4445, %v4446
        %v4448 = vrot.slane %v4447, 1
        %v4449 = vadd.f32 %v4447, %v4448
        %v4450 = vadd.f32 %v4440, %v4442
        %v4451 = vrot.slane %v4450, 4
        %v4452 = vadd.f32 %v4450, %v4451
        %v4453 = vrot.slane %v4452, 2
        %v4454 = vadd.f32 %v4452, %v4453
        %v4455 = vrot.slane %v4454, 1
        %v4456 = vadd.f32 %v4454, %v4455
        %v4457 = vmul.f32 %v4411, %v1058
        %v4458 = vmul.f32 %v4412, %v1059
        %v4459 = vmul.f32 %v4413, %v1060
        %v4460 = vmul.f32 %v4414, %v1061
        %v4461 = vadd.f32 %v4457, %v4459
        %v4462 = vrot.slane %v4461, 4
        %v4463 = vadd.f32 %v4461, %v4462
        %v4464 = vrot.slane %v4463, 2
        %v4465 = vadd.f32 %v4463, %v4464
        %v4466 = vrot.slane %v4465, 1
        %v4467 = vadd.f32 %v4465, %v4466
        %v4468 = vadd.f32 %v4458, %v4460
        %v4469 = vrot.slane %v4468, 4
        %v4470 = vadd.f32 %v4468, %v4469
        %v4471 = vrot.slane %v4470, 2
        %v4472 = vadd.f32 %v4470, %v4471
        %v4473 = vrot.slane %v4472, 1
        %v4474 = vadd.f32 %v4472, %v4473
        %v4475 = vmul.f32 %v4415, %v1058
        %v4476 = vmul.f32 %v4416, %v1059
        %v4477 = vmul.f32 %v4417, %v1060
        %v4478 = vmul.f32 %v4418, %v1061
        %v4479 = vadd.f32 %v4475, %v4477
        %v4480 = vrot.slane %v4479, 4
        %v4481 = vadd.f32 %v4479, %v4480
        %v4482 = vrot.slane %v4481, 2
        %v4483 = vadd.f32 %v4481, %v4482
        %v4484 = vrot.slane %v4483, 1
        %v4485 = vadd.f32 %v4483, %v4484
        %v4486 = vadd.f32 %v4476, %v4478
        %v4487 = vrot.slane %v4486, 4
        %v4488 = vadd.f32 %v4486, %v4487
        %v4489 = vrot.slane %v4488, 2
        %v4490 = vadd.f32 %v4488, %v4489
        %v4491 = vrot.slane %v4490, 1
        %v4492 = vadd.f32 %v4490, %v4491
        %v4493 = vmul.f32 %v4419, %v1058
        %v4494 = vmul.f32 %v4420, %v1059
        %v4495 = vmul.f32 %v4421, %v1060
        %v4496 = vmul.f32 %v4422, %v1061
        %v4497 = vadd.f32 %v4493, %v4495
        %v4498 = vrot.slane %v4497, 4
        %v4499 = vadd.f32 %v4497, %v4498
        %v4500 = vrot.slane %v4499, 2
        %v4501 = vadd.f32 %v4499, %v4500
        %v4502 = vrot.slane %v4501, 1
        %v4503 = vadd.f32 %v4501, %v4502
        %v4504 = vadd.f32 %v4494, %v4496
        %v4505 = vrot.slane %v4504, 4
        %v4506 = vadd.f32 %v4504, %v4505
        %v4507 = vrot.slane %v4506, 2
        %v4508 = vadd.f32 %v4506, %v4507
        %v4509 = vrot.slane %v4508, 1
        %v4510 = vadd.f32 %v4508, %v4509
        %v4511 = vmul.f32 %v4423, %v1058
        %v4512 = vmul.f32 %v4424, %v1059
        %v4513 = vmul.f32 %v4425, %v1060
        %v4514 = vmul.f32 %v4426, %v1061
        %v4515 = vadd.f32 %v4511, %v4513
        %v4516 = vrot.slane %v4515, 4
        %v4517 = vadd.f32 %v4515, %v4516
        %v4518 = vrot.slane %v4517, 2
        %v4519 = vadd.f32 %v4517, %v4518
        %v4520 = vrot.slane %v4519, 1
        %v4521 = vadd.f32 %v4519, %v4520
        %v4522 = vadd.f32 %v4512, %v4514
        %v4523 = vrot.slane %v4522, 4
        %v4524 = vadd.f32 %v4522, %v4523
        %v4525 = vrot.slane %v4524, 2
        %v4526 = vadd.f32 %v4524, %v4525
        %v4527 = vrot.slane %v4526, 1
        %v4528 = vadd.f32 %v4526, %v4527
        %v4529 = vmul.f32 %v4427, %v1058
        %v4530 = vmul.f32 %v4428, %v1059
        %v4531 = vmul.f32 %v4429, %v1060
        %v4532 = vmul.f32 %v4430, %v1061
        %v4533 = vadd.f32 %v4529, %v4531
        %v4534 = vrot.slane %v4533, 4
        %v4535 = vadd.f32 %v4533, %v4534
        %v4536 = vrot.slane %v4535, 2
        %v4537 = vadd.f32 %v4535, %v4536
        %v4538 = vrot.slane %v4537, 1
        %v4539 = vadd.f32 %v4537, %v4538
        %v4540 = vadd.f32 %v4530, %v4532
        %v4541 = vrot.slane %v4540, 4
        %v4542 = vadd.f32 %v4540, %v4541
        %v4543 = vrot.slane %v4542, 2
        %v4544 = vadd.f32 %v4542, %v4543
        %v4545 = vrot.slane %v4544, 1
        %v4546 = vadd.f32 %v4544, %v4545
        %v4547 = vmul.f32 %v4431, %v1058
        %v4548 = vmul.f32 %v4432, %v1059
        %v4549 = vmul.f32 %v4433, %v1060
        %v4550 = vmul.f32 %v4434, %v1061
        %v4551 = vadd.f32 %v4547, %v4549
        %v4552 = vrot.slane %v4551, 4
        %v4553 = vadd.f32 %v4551, %v4552
        %v4554 = vrot.slane %v4553, 2
        %v4555 = vadd.f32 %v4553, %v4554
        %v4556 = vrot.slane %v4555, 1
        %v4557 = vadd.f32 %v4555, %v4556
        %v4558 = vadd.f32 %v4548, %v4550
        %v4559 = vrot.slane %v4558, 4
        %v4560 = vadd.f32 %v4558, %v4559
        %v4561 = vrot.slane %v4560, 2
        %v4562 = vadd.f32 %v4560, %v4561
        %v4563 = vrot.slane %v4562, 1
        %v4564 = vadd.f32 %v4562, %v4563
        %v4565 = vmul.f32 %v4435, %v1058
        %v4566 = vmul.f32 %v4436, %v1059
        %v4567 = vmul.f32 %v4437, %v1060
        %v4568 = vmul.f32 %v4438, %v1061
        %v4569 = vadd.f32 %v4565, %v4567
        %v4570 = vrot.slane %v4569, 4
        %v4571 = vadd.f32 %v4569, %v4570
        %v4572 = vrot.slane %v4571, 2
        %v4573 = vadd.f32 %v4571, %v4572
        %v4574 = vrot.slane %v4573, 1
        %v4575 = vadd.f32 %v4573, %v4574
        %v4576 = vadd.f32 %v4566, %v4568
        %v4577 = vrot.slane %v4576, 4
        %v4578 = vadd.f32 %v4576, %v4577
        %v4579 = vrot.slane %v4578, 2
        %v4580 = vadd.f32 %v4578, %v4579
        %v4581 = vrot.slane %v4580, 1
        %v4582 = vadd.f32 %v4580, %v4581
        %vm4583 = vcmask 1040384
        %v4584 = vsel %vm4583, %v4449, %v4467
        %v4585 = vsel %vm4583, %v4456, %v4474
        %vm4586 = vcmask 1041408
        %v4587 = vsel %vm4586, %v4584, %v4485
        %v4588 = vsel %vm4586, %v4585, %v4492
        %vm4589 = vcmask 1042432
        %v4590 = vsel %vm4589, %v4587, %v4503
        %v4591 = vsel %vm4589, %v4588, %v4510
        %vm4592 = vcmask 1043456
        %v4593 = vsel %vm4592, %v4590, %v4521
        %v4594 = vsel %vm4592, %v4591, %v4528
        %vm4595 = vcmask 1044480
        %v4596 = vsel %vm4595, %v4593, %v4539
        %v4597 = vsel %vm4595, %v4594, %v4546
        %vm4598 = vcmask 1045504
        %v4599 = vsel %vm4598, %v4596, %v4557
        %v4600 = vsel %vm4598, %v4597, %v4564
        %vm4601 = vcmask 1046528
        %v4602 = vsel %vm4601, %v4599, %v4575
        %v4603 = vsel %vm4601, %v4600, %v4582
        %v4604 = vld [vmem:[%s9] sm:$0xff]
        %4606 = vset.pattern.permute.xlu0 0
        %4607 = vperm.xlu0 %4606, %v4604
        %v4608 = vpop.permute.xlu0 %4607
        %v4610 = vmul.f32 %v678, %v4608
        %v4611 = vmul.f32 %v679, %v4608
        %v4612 = vadd.f32 %v4602, %v4610
        %v4613 = vadd.f32 %v4603, %v4611
        %v4614 = vsub.f32 0.0, %v595
        %v4615 = vsub.f32 0.0, %v596
        %v4616 = vmul.f32 %v4614, 1.442695
        %v4617 = vpow.pop %v4616
        %v4618 = vmul.f32 %v4615, 1.442695
        %v4619 = vpow.pop %v4618
        %v4620 = vadd.f32 %v4617, 1.0
        %v4621 = vadd.f32 %v4619, 1.0
        %v4622 = vrcp.pop %v4620
        %v4623 = vmul.f32 1.0, %v4622
        %v4624 = vrcp.pop %v4621
        %v4625 = vmul.f32 1.0, %v4624
        %v4626 = vmul.f32 %v595, %v4623
        %v4627 = vmul.f32 %v596, %v4625
        %v4628 = vmul.f32 %v4612, %v4626
        %v4629 = vmul.f32 %v4613, %v4627
        %v4630 = vld [vmem:[%s10] sm:$0xf]
        %4632 = vset.pattern.permute.xlu0 0
        %4633 = vperm.xlu0 %4632, %v4630
        %v4634 = vpop.permute.xlu0 %4633
        %v4636 = vlaneseq
        %v4637 = vshrl.u32 %v4636, 7
        %v4638 = vsub.s32 0, %v4637
        %v4639 = vrot.slane %v4628, %v4638
        %v4640 = vlaneseq
        %v4641 = vshrl.u32 %v4640, 7
        %v4642 = vsub.s32 0, %v4641
        %v4643 = vrot.slane %v4629, %v4642
        %v4644 = vmul.f32 %v4634, %v4639
        %v4645 = vmul.f32 %v4634, %v4643
        %4646 = vset.pattern.permute.xlu0 1
        %4647 = vperm.xlu0 %4646, %v4630
        %v4648 = vpop.permute.xlu0 %4647
        %v4650 = vlaneseq
        %v4651 = vshrl.u32 %v4650, 7
        %v4652 = vsub.s32 1, %v4651
        %v4653 = vrot.slane %v4628, %v4652
        %v4654 = vlaneseq
        %v4655 = vshrl.u32 %v4654, 7
        %v4656 = vsub.s32 1, %v4655
        %v4657 = vrot.slane %v4629, %v4656
        %v4658 = vmul.f32 %v4648, %v4653
        %v4659 = vmul.f32 %v4648, %v4657
        %v4660 = vadd.f32 %v4644, %v4658
        %v4661 = vadd.f32 %v4645, %v4659
        %4662 = vset.pattern.permute.xlu0 2
        %4663 = vperm.xlu0 %4662, %v4630
        %v4664 = vpop.permute.xlu0 %4663
        %v4666 = vlaneseq
        %v4667 = vshrl.u32 %v4666, 7
        %v4668 = vsub.s32 2, %v4667
        %v4669 = vrot.slane %v4628, %v4668
        %v4670 = vlaneseq
        %v4671 = vshrl.u32 %v4670, 7
        %v4672 = vsub.s32 2, %v4671
        %v4673 = vrot.slane %v4629, %v4672
        %v4674 = vmul.f32 %v4664, %v4669
        %v4675 = vmul.f32 %v4664, %v4673
        %v4676 = vadd.f32 %v4660, %v4674
        %v4677 = vadd.f32 %v4661, %v4675
        %4678 = vset.pattern.permute.xlu0 3
        %4679 = vperm.xlu0 %4678, %v4630
        %v4680 = vpop.permute.xlu0 %4679
        %v4682 = vlaneseq
        %v4683 = vshrl.u32 %v4682, 7
        %v4684 = vsub.s32 3, %v4683
        %v4685 = vrot.slane %v4628, %v4684
        %v4686 = vlaneseq
        %v4687 = vshrl.u32 %v4686, 7
        %v4688 = vsub.s32 3, %v4687
        %v4689 = vrot.slane %v4629, %v4688
        %v4690 = vmul.f32 %v4680, %v4685
        %v4691 = vmul.f32 %v4680, %v4689
        %v4692 = vadd.f32 %v4676, %v4690
        %v4693 = vadd.f32 %v4677, %v4691
        %4694 = vset.pattern.permute.xlu0 4
        %4695 = vperm.xlu0 %4694, %v4630
        %v4696 = vpop.permute.xlu0 %4695
        %v4698 = vlaneseq
        %v4699 = vshrl.u32 %v4698, 7
        %v4700 = vsub.s32 4, %v4699
        %v4701 = vrot.slane %v4628, %v4700
        %v4702 = vlaneseq
        %v4703 = vshrl.u32 %v4702, 7
        %v4704 = vsub.s32 4, %v4703
        %v4705 = vrot.slane %v4629, %v4704
        %v4706 = vmul.f32 %v4696, %v4701
        %v4707 = vmul.f32 %v4696, %v4705
        %v4708 = vadd.f32 %v4692, %v4706
        %v4709 = vadd.f32 %v4693, %v4707
        %4710 = vset.pattern.permute.xlu0 5
        %4711 = vperm.xlu0 %4710, %v4630
        %v4712 = vpop.permute.xlu0 %4711
        %v4714 = vlaneseq
        %v4715 = vshrl.u32 %v4714, 7
        %v4716 = vsub.s32 5, %v4715
        %v4717 = vrot.slane %v4628, %v4716
        %v4718 = vlaneseq
        %v4719 = vshrl.u32 %v4718, 7
        %v4720 = vsub.s32 5, %v4719
        %v4721 = vrot.slane %v4629, %v4720
        %v4722 = vmul.f32 %v4712, %v4717
        %v4723 = vmul.f32 %v4712, %v4721
        %v4724 = vadd.f32 %v4708, %v4722
        %v4725 = vadd.f32 %v4709, %v4723
        %4726 = vset.pattern.permute.xlu0 6
        %4727 = vperm.xlu0 %4726, %v4630
        %v4728 = vpop.permute.xlu0 %4727
        %v4730 = vlaneseq
        %v4731 = vshrl.u32 %v4730, 7
        %v4732 = vsub.s32 6, %v4731
        %v4733 = vrot.slane %v4628, %v4732
        %v4734 = vlaneseq
        %v4735 = vshrl.u32 %v4734, 7
        %v4736 = vsub.s32 6, %v4735
        %v4737 = vrot.slane %v4629, %v4736
        %v4738 = vmul.f32 %v4728, %v4733
        %v4739 = vmul.f32 %v4728, %v4737
        %v4740 = vadd.f32 %v4724, %v4738
        %v4741 = vadd.f32 %v4725, %v4739
        %4742 = vset.pattern.permute.xlu0 7
        %4743 = vperm.xlu0 %4742, %v4630
        %v4744 = vpop.permute.xlu0 %4743
        %v4746 = vlaneseq
        %v4747 = vshrl.u32 %v4746, 7
        %v4748 = vsub.s32 7, %v4747
        %v4749 = vrot.slane %v4628, %v4748
        %v4750 = vlaneseq
        %v4751 = vshrl.u32 %v4750, 7
        %v4752 = vsub.s32 7, %v4751
        %v4753 = vrot.slane %v4629, %v4752
        %v4754 = vmul.f32 %v4744, %v4749
        %v4755 = vmul.f32 %v4744, %v4753
        %v4756 = vadd.f32 %v4740, %v4754
        %v4757 = vadd.f32 %v4741, %v4755
        %v4758 = vld [vmem:[%s458] sm:$0xff]
        %v4759 = vld [vmem:[%s11] sm:$0xf]
        %4761 = vset.pattern.permute.xlu0 0
        %4762 = vperm.xlu0 %4761, %v4759
        %v4763 = vpop.permute.xlu0 %4762
        %v4766 = vlaneseq
        %v4767 = vshrl.u32 %v4766, 7
        %v4768 = vsub.s32 0, %v4767
        %v4769 = vrot.slane %v4758, %v4768
        %v4770 = vlaneseq
        %v4771 = vshrl.u32 %v4770, 7
        %v4772 = vsub.s32 4, %v4771
        %v4773 = vrot.slane %v4758, %v4772
        %v4776 = vlaneseq
        %v4777 = vshrl.u32 %v4776, 7
        %v4778 = vsub.s32 0, %v4777
        %v4779 = vrot.slane %v4769, %v4778
        %v4780 = vlaneseq
        %v4781 = vshrl.u32 %v4780, 7
        %v4782 = vsub.s32 0, %v4781
        %v4783 = vrot.slane %v4773, %v4782
        %v4784 = vmul.f32 %v4763, %v4779
        %v4785 = vmul.f32 %v4763, %v4783
        %4786 = vset.pattern.permute.xlu0 1
        %4787 = vperm.xlu0 %4786, %v4759
        %v4788 = vpop.permute.xlu0 %4787
        %v4790 = vlaneseq
        %v4791 = vshrl.u32 %v4790, 7
        %v4792 = vsub.s32 1, %v4791
        %v4793 = vrot.slane %v4758, %v4792
        %v4794 = vlaneseq
        %v4795 = vshrl.u32 %v4794, 7
        %v4796 = vsub.s32 5, %v4795
        %v4797 = vrot.slane %v4758, %v4796
        %v4800 = vlaneseq
        %v4801 = vshrl.u32 %v4800, 7
        %v4802 = vsub.s32 1, %v4801
        %v4803 = vrot.slane %v4793, %v4802
        %v4804 = vlaneseq
        %v4805 = vshrl.u32 %v4804, 7
        %v4806 = vsub.s32 1, %v4805
        %v4807 = vrot.slane %v4797, %v4806
        %v4808 = vmul.f32 %v4788, %v4803
        %v4809 = vmul.f32 %v4788, %v4807
        %v4810 = vadd.f32 %v4784, %v4808
        %v4811 = vadd.f32 %v4785, %v4809
        %4812 = vset.pattern.permute.xlu0 2
        %4813 = vperm.xlu0 %4812, %v4759
        %v4814 = vpop.permute.xlu0 %4813
        %v4816 = vlaneseq
        %v4817 = vshrl.u32 %v4816, 7
        %v4818 = vsub.s32 2, %v4817
        %v4819 = vrot.slane %v4758, %v4818
        %v4820 = vlaneseq
        %v4821 = vshrl.u32 %v4820, 7
        %v4822 = vsub.s32 6, %v4821
        %v4823 = vrot.slane %v4758, %v4822
        %v4826 = vlaneseq
        %v4827 = vshrl.u32 %v4826, 7
        %v4828 = vsub.s32 2, %v4827
        %v4829 = vrot.slane %v4819, %v4828
        %v4830 = vlaneseq
        %v4831 = vshrl.u32 %v4830, 7
        %v4832 = vsub.s32 2, %v4831
        %v4833 = vrot.slane %v4823, %v4832
        %v4834 = vmul.f32 %v4814, %v4829
        %v4835 = vmul.f32 %v4814, %v4833
        %v4836 = vadd.f32 %v4810, %v4834
        %v4837 = vadd.f32 %v4811, %v4835
        %4838 = vset.pattern.permute.xlu0 3
        %4839 = vperm.xlu0 %4838, %v4759
        %v4840 = vpop.permute.xlu0 %4839
        %v4842 = vlaneseq
        %v4843 = vshrl.u32 %v4842, 7
        %v4844 = vsub.s32 3, %v4843
        %v4845 = vrot.slane %v4758, %v4844
        %v4846 = vlaneseq
        %v4847 = vshrl.u32 %v4846, 7
        %v4848 = vsub.s32 7, %v4847
        %v4849 = vrot.slane %v4758, %v4848
        %v4852 = vlaneseq
        %v4853 = vshrl.u32 %v4852, 7
        %v4854 = vsub.s32 3, %v4853
        %v4855 = vrot.slane %v4845, %v4854
        %v4856 = vlaneseq
        %v4857 = vshrl.u32 %v4856, 7
        %v4858 = vsub.s32 3, %v4857
        %v4859 = vrot.slane %v4849, %v4858
        %v4860 = vmul.f32 %v4840, %v4855
        %v4861 = vmul.f32 %v4840, %v4859
        %v4862 = vadd.f32 %v4836, %v4860
        %v4863 = vadd.f32 %v4837, %v4861
        %v4864 = vld [vmem:[%s12] sm:$0xf]
        %4866 = vset.pattern.permute.xlu0 0
        %4867 = vperm.xlu0 %4866, %v4864
        %v4868 = vpop.permute.xlu0 %4867
        %v4870 = vadd.f32 %v4862, %v4868
        %v4871 = vadd.f32 %v4863, %v4868
        %v4872 = vmul.f32 %v4756, %v4870
        %v4873 = vmul.f32 %v4757, %v4871
        %v4876 = vcombine.low %v4872, %v4873
        %4878 = vst [vmem:[%s448] sm:$0xff] %v4876
        %s4879 = sand.u32 %s318, 1
        %s4880 = scalar_lea.sflag [#allocation3], %s4879
        %s4881 = sand.u32 %s318, 1
        %s4882 = smul.addr %s4881, 8
        %s4883 = scalar_lea.vmem [#allocation2], %s4882
        // Predicated region
        $region73: #{tpu_custom_call.1} parent=71 // pred_check
          %p4884 = pneg %p328
        $region74: #{tpu_custom_call.1} parent=71 // pred_check_branch
          %4886 = sbr.rel (%p4884) target = $region76
        $region75: #{tpu_custom_call.1} parent=71 // pred_region
          %s4888 = ssub.s32 128, 128
          %4889 = vsyncadd %s4880, %s4888
          %s4890 = smul.addr %s27, 2
          %s4891 = smul.addr %s4890, 64
          %s4892 = scalar_lea.hbm %s13, %s4891
          %s4894 = sshll.u32 %s4883, 4
          %s4895 = int_to_ptr.vmem [resolvable:$true] %s4894
          %4897 = dma.vmem_to_hbm [thread:$0]  %s4895, 128, %s4892, %s4880
        $region76: #{tpu_custom_call.1} parent=71 // pred_fallthru
          _
      $region72: #{tpu_custom_call.1} parent=5 // pred_fallthru
        _
      %p4898 = scmp.le.s32.totalorder 2, %s22
      // Predicated region
      $region77: #{tpu_custom_call.1} parent=5 // pred_check
        %p4899 = pneg %p4898
      $region78: #{tpu_custom_call.1} parent=5 // pred_check_branch
        %4901 = sbr.rel (%p4899) target = $region80
      $region79: #{tpu_custom_call.1} parent=5 // pred_region
        %s4902 = ssub.s32 %s22, 2
        // Predicated region
        $region81: #{tpu_custom_call.1} parent=79 // pred_check
          %p4903 = pneg %p334
        $region82: #{tpu_custom_call.1} parent=79 // pred_check_branch
          %4905 = sbr.rel (%p4903) target = $region84
        $region83: #{tpu_custom_call.1} parent=79 // pred_region
          %s4906 = sand.u32 %s319, 1
          %s4907 = scalar_lea.sflag [#allocation3], %s4906
          %s4908 = sand.u32 %s319, 1
          %s4909 = smul.addr %s4908, 8
          %s4910 = scalar_lea.vmem [#allocation2], %s4909
          %4911 = dma.done %s4907, 128
        $region84: #{tpu_custom_call.1} parent=79 // pred_fallthru
          _
      $region80: #{tpu_custom_call.1} parent=5 // pred_fallthru
        _
    $region6: #{tpu_custom_call.1} parent=1 // loop_footer
      %s26 = sadd.s32 1, %s22
    $region7: #{tpu_custom_call.1} parent=1 // loop_footer_branch
      %21 = sbr.rel target = $region3
    $region8: #{tpu_custom_call.1} parent=1 // loop_exit
      _
    %4912 = vsyncpa [#allocation3], 1
    %s4913 = scalar_lea.sflag [#allocation3], 1
    %4914 = vsyncpa %s4913, 1

</llo_original>
